<compile_context>
chip_gen: v6e
topology: v6e:2x2x1
jax: 0.10.0
libtpu: 0.0.40
codegen_flags: <defaults>
</compile_context>

<pallas_src>
import numpy as np
import jax
import jax.numpy as jnp
from jax.experimental import pallas as pl
from jax.experimental.pallas import tpu as pltpu

BN_EPS = 1e-5

CONV_BTILE = 32   # safe on v7x (64 MiB VMEM) and under the 32 MiB default scoped limit
MLP_BTILE = 128


def _round_up(n, m):
    return ((n + m - 1) // m) * m


# ---------------------------------------------------------------------------
# Pallas kernels
# ---------------------------------------------------------------------------
def conv_block_kernel(patches_ref, w_ref, scale_ref, shift_ref, out_ref):
    """Conv3x3 (im2col matmul) + BatchNorm(eval) + ReLU + MaxPool2d(2) for a batch tile.

    patches_ref: (Bt, 4*S_pad, K) bf16 -- rows ordered quadrant-major, spatial-minor
    w_ref:       (K, Cout)        bf16
    scale_ref:   (1, Cout)        f32   gamma / sqrt(var + eps)
    shift_ref:   (1, Cout)        f32   (conv_bias - running_mean) * scale + beta
    out_ref:     (Bt, S_pad, Cout) f32
    """
    bt, qs, k = patches_ref.shape
    s_pad = qs // 4
    cout = w_ref.shape[1]

    # Single MXU matmul for (batch tile) x (4 pool quadrants) x (spatial positions).
    p = patches_ref[...].reshape(bt * qs, k)                       # tile-aligned collapse
    y = jnp.dot(p, w_ref[...], preferred_element_type=jnp.float32)  # (bt*4*S_pad, Cout) f32
    y = y * scale_ref[...] + shift_ref[...]                          # BatchNorm (eval)
    y = jnp.maximum(y, 0.0)                                          # ReLU
    y = y.reshape(bt, 4, s_pad, cout)                                # tile-aligned split
    out_ref[...] = jnp.max(y, axis=1)                                # MaxPool2d(2)


def mlp_kernel(x_ref, w1_ref, b1_ref, w2_ref, b2_ref, w3_ref, b3_ref, out_ref):
    """fc1 -> dropout(identity at inference) -> fc2 -> fc3."""
    h = jnp.dot(x_ref[...], w1_ref[...], preferred_element_type=jnp.float32) + b1_ref[...]
    # TODO(synk): nn.Dropout2d(0.25) is stochastic in training mode; implemented as
    # identity (inference semantics).
    h = jnp.dot(h, w2_ref[...], preferred_element_type=jnp.float32) + b2_ref[...]
    out_ref[...] = jnp.dot(h, w3_ref[...], preferred_element_type=jnp.float32) + b3_ref[...]


# ---------------------------------------------------------------------------
# Pallas wrappers
# ---------------------------------------------------------------------------
def conv_block_pallas(patches, wmat, scale, shift, s_pad, btile):
    """patches: (Bp, 4*S_pad, K) bf16, Bp a multiple of btile."""
    bp, qs, k = patches.shape
    cout = wmat.shape[1]
    return pl.pallas_call(
        conv_block_kernel,
        out_shape=jax.ShapeDtypeStruct((bp, s_pad, cout), jnp.float32),
        grid=(bp // btile,),
        in_specs=[
            pl.BlockSpec((btile, qs, k), lambda b: (b, 0, 0)),
            pl.BlockSpec((k, cout), lambda b: (0, 0)),      # weights resident across steps
            pl.BlockSpec((1, cout), lambda b: (0, 0)),
            pl.BlockSpec((1, cout), lambda b: (0, 0)),
        ],
        out_specs=pl.BlockSpec((btile, s_pad, cout), lambda b: (b, 0, 0)),
        compiler_params=pltpu.CompilerParams(dimension_semantics=("parallel",)),
    )(patches, wmat, scale, shift)


def mlp_pallas(x, w1, b1, w2, b2, w3, b3, btile):
    bp, f = x.shape
    h1, h2, o = w1.shape[1], w2.shape[1], w3.shape[1]
    return pl.pallas_call(
        mlp_kernel,
        out_shape=jax.ShapeDtypeStruct((bp, o), jnp.float32),
        grid=(bp // btile,),
        in_specs=[
            pl.BlockSpec((btile, f), lambda b: (b, 0)),
            pl.BlockSpec((f, h1), lambda b: (0, 0)),        # fc weights resident in VMEM
            pl.BlockSpec((1, h1), lambda b: (0, 0)),
            pl.BlockSpec((h1, h2), lambda b: (0, 0)),
            pl.BlockSpec((1, h2), lambda b: (0, 0)),
            pl.BlockSpec((h2, o), lambda b: (0, 0)),
            pl.BlockSpec((1, o), lambda b: (0, 0)),
        ],
        out_specs=pl.BlockSpec((btile, o), lambda b: (b, 0)),
        compiler_params=pltpu.CompilerParams(dimension_semantics=("parallel",)),
    )(x, w1, b1, w2, b2, w3, b3)


# ---------------------------------------------------------------------------
# Glue: im2col patch extraction grouped by 2x2 pooling quadrant (XLA)
# ---------------------------------------------------------------------------
def extract_pooled_patches(x_nhwc, s_pad):
    """(B,H,W,C) -> (B, 4*s_pad, 9*C) bf16.

    Rows: quadrant-major, pooled spatial position minor (row-major over Ho x Wo),
    zero-padded from Ho*Wo to s_pad per quadrant. Lanes: (kh*3+kw)*C + c.
    """
    b, h, w, c = x_nhwc.shape
    ho, wo = h // 2, w // 2
    s = ho * wo
    xp = jnp.pad(x_nhwc.astype(jnp.bfloat16), ((0, 0), (1, 1), (1, 1), (0, 0)))
    quads = []
    for ph in range(2):
        for pw in range(2):
            taps = []
            for kh in range(3):
                for kw in range(3):
                    sl = xp[:, ph + kh: ph + kh + 2 * ho: 2,
                            pw + kw: pw + kw + 2 * wo: 2, :]          # (B, Ho, Wo, C)
                    taps.append(sl)
            quad = jnp.concatenate(taps, axis=-1).reshape(b, s, 9 * c)
            if s_pad > s:
                quad = jnp.pad(quad, ((0, 0), (0, s_pad - s), (0, 0)))
            quads.append(quad)
    return jnp.concatenate(quads, axis=1)                              # (B, 4*s_pad, 9*C)


# ---------------------------------------------------------------------------
# Full forward pass (Pallas)
# ---------------------------------------------------------------------------
@jax.jit
def mnist_cnn_forward(x_nchw, p):
    x = jnp.transpose(x_nchw, (0, 2, 3, 1)).astype(jnp.float32)        # NCHW -> NHWC
    b = x.shape[0]

    for i in (1, 2, 3):
        w = p[f"conv{i}_w"]                                            # (Cout, Cin, 3, 3)
        cout, cin = w.shape[0], w.shape[1]
        wmat = jnp.transpose(w, (2, 3, 1, 0)).reshape(9 * cin, cout).astype(jnp.bfloat16)
        scale = p[f"bn{i}_g"] / jnp.sqrt(p[f"bn{i}_v"] + BN_EPS)       # f32
        shift = (p[f"conv{i}_b"] - p[f"bn{i}_m"]) * scale + p[f"bn{i}_b"]

        _, h, wd, _ = x.shape
        ho, wo = h // 2, wd // 2
        s = ho * wo
        s_pad = _round_up(s, 8)                                        # 196->200, 49->56, 9->16

        patches = extract_pooled_patches(x, s_pad)                     # (B, 4*s_pad, 9*Cin) bf16
        btile = min(b, CONV_BTILE)
        bp = _round_up(b, btile)
        if bp > b:
            patches = jnp.pad(patches, ((0, bp - b), (0, 0), (0, 0)))

        y = conv_block_pallas(patches, wmat, scale[None, :], shift[None, :], s_pad, btile)
        x = y[:b, :s, :].reshape(b, ho, wo, cout)                      # drop spatial padding

    # flatten (PyTorch flattens NCHW: index = c*9 + h*3 + w).  We keep the
    # kernel-friendly (h*3+w)*128 + c order and permute fc1's weight instead.
    feat = x.reshape(b, -1)                                            # (B, 1152)
    w1 = jnp.transpose(p["fc1_w"].reshape(256, 128, 9), (2, 1, 0)).reshape(1152, 256)
    w2 = p["fc2_w"].T
    w3 = p["fc3_w"].T

    btile = min(b, MLP_BTILE)
    bp = _round_up(b, btile)
    if bp > b:
        feat = jnp.pad(feat, ((0, bp - b), (0, 0)))
    out = mlp_pallas(feat, w1, p["fc1_b"][None, :],
                     w2, p["fc2_b"][None, :],
                     w3, p["fc3_b"][None, :], btile)
    return out[:b]


# ---------------------------------------------------------------------------
# Pure-JAX reference in PyTorch conventions (sanity check)
# ---------------------------------------------------------------------------
def ref_forward(x_nchw, p):
    x = x_nchw.astype(jnp.float32)
    for i in (1, 2, 3):
        w, bias = p[f"conv{i}_w"], p[f"conv{i}_b"]
        x = jax.lax.conv_general_dilated(
            x, w, (1, 1), ((1, 1), (1, 1)),
            dimension_numbers=("NCHW", "OIHW", "NCHW")) + bias[None, :, None, None]
        g, bt, m, v = p[f"bn{i}_g"], p[f"bn{i}_b"], p[f"bn{i}_m"], p[f"bn{i}_v"]
        x = (x - m[None, :, None, None]) / jnp.sqrt(v + BN_EPS)[None, :, None, None]
        x = x * g[None, :, None, None] + bt[None, :, None, None]
        x = jnp.maximum(x, 0.0)
        b, c, h, wd = x.shape
        ho, wo = h // 2, wd // 2
        x = x[:, :, :2 * ho, :2 * wo].reshape(b, c, ho, 2, wo, 2).max(axis=(3, 5))
    x = x.reshape(x.shape[0], -1)
    x = x @ p["fc1_w"].T + p["fc1_b"]
    x = x @ p["fc2_w"].T + p["fc2_b"]
    x = x @ p["fc3_w"].T + p["fc3_b"]
    return x


# ---------------------------------------------------------------------------
# Deterministic parameter init (shapes from MNISTCNN.__init__, activation='relu')
# ---------------------------------------------------------------------------
def init_params(key):
    keys = jax.random.split(key, 32)
    k = iter(range(32))

    def nrm(shape, s=0.1):
        return jax.random.normal(keys[next(k)], shape, jnp.float32) * s

    p = {}
    for i, (cin, cout) in enumerate([(1, 32), (32, 64), (64, 128)], start=1):
        p[f"conv{i}_w"] = nrm((cout, cin, 3, 3))
        p[f"conv{i}_b"] = nrm((cout,))
        p[f"bn{i}_g"] = 1.0 + nrm((cout,), 0.1)
        p[f"bn{i}_b"] = nrm((cout,), 0.1)
        p[f"bn{i}_m"] = nrm((cout,), 0.1)
        p[f"bn{i}_v"] = 1.0 + jnp.abs(nrm((cout,), 0.1))
    for name, (fin, fout) in {"fc1": (1152, 256), "fc2": (256, 128), "fc3": (128, 10)}.items():
        p[f"{name}_w"] = nrm((fout, fin), 0.05)
        p[f"{name}_b"] = nrm((fout,), 0.05)
    return p


if __name__ == "__main__":
    key = jax.random.PRNGKey(0)
    pkey, xkey = jax.random.split(key)
    params = init_params(pkey)
    # MNIST geometry is fixed by fc1 (128*3*3): input must be (B, 1, 28, 28).
    x = jax.random.normal(xkey, (2, 1, 28, 28), jnp.float32)

    out = jax.block_until_ready(mnist_cnn_forward(x, params))
    assert out.shape == (2, 10) and out.dtype == jnp.float32

    ref = jax.block_until_ready(ref_forward(x, params))
    # Conv matmul operands are bf16 (per the perf review); tolerance widened vs the
    # pure-f32 reference accordingly.  Any layout/indexing bug would produce O(1) errors.
    np.testing.assert_allclose(np.asarray(out), np.asarray(ref), rtol=1e-1, atol=1e-1)

    print("KERNEL_OK")
</pallas_src>

<mosaic_0001>
module attributes {stable_mosaic.version = 11 : i64} {
  func.func @conv_block_kernel(%arg0: i32, %arg1: memref<2x800x9xbf16, #tpu.memory_space<vmem>>, %arg2: memref<9x32xbf16, #tpu.memory_space<vmem>>, %arg3: memref<1x32xf32, #tpu.memory_space<vmem>>, %arg4: memref<1x32xf32, #tpu.memory_space<vmem>>, %arg5: memref<2x200x32xf32, #tpu.memory_space<vmem>>) attributes {dimension_semantics = [#tpu.dimension_semantics<parallel>], iteration_bounds = array<i64: 1>, scalar_prefetch = 0 : i64, scratch_operands = 0 : i64, tpu.core_type = #tpu.core_type<tc>, window_params = [{transform_indices = @transform_0, window_bounds = array<i64: 2, 800, 9>}, {pipeline_mode = #tpu.pipeline_mode<synchronous>, transform_indices = @transform_1, window_bounds = array<i64: 9, 32>}, {pipeline_mode = #tpu.pipeline_mode<synchronous>, transform_indices = @transform_2, window_bounds = array<i64: 1, 32>}, {pipeline_mode = #tpu.pipeline_mode<synchronous>, transform_indices = @transform_3, window_bounds = array<i64: 1, 32>}, {transform_indices = @transform_4, window_bounds = array<i64: 2, 200, 32>}]} {
    %c0 = arith.constant 0 : index
    %c0_0 = arith.constant 0 : index
    %c0_1 = arith.constant 0 : index
    %0 = vector.load %arg1[%c0, %c0_0, %c0_1] : memref<2x800x9xbf16, #tpu.memory_space<vmem>>, vector<2x800x9xbf16>
    %1 = vector.shape_cast %0 : vector<2x800x9xbf16> to vector<1600x9xbf16>
    %c0_2 = arith.constant 0 : index
    %c0_3 = arith.constant 0 : index
    %2 = vector.load %arg2[%c0_2, %c0_3] : memref<9x32xbf16, #tpu.memory_space<vmem>>, vector<9x32xbf16>
    %cst = arith.constant dense<0.000000e+00> : vector<1600x32xf32>
    %3 = tpu.matmul %1, %2, %cst {dimension_numbers = #tpu.dot_dimension_numbers<[1], [0], [0], [1], [0, 0, 1, 1], [], []>} : vector<1600x9xbf16>, vector<9x32xbf16>, vector<1600x32xf32> -> vector<1600x32xf32>
    %c0_4 = arith.constant 0 : index
    %c0_5 = arith.constant 0 : index
    %4 = vector.load %arg3[%c0_4, %c0_5] : memref<1x32xf32, #tpu.memory_space<vmem>>, vector<1x32xf32>
    %5 = vector.broadcast %4 : vector<1x32xf32> to vector<1600x32xf32>
    %6 = arith.mulf %3, %5 : vector<1600x32xf32>
    %c0_6 = arith.constant 0 : index
    %c0_7 = arith.constant 0 : index
    %7 = vector.load %arg4[%c0_6, %c0_7] : memref<1x32xf32, #tpu.memory_space<vmem>>, vector<1x32xf32>
    %8 = vector.broadcast %7 : vector<1x32xf32> to vector<1600x32xf32>
    %9 = arith.addf %6, %8 : vector<1600x32xf32>
    %cst_8 = arith.constant 0.000000e+00 : f32
    %10 = vector.broadcast %cst_8 : f32 to vector<1600x32xf32>
    %11 = arith.maximumf %9, %10 : vector<1600x32xf32>
    %12 = vector.shape_cast %11 : vector<1600x32xf32> to vector<2x4x200x32xf32>
    %cst_9 = arith.constant dense<0xFF800000> : vector<2x200x32xf32>
    %13 = vector.multi_reduction <maximumf>, %12, %cst_9 [1] : vector<2x4x200x32xf32> to vector<2x200x32xf32>
    %c0_10 = arith.constant 0 : index
    %c0_11 = arith.constant 0 : index
    %c0_12 = arith.constant 0 : index
    %14 = vector.load %arg5[%c0_10, %c0_11, %c0_12] : memref<2x200x32xf32, #tpu.memory_space<vmem>>, vector<2x200x32xf32>
    tpu.vector_store %arg5[%c0_10, %c0_11, %c0_12], %13 {strides = array<i32>} : memref<2x200x32xf32, #tpu.memory_space<vmem>>, vector<2x200x32xf32>,
    return
  }
  func.func @transform_0(%arg0: i32) -> (i32, i32, i32) {
    %c0_i32 = arith.constant 0 : i32
    %c0_i32_0 = arith.constant 0 : i32
    %c0_i32_1 = arith.constant 0 : i32
    return %arg0, %c0_i32, %c0_i32_0 : i32, i32, i32
  }
  func.func @transform_1(%arg0: i32) -> (i32, i32) {
    %c0_i32 = arith.constant 0 : i32
    %c0_i32_0 = arith.constant 0 : i32
    %c0_i32_1 = arith.constant 0 : i32
    return %c0_i32, %c0_i32_0 : i32, i32
  }
  func.func @transform_2(%arg0: i32) -> (i32, i32) {
    %c0_i32 = arith.constant 0 : i32
    %c0_i32_0 = arith.constant 0 : i32
    %c0_i32_1 = arith.constant 0 : i32
    return %c0_i32, %c0_i32_0 : i32, i32
  }
  func.func @transform_3(%arg0: i32) -> (i32, i32) {
    %c0_i32 = arith.constant 0 : i32
    %c0_i32_0 = arith.constant 0 : i32
    %c0_i32_1 = arith.constant 0 : i32
    return %c0_i32, %c0_i32_0 : i32, i32
  }
  func.func @transform_4(%arg0: i32) -> (i32, i32, i32) {
    %c0_i32 = arith.constant 0 : i32
    %c0_i32_0 = arith.constant 0 : i32
    %c0_i32_1 = arith.constant 0 : i32
    return %arg0, %c0_i32, %c0_i32_0 : i32, i32, i32
  }
}

module attributes {stable_mosaic.version = 11 : i64} {
  func.func @conv_block_kernel(%arg0: i32, %arg1: memref<2x224x288xbf16, #tpu.memory_space<vmem>>, %arg2: memref<288x64xbf16, #tpu.memory_space<vmem>>, %arg3: memref<1x64xf32, #tpu.memory_space<vmem>>, %arg4: memref<1x64xf32, #tpu.memory_space<vmem>>, %arg5: memref<2x56x64xf32, #tpu.memory_space<vmem>>) attributes {dimension_semantics = [#tpu.dimension_semantics<parallel>], iteration_bounds = array<i64: 1>, scalar_prefetch = 0 : i64, scratch_operands = 0 : i64, tpu.core_type = #tpu.core_type<tc>, window_params = [{transform_indices = @transform_0, window_bounds = array<i64: 2, 224, 288>}, {pipeline_mode = #tpu.pipeline_mode<synchronous>, transform_indices = @transform_1, window_bounds = array<i64: 288, 64>}, {pipeline_mode = #tpu.pipeline_mode<synchronous>, transform_indices = @transform_2, window_bounds = array<i64: 1, 64>}, {pipeline_mode = #tpu.pipeline_mode<synchronous>, transform_indices = @transform_3, window_bounds = array<i64: 1, 64>}, {transform_indices = @transform_4, window_bounds = array<i64: 2, 56, 64>}]} {
    %c0 = arith.constant 0 : index
    %c0_0 = arith.constant 0 : index
    %c0_1 = arith.constant 0 : index
    %0 = vector.load %arg1[%c0, %c0_0, %c0_1] : memref<2x224x288xbf16, #tpu.memory_space<vmem>>, vector<2x224x288xbf16>
    %1 = vector.shape_cast %0 : vector<2x224x288xbf16> to vector<448x288xbf16>
    %c0_2 = arith.constant 0 : index
    %c0_3 = arith.constant 0 : index
    %2 = vector.load %arg2[%c0_2, %c0_3] : memref<288x64xbf16, #tpu.memory_space<vmem>>, vector<288x64xbf16>
    %cst = arith.constant dense<0.000000e+00> : vector<448x64xf32>
    %3 = tpu.matmul %1, %2, %cst {dimension_numbers = #tpu.dot_dimension_numbers<[1], [0], [0], [1], [0, 0, 1, 1], [], []>} : vector<448x288xbf16>, vector<288x64xbf16>, vector<448x64xf32> -> vector<448x64xf32>
    %c0_4 = arith.constant 0 : index
    %c0_5 = arith.constant 0 : index
    %4 = vector.load %arg3[%c0_4, %c0_5] : memref<1x64xf32, #tpu.memory_space<vmem>>, vector<1x64xf32>
    %5 = vector.broadcast %4 : vector<1x64xf32> to vector<448x64xf32>
    %6 = arith.mulf %3, %5 : vector<448x64xf32>
    %c0_6 = arith.constant 0 : index
    %c0_7 = arith.constant 0 : index
    %7 = vector.load %arg4[%c0_6, %c0_7] : memref<1x64xf32, #tpu.memory_space<vmem>>, vector<1x64xf32>
    %8 = vector.broadcast %7 : vector<1x64xf32> to vector<448x64xf32>
    %9 = arith.addf %6, %8 : vector<448x64xf32>
    %cst_8 = arith.constant 0.000000e+00 : f32
    %10 = vector.broadcast %cst_8 : f32 to vector<448x64xf32>
    %11 = arith.maximumf %9, %10 : vector<448x64xf32>
    %12 = vector.shape_cast %11 : vector<448x64xf32> to vector<2x4x56x64xf32>
    %cst_9 = arith.constant dense<0xFF800000> : vector<2x56x64xf32>
    %13 = vector.multi_reduction <maximumf>, %12, %cst_9 [1] : vector<2x4x56x64xf32> to vector<2x56x64xf32>
    %c0_10 = arith.constant 0 : index
    %c0_11 = arith.constant 0 : index
    %c0_12 = arith.constant 0 : index
    %14 = vector.load %arg5[%c0_10, %c0_11, %c0_12] : memref<2x56x64xf32, #tpu.memory_space<vmem>>, vector<2x56x64xf32>
    tpu.vector_store %arg5[%c0_10, %c0_11, %c0_12], %13 {strides = array<i32>} : memref<2x56x64xf32, #tpu.memory_space<vmem>>, vector<2x56x64xf32>,
    return
  }
  func.func @transform_0(%arg0: i32) -> (i32, i32, i32) {
    %c0_i32 = arith.constant 0 : i32
    %c0_i32_0 = arith.constant 0 : i32
    %c0_i32_1 = arith.constant 0 : i32
    return %arg0, %c0_i32, %c0_i32_0 : i32, i32, i32
  }
  func.func @transform_1(%arg0: i32) -> (i32, i32) {
    %c0_i32 = arith.constant 0 : i32
    %c0_i32_0 = arith.constant 0 : i32
    %c0_i32_1 = arith.constant 0 : i32
    return %c0_i32, %c0_i32_0 : i32, i32
  }
  func.func @transform_2(%arg0: i32) -> (i32, i32) {
    %c0_i32 = arith.constant 0 : i32
    %c0_i32_0 = arith.constant 0 : i32
    %c0_i32_1 = arith.constant 0 : i32
    return %c0_i32, %c0_i32_0 : i32, i32
  }
  func.func @transform_3(%arg0: i32) -> (i32, i32) {
    %c0_i32 = arith.constant 0 : i32
    %c0_i32_0 = arith.constant 0 : i32
    %c0_i32_1 = arith.constant 0 : i32
    return %c0_i32, %c0_i32_0 : i32, i32
  }
  func.func @transform_4(%arg0: i32) -> (i32, i32, i32) {
    %c0_i32 = arith.constant 0 : i32
    %c0_i32_0 = arith.constant 0 : i32
    %c0_i32_1 = arith.constant 0 : i32
    return %arg0, %c0_i32, %c0_i32_0 : i32, i32, i32
  }
}

module attributes {stable_mosaic.version = 11 : i64} {
  func.func @conv_block_kernel(%arg0: i32, %arg1: memref<2x64x576xbf16, #tpu.memory_space<vmem>>, %arg2: memref<576x128xbf16, #tpu.memory_space<vmem>>, %arg3: memref<1x128xf32, #tpu.memory_space<vmem>>, %arg4: memref<1x128xf32, #tpu.memory_space<vmem>>, %arg5: memref<2x16x128xf32, #tpu.memory_space<vmem>>) attributes {dimension_semantics = [#tpu.dimension_semantics<parallel>], iteration_bounds = array<i64: 1>, scalar_prefetch = 0 : i64, scratch_operands = 0 : i64, tpu.core_type = #tpu.core_type<tc>, window_params = [{transform_indices = @transform_0, window_bounds = array<i64: 2, 64, 576>}, {pipeline_mode = #tpu.pipeline_mode<synchronous>, transform_indices = @transform_1, window_bounds = array<i64: 576, 128>}, {pipeline_mode = #tpu.pipeline_mode<synchronous>, transform_indices = @transform_2, window_bounds = array<i64: 1, 128>}, {pipeline_mode = #tpu.pipeline_mode<synchronous>, transform_indices = @transform_3, window_bounds = array<i64: 1, 128>}, {transform_indices = @transform_4, window_bounds = array<i64: 2, 16, 128>}]} {
    %c0 = arith.constant 0 : index
    %c0_0 = arith.constant 0 : index
    %c0_1 = arith.constant 0 : index
    %0 = vector.load %arg1[%c0, %c0_0, %c0_1] : memref<2x64x576xbf16, #tpu.memory_space<vmem>>, vector<2x64x576xbf16>
    %1 = vector.shape_cast %0 : vector<2x64x576xbf16> to vector<128x576xbf16>
    %c0_2 = arith.constant 0 : index
    %c0_3 = arith.constant 0 : index
    %2 = vector.load %arg2[%c0_2, %c0_3] : memref<576x128xbf16, #tpu.memory_space<vmem>>, vector<576x128xbf16>
    %cst = arith.constant dense<0.000000e+00> : vector<128x128xf32>
    %3 = tpu.matmul %1, %2, %cst {dimension_numbers = #tpu.dot_dimension_numbers<[1], [0], [0], [1], [0, 0, 1, 1], [], []>} : vector<128x576xbf16>, vector<576x128xbf16>, vector<128x128xf32> -> vector<128x128xf32>
    %c0_4 = arith.constant 0 : index
    %c0_5 = arith.constant 0 : index
    %4 = vector.load %arg3[%c0_4, %c0_5] : memref<1x128xf32, #tpu.memory_space<vmem>>, vector<1x128xf32>
    %5 = vector.broadcast %4 : vector<1x128xf32> to vector<128x128xf32>
    %6 = arith.mulf %3, %5 : vector<128x128xf32>
    %c0_6 = arith.constant 0 : index
    %c0_7 = arith.constant 0 : index
    %7 = vector.load %arg4[%c0_6, %c0_7] : memref<1x128xf32, #tpu.memory_space<vmem>>, vector<1x128xf32>
    %8 = vector.broadcast %7 : vector<1x128xf32> to vector<128x128xf32>
    %9 = arith.addf %6, %8 : vector<128x128xf32>
    %cst_8 = arith.constant 0.000000e+00 : f32
    %10 = vector.broadcast %cst_8 : f32 to vector<128x128xf32>
    %11 = arith.maximumf %9, %10 : vector<128x128xf32>
    %12 = vector.shape_cast %11 : vector<128x128xf32> to vector<2x4x16x128xf32>
    %cst_9 = arith.constant dense<0xFF800000> : vector<2x16x128xf32>
    %13 = vector.multi_reduction <maximumf>, %12, %cst_9 [1] : vector<2x4x16x128xf32> to vector<2x16x128xf32>
    %c0_10 = arith.constant 0 : index
    %c0_11 = arith.constant 0 : index
    %c0_12 = arith.constant 0 : index
    %14 = vector.load %arg5[%c0_10, %c0_11, %c0_12] : memref<2x16x128xf32, #tpu.memory_space<vmem>>, vector<2x16x128xf32>
    tpu.vector_store %arg5[%c0_10, %c0_11, %c0_12], %13 {strides = array<i32>} : memref<2x16x128xf32, #tpu.memory_space<vmem>>, vector<2x16x128xf32>,
    return
  }
  func.func @transform_0(%arg0: i32) -> (i32, i32, i32) {
    %c0_i32 = arith.constant 0 : i32
    %c0_i32_0 = arith.constant 0 : i32
    %c0_i32_1 = arith.constant 0 : i32
    return %arg0, %c0_i32, %c0_i32_0 : i32, i32, i32
  }
  func.func @transform_1(%arg0: i32) -> (i32, i32) {
    %c0_i32 = arith.constant 0 : i32
    %c0_i32_0 = arith.constant 0 : i32
    %c0_i32_1 = arith.constant 0 : i32
    return %c0_i32, %c0_i32_0 : i32, i32
  }
  func.func @transform_2(%arg0: i32) -> (i32, i32) {
    %c0_i32 = arith.constant 0 : i32
    %c0_i32_0 = arith.constant 0 : i32
    %c0_i32_1 = arith.constant 0 : i32
    return %c0_i32, %c0_i32_0 : i32, i32
  }
  func.func @transform_3(%arg0: i32) -> (i32, i32) {
    %c0_i32 = arith.constant 0 : i32
    %c0_i32_0 = arith.constant 0 : i32
    %c0_i32_1 = arith.constant 0 : i32
    return %c0_i32, %c0_i32_0 : i32, i32
  }
  func.func @transform_4(%arg0: i32) -> (i32, i32, i32) {
    %c0_i32 = arith.constant 0 : i32
    %c0_i32_0 = arith.constant 0 : i32
    %c0_i32_1 = arith.constant 0 : i32
    return %arg0, %c0_i32, %c0_i32_0 : i32, i32, i32
  }
}

module attributes {stable_mosaic.version = 11 : i64} {
  func.func @mlp_kernel(%arg0: i32, %arg1: memref<2x1152xf32, #tpu.memory_space<vmem>>, %arg2: memref<1152x256xf32, #tpu.memory_space<vmem>>, %arg3: memref<1x256xf32, #tpu.memory_space<vmem>>, %arg4: memref<256x128xf32, #tpu.memory_space<vmem>>, %arg5: memref<1x128xf32, #tpu.memory_space<vmem>>, %arg6: memref<128x10xf32, #tpu.memory_space<vmem>>, %arg7: memref<1x10xf32, #tpu.memory_space<vmem>>, %arg8: memref<2x10xf32, #tpu.memory_space<vmem>>) attributes {dimension_semantics = [#tpu.dimension_semantics<parallel>], iteration_bounds = array<i64: 1>, scalar_prefetch = 0 : i64, scratch_operands = 0 : i64, tpu.core_type = #tpu.core_type<tc>, window_params = [{transform_indices = @transform_0, window_bounds = array<i64: 2, 1152>}, {pipeline_mode = #tpu.pipeline_mode<synchronous>, transform_indices = @transform_1, window_bounds = array<i64: 1152, 256>}, {pipeline_mode = #tpu.pipeline_mode<synchronous>, transform_indices = @transform_2, window_bounds = array<i64: 1, 256>}, {pipeline_mode = #tpu.pipeline_mode<synchronous>, transform_indices = @transform_3, window_bounds = array<i64: 256, 128>}, {pipeline_mode = #tpu.pipeline_mode<synchronous>, transform_indices = @transform_4, window_bounds = array<i64: 1, 128>}, {pipeline_mode = #tpu.pipeline_mode<synchronous>, transform_indices = @transform_5, window_bounds = array<i64: 128, 10>}, {pipeline_mode = #tpu.pipeline_mode<synchronous>, transform_indices = @transform_6, window_bounds = array<i64: 1, 10>}, {transform_indices = @transform_7, window_bounds = array<i64: 2, 10>}]} {
    %c0 = arith.constant 0 : index
    %c0_0 = arith.constant 0 : index
    %0 = vector.load %arg1[%c0, %c0_0] : memref<2x1152xf32, #tpu.memory_space<vmem>>, vector<2x1152xf32>
    %c0_1 = arith.constant 0 : index
    %c0_2 = arith.constant 0 : index
    %1 = vector.load %arg2[%c0_1, %c0_2] : memref<1152x256xf32, #tpu.memory_space<vmem>>, vector<1152x256xf32>
    %cst = arith.constant dense<0.000000e+00> : vector<2x256xf32>
    %2 = tpu.matmul %0, %1, %cst {dimension_numbers = #tpu.dot_dimension_numbers<[1], [0], [0], [1], [0, 0, 1, 1], [], []>} : vector<2x1152xf32>, vector<1152x256xf32>, vector<2x256xf32> -> vector<2x256xf32>
    %c0_3 = arith.constant 0 : index
    %c0_4 = arith.constant 0 : index
    %3 = vector.load %arg3[%c0_3, %c0_4] : memref<1x256xf32, #tpu.memory_space<vmem>>, vector<1x256xf32>
    %4 = vector.broadcast %3 : vector<1x256xf32> to vector<2x256xf32>
    %5 = arith.addf %2, %4 : vector<2x256xf32>
    %c0_5 = arith.constant 0 : index
    %c0_6 = arith.constant 0 : index
    %6 = vector.load %arg4[%c0_5, %c0_6] : memref<256x128xf32, #tpu.memory_space<vmem>>, vector<256x128xf32>
    %cst_7 = arith.constant dense<0.000000e+00> : vector<2x128xf32>
    %7 = tpu.matmul %5, %6, %cst_7 {dimension_numbers = #tpu.dot_dimension_numbers<[1], [0], [0], [1], [0, 0, 1, 1], [], []>} : vector<2x256xf32>, vector<256x128xf32>, vector<2x128xf32> -> vector<2x128xf32>
    %c0_8 = arith.constant 0 : index
    %c0_9 = arith.constant 0 : index
    %8 = vector.load %arg5[%c0_8, %c0_9] : memref<1x128xf32, #tpu.memory_space<vmem>>, vector<1x128xf32>
    %9 = vector.broadcast %8 : vector<1x128xf32> to vector<2x128xf32>
    %10 = arith.addf %7, %9 : vector<2x128xf32>
    %c0_10 = arith.constant 0 : index
    %c0_11 = arith.constant 0 : index
    %11 = vector.load %arg6[%c0_10, %c0_11] : memref<128x10xf32, #tpu.memory_space<vmem>>, vector<128x10xf32>
    %cst_12 = arith.constant dense<0.000000e+00> : vector<2x10xf32>
    %12 = tpu.matmul %10, %11, %cst_12 {dimension_numbers = #tpu.dot_dimension_numbers<[1], [0], [0], [1], [0, 0, 1, 1], [], []>} : vector<2x128xf32>, vector<128x10xf32>, vector<2x10xf32> -> vector<2x10xf32>
    %c0_13 = arith.constant 0 : index
    %c0_14 = arith.constant 0 : index
    %13 = vector.load %arg7[%c0_13, %c0_14] : memref<1x10xf32, #tpu.memory_space<vmem>>, vector<1x10xf32>
    %14 = vector.broadcast %13 : vector<1x10xf32> to vector<2x10xf32>
    %15 = arith.addf %12, %14 : vector<2x10xf32>
    %c0_15 = arith.constant 0 : index
    %c0_16 = arith.constant 0 : index
    %16 = vector.load %arg8[%c0_15, %c0_16] : memref<2x10xf32, #tpu.memory_space<vmem>>, vector<2x10xf32>
    tpu.vector_store %arg8[%c0_15, %c0_16], %15 {strides = array<i32>} : memref<2x10xf32, #tpu.memory_space<vmem>>, vector<2x10xf32>,
    return
  }
  func.func @transform_0(%arg0: i32) -> (i32, i32) {
    %c0_i32 = arith.constant 0 : i32
    %c0_i32_0 = arith.constant 0 : i32
    return %arg0, %c0_i32 : i32, i32
  }
  func.func @transform_1(%arg0: i32) -> (i32, i32) {
    %c0_i32 = arith.constant 0 : i32
    %c0_i32_0 = arith.constant 0 : i32
    %c0_i32_1 = arith.constant 0 : i32
    return %c0_i32, %c0_i32_0 : i32, i32
  }
  func.func @transform_2(%arg0: i32) -> (i32, i32) {
    %c0_i32 = arith.constant 0 : i32
    %c0_i32_0 = arith.constant 0 : i32
    %c0_i32_1 = arith.constant 0 : i32
    return %c0_i32, %c0_i32_0 : i32, i32
  }
  func.func @transform_3(%arg0: i32) -> (i32, i32) {
    %c0_i32 = arith.constant 0 : i32
    %c0_i32_0 = arith.constant 0 : i32
    %c0_i32_1 = arith.constant 0 : i32
    return %c0_i32, %c0_i32_0 : i32, i32
  }
  func.func @transform_4(%arg0: i32) -> (i32, i32) {
    %c0_i32 = arith.constant 0 : i32
    %c0_i32_0 = arith.constant 0 : i32
    %c0_i32_1 = arith.constant 0 : i32
    return %c0_i32, %c0_i32_0 : i32, i32
  }
  func.func @transform_5(%arg0: i32) -> (i32, i32) {
    %c0_i32 = arith.constant 0 : i32
    %c0_i32_0 = arith.constant 0 : i32
    %c0_i32_1 = arith.constant 0 : i32
    return %c0_i32, %c0_i32_0 : i32, i32
  }
  func.func @transform_6(%arg0: i32) -> (i32, i32) {
    %c0_i32 = arith.constant 0 : i32
    %c0_i32_0 = arith.constant 0 : i32
    %c0_i32_1 = arith.constant 0 : i32
    return %c0_i32, %c0_i32_0 : i32, i32
  }
  func.func @transform_7(%arg0: i32) -> (i32, i32) {
    %c0_i32 = arith.constant 0 : i32
    %c0_i32_0 = arith.constant 0 : i32
    return %arg0, %c0_i32 : i32, i32
  }
}

</mosaic_0001>

<llo_original>
// kernel: mnist_cnn_forward.4
$region0: #{mnist_cnn_forward.4}
  #allocation0 [shape = 'u32[]', space=smem, size = 0x4, offset = 0x4, fixed_abs, tag = 'smem constant byte address 0x4 - core index']
  #allocation1 [shape = 'u32[144,128]{1,0:T(1,128)}', space=vmem, size = 0x12000, scoped, tag = 'internal scratch']
  %s0 = inlined_call_operand.vmem [shape: bf16[2,800,9], index: 0, kind: input, shape index: {}]
  %s1 = inlined_call_operand.vmem [shape: bf16[9,32], index: 1, kind: input, shape index: {}]
  %s2 = inlined_call_operand.vmem [shape: f32[1,32], index: 2, kind: input, shape index: {}]
  %s3 = inlined_call_operand.vmem [shape: f32[1,32], index: 3, kind: input, shape index: {}]
  %s4 = inlined_call_operand.vmem [shape: f32[2,200,32], index: 4, kind: output, shape index: {}]
  %s5 = sld [smem:[#allocation0]]
  $region26: #{mnist_cnn_forward.4} parent=0
    _
  %s7 = ssub.s32 1, %s5
  %s8 = scalar_select 0, %s7, %s5
  // Predicated region
  $region2: #{mnist_cnn_forward.4} parent=0 // pred_check
    _
  $region3: #{mnist_cnn_forward.4} parent=0 // pred_check_branch
    %10 = sbr.rel (0) target = $region5
  $region4: #{mnist_cnn_forward.4} parent=0 // pred_region
    _
  $region5: #{mnist_cnn_forward.4} parent=0 // pred_fallthru
    _
  // Predicated region
  $region6: #{mnist_cnn_forward.4} parent=0 // pred_check
    _
  $region7: #{mnist_cnn_forward.4} parent=0 // pred_check_branch
    %12 = sbr.rel (0) target = $region9
  $region8: #{mnist_cnn_forward.4} parent=0 // pred_region
    _
  $region9: #{mnist_cnn_forward.4} parent=0 // pred_fallthru
    _
  // Predicated region
  $region10: #{mnist_cnn_forward.4} parent=0 // pred_check
    _
  $region11: #{mnist_cnn_forward.4} parent=0 // pred_check_branch
    %14 = sbr.rel (0) target = $region13
  $region12: #{mnist_cnn_forward.4} parent=0 // pred_region
    _
  $region13: #{mnist_cnn_forward.4} parent=0 // pred_fallthru
    _
  // Predicated region
  $region14: #{mnist_cnn_forward.4} parent=0 // pred_check
    _
  $region15: #{mnist_cnn_forward.4} parent=0 // pred_check_branch
    %16 = sbr.rel (0) target = $region17
  $region16: #{mnist_cnn_forward.4} parent=0 // pred_region
    _
  $region17: #{mnist_cnn_forward.4} parent=0 // pred_fallthru
    _
  %v18 = vld [vmem:[%s0] sm:$0xf]
  %v19 = vld [vmem:[%s0 + $0x4] sm:$0xf]
  %v20 = vld [vmem:[%s0 + $0x8] sm:$0xf]
  %v21 = vld [vmem:[%s0 + $0xc] sm:$0xf]
  %v22 = vld [vmem:[%s0 + $0x10] sm:$0xf]
  %v23 = vld [vmem:[%s0 + $0x14] sm:$0xf]
  %v24 = vld [vmem:[%s0 + $0x18] sm:$0xf]
  %v25 = vld [vmem:[%s0 + $0x1c] sm:$0xf]
  %v26 = vld [vmem:[%s0 + $0x20] sm:$0xf]
  %v27 = vld [vmem:[%s0 + $0x24] sm:$0xf]
  %v28 = vld [vmem:[%s0 + $0x28] sm:$0xf]
  %v29 = vld [vmem:[%s0 + $0x2c] sm:$0xf]
  %v30 = vld [vmem:[%s0 + $0x30] sm:$0xf]
  %v31 = vld [vmem:[%s0 + $0x34] sm:$0xf]
  %v32 = vld [vmem:[%s0 + $0x38] sm:$0xf]
  %v33 = vld [vmem:[%s0 + $0x3c] sm:$0xf]
  %v34 = vld [vmem:[%s0 + $0x40] sm:$0xf]
  %v35 = vld [vmem:[%s0 + $0x44] sm:$0xf]
  %v36 = vld [vmem:[%s0 + $0x48] sm:$0xf]
  %v37 = vld [vmem:[%s0 + $0x4c] sm:$0xf]
  %v38 = vld [vmem:[%s0 + $0x50] sm:$0xf]
  %v39 = vld [vmem:[%s0 + $0x54] sm:$0xf]
  %v40 = vld [vmem:[%s0 + $0x58] sm:$0xf]
  %v41 = vld [vmem:[%s0 + $0x5c] sm:$0xf]
  %v42 = vld [vmem:[%s0 + $0x60] sm:$0xf]
  %v43 = vld [vmem:[%s0 + $0x64] sm:$0xf]
  %v44 = vld [vmem:[%s0 + $0x68] sm:$0xf]
  %v45 = vld [vmem:[%s0 + $0x6c] sm:$0xf]
  %v46 = vld [vmem:[%s0 + $0x70] sm:$0xf]
  %v47 = vld [vmem:[%s0 + $0x74] sm:$0xf]
  %v48 = vld [vmem:[%s0 + $0x78] sm:$0xf]
  %v49 = vld [vmem:[%s0 + $0x7c] sm:$0xf]
  %v50 = vld [vmem:[%s0 + $0x80] sm:$0xf]
  %v51 = vld [vmem:[%s0 + $0x84] sm:$0xf]
  %v52 = vld [vmem:[%s0 + $0x88] sm:$0xf]
  %v53 = vld [vmem:[%s0 + $0x8c] sm:$0xf]
  %v54 = vld [vmem:[%s0 + $0x90] sm:$0xf]
  %v55 = vld [vmem:[%s0 + $0x94] sm:$0xf]
  %v56 = vld [vmem:[%s0 + $0x98] sm:$0xf]
  %v57 = vld [vmem:[%s0 + $0x9c] sm:$0xf]
  %v58 = vld [vmem:[%s0 + $0xa0] sm:$0xf]
  %v59 = vld [vmem:[%s0 + $0xa4] sm:$0xf]
  %v60 = vld [vmem:[%s0 + $0xa8] sm:$0xf]
  %v61 = vld [vmem:[%s0 + $0xac] sm:$0xf]
  %v62 = vld [vmem:[%s0 + $0xb0] sm:$0xf]
  %v63 = vld [vmem:[%s0 + $0xb4] sm:$0xf]
  %v64 = vld [vmem:[%s0 + $0xb8] sm:$0xf]
  %v65 = vld [vmem:[%s0 + $0xbc] sm:$0xf]
  %v66 = vld [vmem:[%s0 + $0xc0] sm:$0xf]
  %v67 = vld [vmem:[%s0 + $0xc4] sm:$0xf]
  %v68 = vld [vmem:[%s0 + $0xc8] sm:$0xf]
  %v69 = vld [vmem:[%s0 + $0xcc] sm:$0xf]
  %v70 = vld [vmem:[%s0 + $0xd0] sm:$0xf]
  %v71 = vld [vmem:[%s0 + $0xd4] sm:$0xf]
  %v72 = vld [vmem:[%s0 + $0xd8] sm:$0xf]
  %v73 = vld [vmem:[%s0 + $0xdc] sm:$0xf]
  %v74 = vld [vmem:[%s0 + $0xe0] sm:$0xf]
  %v75 = vld [vmem:[%s0 + $0xe4] sm:$0xf]
  %v76 = vld [vmem:[%s0 + $0xe8] sm:$0xf]
  %v77 = vld [vmem:[%s0 + $0xec] sm:$0xf]
  %v78 = vld [vmem:[%s0 + $0xf0] sm:$0xf]
  %v79 = vld [vmem:[%s0 + $0xf4] sm:$0xf]
  %v80 = vld [vmem:[%s0 + $0xf8] sm:$0xf]
  %v81 = vld [vmem:[%s0 + $0xfc] sm:$0xf]
  %v82 = vld [vmem:[%s0 + $0x100] sm:$0xf]
  %v83 = vld [vmem:[%s0 + $0x104] sm:$0xf]
  %v84 = vld [vmem:[%s0 + $0x108] sm:$0xf]
  %v85 = vld [vmem:[%s0 + $0x10c] sm:$0xf]
  %v86 = vld [vmem:[%s0 + $0x110] sm:$0xf]
  %v87 = vld [vmem:[%s0 + $0x114] sm:$0xf]
  %v88 = vld [vmem:[%s0 + $0x118] sm:$0xf]
  %v89 = vld [vmem:[%s0 + $0x11c] sm:$0xf]
  %v90 = vld [vmem:[%s0 + $0x120] sm:$0xf]
  %v91 = vld [vmem:[%s0 + $0x124] sm:$0xf]
  %v92 = vld [vmem:[%s0 + $0x128] sm:$0xf]
  %v93 = vld [vmem:[%s0 + $0x12c] sm:$0xf]
  %v94 = vld [vmem:[%s0 + $0x130] sm:$0xf]
  %v95 = vld [vmem:[%s0 + $0x134] sm:$0xf]
  %v96 = vld [vmem:[%s0 + $0x138] sm:$0xf]
  %v97 = vld [vmem:[%s0 + $0x13c] sm:$0xf]
  %v98 = vld [vmem:[%s0 + $0x140] sm:$0xf]
  %v99 = vld [vmem:[%s0 + $0x144] sm:$0xf]
  %v100 = vld [vmem:[%s0 + $0x148] sm:$0xf]
  %v101 = vld [vmem:[%s0 + $0x14c] sm:$0xf]
  %v102 = vld [vmem:[%s0 + $0x150] sm:$0xf]
  %v103 = vld [vmem:[%s0 + $0x154] sm:$0xf]
  %v104 = vld [vmem:[%s0 + $0x158] sm:$0xf]
  %v105 = vld [vmem:[%s0 + $0x15c] sm:$0xf]
  %v106 = vld [vmem:[%s0 + $0x160] sm:$0xf]
  %v107 = vld [vmem:[%s0 + $0x164] sm:$0xf]
  %v108 = vld [vmem:[%s0 + $0x168] sm:$0xf]
  %v109 = vld [vmem:[%s0 + $0x16c] sm:$0xf]
  %v110 = vld [vmem:[%s0 + $0x170] sm:$0xf]
  %v111 = vld [vmem:[%s0 + $0x174] sm:$0xf]
  %v112 = vld [vmem:[%s0 + $0x178] sm:$0xf]
  %v113 = vld [vmem:[%s0 + $0x17c] sm:$0xf]
  %v114 = vld [vmem:[%s0 + $0x180] sm:$0xf]
  %v115 = vld [vmem:[%s0 + $0x184] sm:$0xf]
  %v116 = vld [vmem:[%s0 + $0x188] sm:$0xf]
  %v117 = vld [vmem:[%s0 + $0x18c] sm:$0xf]
  %v118 = vld [vmem:[%s0 + $0x190] sm:$0xf]
  %v119 = vld [vmem:[%s0 + $0x194] sm:$0xf]
  %v120 = vld [vmem:[%s0 + $0x198] sm:$0xf]
  %v121 = vld [vmem:[%s0 + $0x19c] sm:$0xf]
  %v122 = vld [vmem:[%s0 + $0x1a0] sm:$0xf]
  %v123 = vld [vmem:[%s0 + $0x1a4] sm:$0xf]
  %v124 = vld [vmem:[%s0 + $0x1a8] sm:$0xf]
  %v125 = vld [vmem:[%s0 + $0x1ac] sm:$0xf]
  %v126 = vld [vmem:[%s0 + $0x1b0] sm:$0xf]
  %v127 = vld [vmem:[%s0 + $0x1b4] sm:$0xf]
  %v128 = vld [vmem:[%s0 + $0x1b8] sm:$0xf]
  %v129 = vld [vmem:[%s0 + $0x1bc] sm:$0xf]
  %v130 = vld [vmem:[%s0 + $0x1c0] sm:$0xf]
  %v131 = vld [vmem:[%s0 + $0x1c4] sm:$0xf]
  %v132 = vld [vmem:[%s0 + $0x1c8] sm:$0xf]
  %v133 = vld [vmem:[%s0 + $0x1cc] sm:$0xf]
  %v134 = vld [vmem:[%s0 + $0x1d0] sm:$0xf]
  %v135 = vld [vmem:[%s0 + $0x1d4] sm:$0xf]
  %v136 = vld [vmem:[%s0 + $0x1d8] sm:$0xf]
  %v137 = vld [vmem:[%s0 + $0x1dc] sm:$0xf]
  %v138 = vld [vmem:[%s0 + $0x1e0] sm:$0xf]
  %v139 = vld [vmem:[%s0 + $0x1e4] sm:$0xf]
  %v140 = vld [vmem:[%s0 + $0x1e8] sm:$0xf]
  %v141 = vld [vmem:[%s0 + $0x1ec] sm:$0xf]
  %v142 = vld [vmem:[%s0 + $0x1f0] sm:$0xf]
  %v143 = vld [vmem:[%s0 + $0x1f4] sm:$0xf]
  %v144 = vld [vmem:[%s0 + $0x1f8] sm:$0xf]
  %v145 = vld [vmem:[%s0 + $0x1fc] sm:$0xf]
  %v146 = vld [vmem:[%s0 + $0x200] sm:$0xf]
  %v147 = vld [vmem:[%s0 + $0x204] sm:$0xf]
  %v148 = vld [vmem:[%s0 + $0x208] sm:$0xf]
  %v149 = vld [vmem:[%s0 + $0x20c] sm:$0xf]
  %v150 = vld [vmem:[%s0 + $0x210] sm:$0xf]
  %v151 = vld [vmem:[%s0 + $0x214] sm:$0xf]
  %v152 = vld [vmem:[%s0 + $0x218] sm:$0xf]
  %v153 = vld [vmem:[%s0 + $0x21c] sm:$0xf]
  %v154 = vld [vmem:[%s0 + $0x220] sm:$0xf]
  %v155 = vld [vmem:[%s0 + $0x224] sm:$0xf]
  %v156 = vld [vmem:[%s0 + $0x228] sm:$0xf]
  %v157 = vld [vmem:[%s0 + $0x22c] sm:$0xf]
  %v158 = vld [vmem:[%s0 + $0x230] sm:$0xf]
  %v159 = vld [vmem:[%s0 + $0x234] sm:$0xf]
  %v160 = vld [vmem:[%s0 + $0x238] sm:$0xf]
  %v161 = vld [vmem:[%s0 + $0x23c] sm:$0xf]
  %v162 = vld [vmem:[%s0 + $0x240] sm:$0xf]
  %v163 = vld [vmem:[%s0 + $0x244] sm:$0xf]
  %v164 = vld [vmem:[%s0 + $0x248] sm:$0xf]
  %v165 = vld [vmem:[%s0 + $0x24c] sm:$0xf]
  %v166 = vld [vmem:[%s0 + $0x250] sm:$0xf]
  %v167 = vld [vmem:[%s0 + $0x254] sm:$0xf]
  %v168 = vld [vmem:[%s0 + $0x258] sm:$0xf]
  %v169 = vld [vmem:[%s0 + $0x25c] sm:$0xf]
  %v170 = vld [vmem:[%s0 + $0x260] sm:$0xf]
  %v171 = vld [vmem:[%s0 + $0x264] sm:$0xf]
  %v172 = vld [vmem:[%s0 + $0x268] sm:$0xf]
  %v173 = vld [vmem:[%s0 + $0x26c] sm:$0xf]
  %v174 = vld [vmem:[%s0 + $0x270] sm:$0xf]
  %v175 = vld [vmem:[%s0 + $0x274] sm:$0xf]
  %v176 = vld [vmem:[%s0 + $0x278] sm:$0xf]
  %v177 = vld [vmem:[%s0 + $0x27c] sm:$0xf]
  %v178 = vld [vmem:[%s0 + $0x280] sm:$0xf]
  %v179 = vld [vmem:[%s0 + $0x284] sm:$0xf]
  %v180 = vld [vmem:[%s0 + $0x288] sm:$0xf]
  %v181 = vld [vmem:[%s0 + $0x28c] sm:$0xf]
  %v182 = vld [vmem:[%s0 + $0x290] sm:$0xf]
  %v183 = vld [vmem:[%s0 + $0x294] sm:$0xf]
  %v184 = vld [vmem:[%s0 + $0x298] sm:$0xf]
  %v185 = vld [vmem:[%s0 + $0x29c] sm:$0xf]
  %v186 = vld [vmem:[%s0 + $0x2a0] sm:$0xf]
  %v187 = vld [vmem:[%s0 + $0x2a4] sm:$0xf]
  %v188 = vld [vmem:[%s0 + $0x2a8] sm:$0xf]
  %v189 = vld [vmem:[%s0 + $0x2ac] sm:$0xf]
  %v190 = vld [vmem:[%s0 + $0x2b0] sm:$0xf]
  %v191 = vld [vmem:[%s0 + $0x2b4] sm:$0xf]
  %v192 = vld [vmem:[%s0 + $0x2b8] sm:$0xf]
  %v193 = vld [vmem:[%s0 + $0x2bc] sm:$0xf]
  %v194 = vld [vmem:[%s0 + $0x2c0] sm:$0xf]
  %v195 = vld [vmem:[%s0 + $0x2c4] sm:$0xf]
  %v196 = vld [vmem:[%s0 + $0x2c8] sm:$0xf]
  %v197 = vld [vmem:[%s0 + $0x2cc] sm:$0xf]
  %v198 = vld [vmem:[%s0 + $0x2d0] sm:$0xf]
  %v199 = vld [vmem:[%s0 + $0x2d4] sm:$0xf]
  %v200 = vld [vmem:[%s0 + $0x2d8] sm:$0xf]
  %v201 = vld [vmem:[%s0 + $0x2dc] sm:$0xf]
  %v202 = vld [vmem:[%s0 + $0x2e0] sm:$0xf]
  %v203 = vld [vmem:[%s0 + $0x2e4] sm:$0xf]
  %v204 = vld [vmem:[%s0 + $0x2e8] sm:$0xf]
  %v205 = vld [vmem:[%s0 + $0x2ec] sm:$0xf]
  %v206 = vld [vmem:[%s0 + $0x2f0] sm:$0xf]
  %v207 = vld [vmem:[%s0 + $0x2f4] sm:$0xf]
  %v208 = vld [vmem:[%s0 + $0x2f8] sm:$0xf]
  %v209 = vld [vmem:[%s0 + $0x2fc] sm:$0xf]
  %v210 = vld [vmem:[%s0 + $0x300] sm:$0xf]
  %v211 = vld [vmem:[%s0 + $0x304] sm:$0xf]
  %v212 = vld [vmem:[%s0 + $0x308] sm:$0xf]
  %v213 = vld [vmem:[%s0 + $0x30c] sm:$0xf]
  %v214 = vld [vmem:[%s0 + $0x310] sm:$0xf]
  %v215 = vld [vmem:[%s0 + $0x314] sm:$0xf]
  %v216 = vld [vmem:[%s0 + $0x318] sm:$0xf]
  %v217 = vld [vmem:[%s0 + $0x31c] sm:$0xf]
  %v218 = vld [vmem:[%s1] sm:$0xf]
  %v219 = vld [vmem:[%s1 + $0x4] sm:$0x1]
  %v420 = vunpack.c.l.b16 %v18
  %v421 = vunpack.c.l.b16 %v19
  %v422 = vunpack.c.l.b16 %v20
  %v423 = vunpack.c.l.b16 %v21
  %v424 = vunpack.c.l.b16 %v22
  %v425 = vunpack.c.l.b16 %v23
  %v426 = vunpack.c.l.b16 %v24
  %v427 = vunpack.c.l.b16 %v25
  %v428 = vunpack.c.l.b16 %v26
  %v429 = vunpack.c.l.b16 %v27
  %v430 = vunpack.c.l.b16 %v28
  %v431 = vunpack.c.l.b16 %v29
  %v432 = vunpack.c.l.b16 %v30
  %v433 = vunpack.c.l.b16 %v31
  %v434 = vunpack.c.l.b16 %v32
  %v435 = vunpack.c.l.b16 %v33
  %v436 = vunpack.c.l.b16 %v34
  %v437 = vunpack.c.l.b16 %v35
  %v438 = vunpack.c.l.b16 %v36
  %v439 = vunpack.c.l.b16 %v37
  %v440 = vunpack.c.l.b16 %v38
  %v441 = vunpack.c.l.b16 %v39
  %v442 = vunpack.c.l.b16 %v40
  %v443 = vunpack.c.l.b16 %v41
  %v444 = vunpack.c.l.b16 %v42
  %v445 = vunpack.c.l.b16 %v43
  %v446 = vunpack.c.l.b16 %v44
  %v447 = vunpack.c.l.b16 %v45
  %v448 = vunpack.c.l.b16 %v46
  %v449 = vunpack.c.l.b16 %v47
  %v450 = vunpack.c.l.b16 %v48
  %v451 = vunpack.c.l.b16 %v49
  %v452 = vunpack.c.l.b16 %v50
  %v453 = vunpack.c.l.b16 %v51
  %v454 = vunpack.c.l.b16 %v52
  %v455 = vunpack.c.l.b16 %v53
  %v456 = vunpack.c.l.b16 %v54
  %v457 = vunpack.c.l.b16 %v55
  %v458 = vunpack.c.l.b16 %v56
  %v459 = vunpack.c.l.b16 %v57
  %v460 = vunpack.c.l.b16 %v58
  %v461 = vunpack.c.l.b16 %v59
  %v462 = vunpack.c.l.b16 %v60
  %v463 = vunpack.c.l.b16 %v61
  %v464 = vunpack.c.l.b16 %v62
  %v465 = vunpack.c.l.b16 %v63
  %v466 = vunpack.c.l.b16 %v64
  %v467 = vunpack.c.l.b16 %v65
  %v468 = vunpack.c.l.b16 %v66
  %v469 = vunpack.c.l.b16 %v67
  %v470 = vunpack.c.l.b16 %v68
  %v471 = vunpack.c.l.b16 %v69
  %v472 = vunpack.c.l.b16 %v70
  %v473 = vunpack.c.l.b16 %v71
  %v474 = vunpack.c.l.b16 %v72
  %v475 = vunpack.c.l.b16 %v73
  %v476 = vunpack.c.l.b16 %v74
  %v477 = vunpack.c.l.b16 %v75
  %v478 = vunpack.c.l.b16 %v76
  %v479 = vunpack.c.l.b16 %v77
  %v480 = vunpack.c.l.b16 %v78
  %v481 = vunpack.c.l.b16 %v79
  %v482 = vunpack.c.l.b16 %v80
  %v483 = vunpack.c.l.b16 %v81
  %v484 = vunpack.c.l.b16 %v82
  %v485 = vunpack.c.l.b16 %v83
  %v486 = vunpack.c.l.b16 %v84
  %v487 = vunpack.c.l.b16 %v85
  %v488 = vunpack.c.l.b16 %v86
  %v489 = vunpack.c.l.b16 %v87
  %v490 = vunpack.c.l.b16 %v88
  %v491 = vunpack.c.l.b16 %v89
  %v492 = vunpack.c.l.b16 %v90
  %v493 = vunpack.c.l.b16 %v91
  %v494 = vunpack.c.l.b16 %v92
  %v495 = vunpack.c.l.b16 %v93
  %v496 = vunpack.c.l.b16 %v94
  %v497 = vunpack.c.l.b16 %v95
  %v498 = vunpack.c.l.b16 %v96
  %v499 = vunpack.c.l.b16 %v97
  %v500 = vunpack.c.l.b16 %v98
  %v501 = vunpack.c.l.b16 %v99
  %v502 = vunpack.c.l.b16 %v100
  %v503 = vunpack.c.l.b16 %v101
  %v504 = vunpack.c.l.b16 %v102
  %v505 = vunpack.c.l.b16 %v103
  %v506 = vunpack.c.l.b16 %v104
  %v507 = vunpack.c.l.b16 %v105
  %v508 = vunpack.c.l.b16 %v106
  %v509 = vunpack.c.l.b16 %v107
  %v510 = vunpack.c.l.b16 %v108
  %v511 = vunpack.c.l.b16 %v109
  %v512 = vunpack.c.l.b16 %v110
  %v513 = vunpack.c.l.b16 %v111
  %v514 = vunpack.c.l.b16 %v112
  %v515 = vunpack.c.l.b16 %v113
  %v516 = vunpack.c.l.b16 %v114
  %v517 = vunpack.c.l.b16 %v115
  %v518 = vunpack.c.l.b16 %v116
  %v519 = vunpack.c.l.b16 %v117
  %v520 = vunpack.c.l.b16 %v118
  %v521 = vunpack.c.l.b16 %v119
  %v522 = vunpack.c.l.b16 %v120
  %v523 = vunpack.c.l.b16 %v121
  %v524 = vunpack.c.l.b16 %v122
  %v525 = vunpack.c.l.b16 %v123
  %v526 = vunpack.c.l.b16 %v124
  %v527 = vunpack.c.l.b16 %v125
  %v528 = vunpack.c.l.b16 %v126
  %v529 = vunpack.c.l.b16 %v127
  %v530 = vunpack.c.l.b16 %v128
  %v531 = vunpack.c.l.b16 %v129
  %v532 = vunpack.c.l.b16 %v130
  %v533 = vunpack.c.l.b16 %v131
  %v534 = vunpack.c.l.b16 %v132
  %v535 = vunpack.c.l.b16 %v133
  %v536 = vunpack.c.l.b16 %v134
  %v537 = vunpack.c.l.b16 %v135
  %v538 = vunpack.c.l.b16 %v136
  %v539 = vunpack.c.l.b16 %v137
  %v540 = vunpack.c.l.b16 %v138
  %v541 = vunpack.c.l.b16 %v139
  %v542 = vunpack.c.l.b16 %v140
  %v543 = vunpack.c.l.b16 %v141
  %v544 = vunpack.c.l.b16 %v142
  %v545 = vunpack.c.l.b16 %v143
  %v546 = vunpack.c.l.b16 %v144
  %v547 = vunpack.c.l.b16 %v145
  %v548 = vunpack.c.l.b16 %v146
  %v549 = vunpack.c.l.b16 %v147
  %v550 = vunpack.c.l.b16 %v148
  %v551 = vunpack.c.l.b16 %v149
  %v552 = vunpack.c.l.b16 %v150
  %v553 = vunpack.c.l.b16 %v151
  %v554 = vunpack.c.l.b16 %v152
  %v555 = vunpack.c.l.b16 %v153
  %v556 = vunpack.c.l.b16 %v154
  %v557 = vunpack.c.l.b16 %v155
  %v558 = vunpack.c.l.b16 %v156
  %v559 = vunpack.c.l.b16 %v157
  %v560 = vunpack.c.l.b16 %v158
  %v561 = vunpack.c.l.b16 %v159
  %v562 = vunpack.c.l.b16 %v160
  %v563 = vunpack.c.l.b16 %v161
  %v564 = vunpack.c.l.b16 %v162
  %v565 = vunpack.c.l.b16 %v163
  %v566 = vunpack.c.l.b16 %v164
  %v567 = vunpack.c.l.b16 %v165
  %v568 = vunpack.c.l.b16 %v166
  %v569 = vunpack.c.l.b16 %v167
  %v570 = vunpack.c.l.b16 %v168
  %v571 = vunpack.c.l.b16 %v169
  %v572 = vunpack.c.l.b16 %v170
  %v573 = vunpack.c.l.b16 %v171
  %v574 = vunpack.c.l.b16 %v172
  %v575 = vunpack.c.l.b16 %v173
  %v576 = vunpack.c.l.b16 %v174
  %v577 = vunpack.c.l.b16 %v175
  %v578 = vunpack.c.l.b16 %v176
  %v579 = vunpack.c.l.b16 %v177
  %v580 = vunpack.c.l.b16 %v178
  %v581 = vunpack.c.l.b16 %v179
  %v582 = vunpack.c.l.b16 %v180
  %v583 = vunpack.c.l.b16 %v181
  %v584 = vunpack.c.l.b16 %v182
  %v585 = vunpack.c.l.b16 %v183
  %v586 = vunpack.c.l.b16 %v184
  %v587 = vunpack.c.l.b16 %v185
  %v588 = vunpack.c.l.b16 %v186
  %v589 = vunpack.c.l.b16 %v187
  %v590 = vunpack.c.l.b16 %v188
  %v591 = vunpack.c.l.b16 %v189
  %v592 = vunpack.c.l.b16 %v190
  %v593 = vunpack.c.l.b16 %v191
  %v594 = vunpack.c.l.b16 %v192
  %v595 = vunpack.c.l.b16 %v193
  %v596 = vunpack.c.l.b16 %v194
  %v597 = vunpack.c.l.b16 %v195
  %v598 = vunpack.c.l.b16 %v196
  %v599 = vunpack.c.l.b16 %v197
  %v600 = vunpack.c.l.b16 %v198
  %v601 = vunpack.c.l.b16 %v199
  %v602 = vunpack.c.l.b16 %v200
  %v603 = vunpack.c.l.b16 %v201
  %v604 = vunpack.c.l.b16 %v202
  %v605 = vunpack.c.l.b16 %v203
  %v606 = vunpack.c.l.b16 %v204
  %v607 = vunpack.c.l.b16 %v205
  %v608 = vunpack.c.l.b16 %v206
  %v609 = vunpack.c.l.b16 %v207
  %v610 = vunpack.c.l.b16 %v208
  %v611 = vunpack.c.l.b16 %v209
  %v612 = vunpack.c.l.b16 %v210
  %v613 = vunpack.c.l.b16 %v211
  %v614 = vunpack.c.l.b16 %v212
  %v615 = vunpack.c.l.b16 %v213
  %v616 = vunpack.c.l.b16 %v214
  %v617 = vunpack.c.l.b16 %v215
  %v618 = vunpack.c.l.b16 %v216
  %v619 = vunpack.c.l.b16 %v217
  %v620 = vpack.c.b16 %v421, %v420
  %v621 = vpack.c.b16 %v423, %v422
  %v622 = vpack.c.b16 %v425, %v424
  %v623 = vpack.c.b16 %v427, %v426
  %v624 = vpack.c.b16 %v429, %v428
  %v625 = vpack.c.b16 %v431, %v430
  %v626 = vpack.c.b16 %v433, %v432
  %v627 = vpack.c.b16 %v435, %v434
  %v628 = vpack.c.b16 %v437, %v436
  %v629 = vpack.c.b16 %v439, %v438
  %v630 = vpack.c.b16 %v441, %v440
  %v631 = vpack.c.b16 %v443, %v442
  %v632 = vpack.c.b16 %v445, %v444
  %v633 = vpack.c.b16 %v447, %v446
  %v634 = vpack.c.b16 %v449, %v448
  %v635 = vpack.c.b16 %v451, %v450
  %v636 = vpack.c.b16 %v453, %v452
  %v637 = vpack.c.b16 %v455, %v454
  %v638 = vpack.c.b16 %v457, %v456
  %v639 = vpack.c.b16 %v459, %v458
  %v640 = vpack.c.b16 %v461, %v460
  %v641 = vpack.c.b16 %v463, %v462
  %v642 = vpack.c.b16 %v465, %v464
  %v643 = vpack.c.b16 %v467, %v466
  %v644 = vpack.c.b16 %v469, %v468
  %v645 = vpack.c.b16 %v471, %v470
  %v646 = vpack.c.b16 %v473, %v472
  %v647 = vpack.c.b16 %v475, %v474
  %v648 = vpack.c.b16 %v477, %v476
  %v649 = vpack.c.b16 %v479, %v478
  %v650 = vpack.c.b16 %v481, %v480
  %v651 = vpack.c.b16 %v483, %v482
  %v652 = vpack.c.b16 %v485, %v484
  %v653 = vpack.c.b16 %v487, %v486
  %v654 = vpack.c.b16 %v489, %v488
  %v655 = vpack.c.b16 %v491, %v490
  %v656 = vpack.c.b16 %v493, %v492
  %v657 = vpack.c.b16 %v495, %v494
  %v658 = vpack.c.b16 %v497, %v496
  %v659 = vpack.c.b16 %v499, %v498
  %v660 = vpack.c.b16 %v501, %v500
  %v661 = vpack.c.b16 %v503, %v502
  %v662 = vpack.c.b16 %v505, %v504
  %v663 = vpack.c.b16 %v507, %v506
  %v664 = vpack.c.b16 %v509, %v508
  %v665 = vpack.c.b16 %v511, %v510
  %v666 = vpack.c.b16 %v513, %v512
  %v667 = vpack.c.b16 %v515, %v514
  %v668 = vpack.c.b16 %v517, %v516
  %v669 = vpack.c.b16 %v519, %v518
  %v670 = vpack.c.b16 %v521, %v520
  %v671 = vpack.c.b16 %v523, %v522
  %v672 = vpack.c.b16 %v525, %v524
  %v673 = vpack.c.b16 %v527, %v526
  %v674 = vpack.c.b16 %v529, %v528
  %v675 = vpack.c.b16 %v531, %v530
  %v676 = vpack.c.b16 %v533, %v532
  %v677 = vpack.c.b16 %v535, %v534
  %v678 = vpack.c.b16 %v537, %v536
  %v679 = vpack.c.b16 %v539, %v538
  %v680 = vpack.c.b16 %v541, %v540
  %v681 = vpack.c.b16 %v543, %v542
  %v682 = vpack.c.b16 %v545, %v544
  %v683 = vpack.c.b16 %v547, %v546
  %v684 = vpack.c.b16 %v549, %v548
  %v685 = vpack.c.b16 %v551, %v550
  %v686 = vpack.c.b16 %v553, %v552
  %v687 = vpack.c.b16 %v555, %v554
  %v688 = vpack.c.b16 %v557, %v556
  %v689 = vpack.c.b16 %v559, %v558
  %v690 = vpack.c.b16 %v561, %v560
  %v691 = vpack.c.b16 %v563, %v562
  %v692 = vpack.c.b16 %v565, %v564
  %v693 = vpack.c.b16 %v567, %v566
  %v694 = vpack.c.b16 %v569, %v568
  %v695 = vpack.c.b16 %v571, %v570
  %v696 = vpack.c.b16 %v573, %v572
  %v697 = vpack.c.b16 %v575, %v574
  %v698 = vpack.c.b16 %v577, %v576
  %v699 = vpack.c.b16 %v579, %v578
  %v700 = vpack.c.b16 %v581, %v580
  %v701 = vpack.c.b16 %v583, %v582
  %v702 = vpack.c.b16 %v585, %v584
  %v703 = vpack.c.b16 %v587, %v586
  %v704 = vpack.c.b16 %v589, %v588
  %v705 = vpack.c.b16 %v591, %v590
  %v706 = vpack.c.b16 %v593, %v592
  %v707 = vpack.c.b16 %v595, %v594
  %v708 = vpack.c.b16 %v597, %v596
  %v709 = vpack.c.b16 %v599, %v598
  %v710 = vpack.c.b16 %v601, %v600
  %v711 = vpack.c.b16 %v603, %v602
  %v712 = vpack.c.b16 %v605, %v604
  %v713 = vpack.c.b16 %v607, %v606
  %v714 = vpack.c.b16 %v609, %v608
  %v715 = vpack.c.b16 %v611, %v610
  %v716 = vpack.c.b16 %v613, %v612
  %v717 = vpack.c.b16 %v615, %v614
  %v718 = vpack.c.b16 %v617, %v616
  %v719 = vpack.c.b16 %v619, %v618
  %v722 = vunpack.c.l.b16 %v218
  %v723 = vunpack.c.l.b16 %v219
  %v724 = vpack.c.b16 %v723, %v722
  %vm725 = vcmask 72704
  %v727 = vsel %vm725, %v620, 0
  %v730 = vsel %vm725, %v621, 0
  %v733 = vsel %vm725, %v622, 0
  %v736 = vsel %vm725, %v623, 0
  %v739 = vsel %vm725, %v624, 0
  %v742 = vsel %vm725, %v625, 0
  %v745 = vsel %vm725, %v626, 0
  %v748 = vsel %vm725, %v627, 0
  %v751 = vsel %vm725, %v628, 0
  %v754 = vsel %vm725, %v629, 0
  %v757 = vsel %vm725, %v630, 0
  %v760 = vsel %vm725, %v631, 0
  %v763 = vsel %vm725, %v632, 0
  %v766 = vsel %vm725, %v633, 0
  %v769 = vsel %vm725, %v634, 0
  %v772 = vsel %vm725, %v635, 0
  %v775 = vsel %vm725, %v636, 0
  %v778 = vsel %vm725, %v637, 0
  %v781 = vsel %vm725, %v638, 0
  %v784 = vsel %vm725, %v639, 0
  %v787 = vsel %vm725, %v640, 0
  %v790 = vsel %vm725, %v641, 0
  %v793 = vsel %vm725, %v642, 0
  %v796 = vsel %vm725, %v643, 0
  %v799 = vsel %vm725, %v644, 0
  %v802 = vsel %vm725, %v645, 0
  %v805 = vsel %vm725, %v646, 0
  %v808 = vsel %vm725, %v647, 0
  %v811 = vsel %vm725, %v648, 0
  %v814 = vsel %vm725, %v649, 0
  %v817 = vsel %vm725, %v650, 0
  %v820 = vsel %vm725, %v651, 0
  %v823 = vsel %vm725, %v652, 0
  %v826 = vsel %vm725, %v653, 0
  %v829 = vsel %vm725, %v654, 0
  %v832 = vsel %vm725, %v655, 0
  %v835 = vsel %vm725, %v656, 0
  %v838 = vsel %vm725, %v657, 0
  %v841 = vsel %vm725, %v658, 0
  %v844 = vsel %vm725, %v659, 0
  %v847 = vsel %vm725, %v660, 0
  %v850 = vsel %vm725, %v661, 0
  %v853 = vsel %vm725, %v662, 0
  %v856 = vsel %vm725, %v663, 0
  %v859 = vsel %vm725, %v664, 0
  %v862 = vsel %vm725, %v665, 0
  %v865 = vsel %vm725, %v666, 0
  %v868 = vsel %vm725, %v667, 0
  %v871 = vsel %vm725, %v668, 0
  %v874 = vsel %vm725, %v669, 0
  %v877 = vsel %vm725, %v670, 0
  %v880 = vsel %vm725, %v671, 0
  %v883 = vsel %vm725, %v672, 0
  %v886 = vsel %vm725, %v673, 0
  %v889 = vsel %vm725, %v674, 0
  %v892 = vsel %vm725, %v675, 0
  %v895 = vsel %vm725, %v676, 0
  %v898 = vsel %vm725, %v677, 0
  %v901 = vsel %vm725, %v678, 0
  %v904 = vsel %vm725, %v679, 0
  %v907 = vsel %vm725, %v680, 0
  %v910 = vsel %vm725, %v681, 0
  %v913 = vsel %vm725, %v682, 0
  %v916 = vsel %vm725, %v683, 0
  %v919 = vsel %vm725, %v684, 0
  %v922 = vsel %vm725, %v685, 0
  %v925 = vsel %vm725, %v686, 0
  %v928 = vsel %vm725, %v687, 0
  %v931 = vsel %vm725, %v688, 0
  %v934 = vsel %vm725, %v689, 0
  %v937 = vsel %vm725, %v690, 0
  %v940 = vsel %vm725, %v691, 0
  %v943 = vsel %vm725, %v692, 0
  %v946 = vsel %vm725, %v693, 0
  %v949 = vsel %vm725, %v694, 0
  %v952 = vsel %vm725, %v695, 0
  %v955 = vsel %vm725, %v696, 0
  %v958 = vsel %vm725, %v697, 0
  %v961 = vsel %vm725, %v698, 0
  %v964 = vsel %vm725, %v699, 0
  %v967 = vsel %vm725, %v700, 0
  %v970 = vsel %vm725, %v701, 0
  %v973 = vsel %vm725, %v702, 0
  %v976 = vsel %vm725, %v703, 0
  %v979 = vsel %vm725, %v704, 0
  %v982 = vsel %vm725, %v705, 0
  %v985 = vsel %vm725, %v706, 0
  %v988 = vsel %vm725, %v707, 0
  %v991 = vsel %vm725, %v708, 0
  %v994 = vsel %vm725, %v709, 0
  %v997 = vsel %vm725, %v710, 0
  %v1000 = vsel %vm725, %v711, 0
  %v1003 = vsel %vm725, %v712, 0
  %v1006 = vsel %vm725, %v713, 0
  %v1009 = vsel %vm725, %v714, 0
  %v1012 = vsel %vm725, %v715, 0
  %v1015 = vsel %vm725, %v716, 0
  %v1018 = vsel %vm725, %v717, 0
  %v1021 = vsel %vm725, %v718, 0
  %v1024 = vsel %vm725, %v719, 0
  %vm1026 = vcmask 1043456
  %vm1027 = vcmask 1044480
  %v1028 = vsel %vm1026, 4294967295, 65535
  %v1029 = vsel %vm1027, %v1028, 0
  %v1031 = vand.u32 %v724, %v1029
  %1033 = vmatprep.subr.bf16.mxu0 0
  %1034 = vmatpush1.bf16.msra.mxu0 0
  %1035 = vmatprep.subr.bf16.mxu0 0
  %1036 = vmatpush1.bf16.msra.mxu0 0
  %1037 = vmatprep.subr.bf16.mxu0 0
  %1038 = vmatpush1.bf16.msra.mxu0 0
  %1039 = vmatprep.subr.bf16.mxu0 0
  %1040 = vmatpush1.bf16.msra.mxu0 0
  %1041 = vmatprep.subr.bf16.mxu0 0
  %1042 = vmatpush1.bf16.msra.mxu0 0
  %1043 = vmatprep.subr.bf16.mxu0 0
  %1044 = vmatpush1.bf16.msra.mxu0 0
  %1045 = vmatprep.subr.bf16.mxu0 0
  %1046 = vmatpush1.bf16.msra.mxu0 0
  %1047 = vmatprep.subr.bf16.mxu0 0
  %1048 = vmatpush1.bf16.msra.mxu0 %v1031
  %1049 = vmatprep.subr.bf16.mxu0 0
  %1050 = vmatpush2.bf16.msra.mxu0 0
  %1051 = vmatprep.subr.bf16.mxu0 0
  %1052 = vmatpush2.bf16.msra.mxu0 0
  %1053 = vmatprep.subr.bf16.mxu0 0
  %1054 = vmatpush2.bf16.msra.mxu0 0
  %1055 = vmatprep.subr.bf16.mxu0 0
  %1056 = vmatpush2.bf16.msra.mxu0 0
  %1057 = vmatprep.subr.bf16.mxu0 0
  %1058 = vmatpush2.bf16.msra.mxu0 0
  %1059 = vmatprep.subr.bf16.mxu0 0
  %1060 = vmatpush2.bf16.msra.mxu0 0
  %1061 = vmatprep.subr.bf16.mxu0 0
  %1062 = vmatpush2.bf16.msra.mxu0 0
  %1063 = vmatprep.subr.bf16.mxu0 0
  %1064 = vmatpush2.bf16.msra.mxu0 0
  %1065 = vmatprep.mubr.bf16.mxu0 0
  %1066 = vmatmul.mubr.bf16.gmra.mxu0 %v727
  %v1067 = vpop.f32.mrf.mxu0
  %v1068 = vadd.f32 0.0, %v1067
  %v1069 = vpop.f32.mrf.mxu0
  %v1070 = vpop.f32.mrf.mxu0
  %v1071 = vadd.f32 0.0, %v1070
  %v1072 = vpop.f32.mrf.mxu0
  %1073 = vmatprep.mubr.bf16.mxu0 0
  %1074 = vmatmul.mubr.bf16.gmra.mxu0 %v730
  %v1075 = vpop.f32.mrf.mxu0
  %v1076 = vadd.f32 0.0, %v1075
  %v1077 = vpop.f32.mrf.mxu0
  %v1078 = vpop.f32.mrf.mxu0
  %v1079 = vadd.f32 0.0, %v1078
  %v1080 = vpop.f32.mrf.mxu0
  %1081 = vmatprep.mubr.bf16.mxu0 0
  %1082 = vmatmul.mubr.bf16.gmra.mxu0 %v733
  %v1083 = vpop.f32.mrf.mxu0
  %v1084 = vadd.f32 0.0, %v1083
  %v1085 = vpop.f32.mrf.mxu0
  %v1086 = vpop.f32.mrf.mxu0
  %v1087 = vadd.f32 0.0, %v1086
  %v1088 = vpop.f32.mrf.mxu0
  %1089 = vmatprep.mubr.bf16.mxu0 0
  %1090 = vmatmul.mubr.bf16.gmra.mxu0 %v736
  %v1091 = vpop.f32.mrf.mxu0
  %v1092 = vadd.f32 0.0, %v1091
  %v1093 = vpop.f32.mrf.mxu0
  %v1094 = vpop.f32.mrf.mxu0
  %v1095 = vadd.f32 0.0, %v1094
  %v1096 = vpop.f32.mrf.mxu0
  %1097 = vmatprep.mubr.bf16.mxu0 0
  %1098 = vmatmul.mubr.bf16.gmra.mxu0 %v739
  %v1099 = vpop.f32.mrf.mxu0
  %v1100 = vadd.f32 0.0, %v1099
  %v1101 = vpop.f32.mrf.mxu0
  %v1102 = vpop.f32.mrf.mxu0
  %v1103 = vadd.f32 0.0, %v1102
  %v1104 = vpop.f32.mrf.mxu0
  %1105 = vmatprep.mubr.bf16.mxu0 0
  %1106 = vmatmul.mubr.bf16.gmra.mxu0 %v742
  %v1107 = vpop.f32.mrf.mxu0
  %v1108 = vadd.f32 0.0, %v1107
  %v1109 = vpop.f32.mrf.mxu0
  %v1110 = vpop.f32.mrf.mxu0
  %v1111 = vadd.f32 0.0, %v1110
  %v1112 = vpop.f32.mrf.mxu0
  %1113 = vmatprep.mubr.bf16.mxu0 0
  %1114 = vmatmul.mubr.bf16.gmra.mxu0 %v745
  %v1115 = vpop.f32.mrf.mxu0
  %v1116 = vadd.f32 0.0, %v1115
  %v1117 = vpop.f32.mrf.mxu0
  %v1118 = vpop.f32.mrf.mxu0
  %v1119 = vadd.f32 0.0, %v1118
  %v1120 = vpop.f32.mrf.mxu0
  %1121 = vmatprep.mubr.bf16.mxu0 0
  %1122 = vmatmul.mubr.bf16.gmra.mxu0 %v748
  %v1123 = vpop.f32.mrf.mxu0
  %v1124 = vadd.f32 0.0, %v1123
  %v1125 = vpop.f32.mrf.mxu0
  %v1126 = vpop.f32.mrf.mxu0
  %v1127 = vadd.f32 0.0, %v1126
  %v1128 = vpop.f32.mrf.mxu0
  %1129 = vmatprep.mubr.bf16.mxu0 0
  %1130 = vmatmul.mubr.bf16.gmra.mxu0 %v751
  %v1131 = vpop.f32.mrf.mxu0
  %v1132 = vadd.f32 0.0, %v1131
  %v1133 = vpop.f32.mrf.mxu0
  %v1134 = vpop.f32.mrf.mxu0
  %v1135 = vadd.f32 0.0, %v1134
  %v1136 = vpop.f32.mrf.mxu0
  %1137 = vmatprep.mubr.bf16.mxu0 0
  %1138 = vmatmul.mubr.bf16.gmra.mxu0 %v754
  %v1139 = vpop.f32.mrf.mxu0
  %v1140 = vadd.f32 0.0, %v1139
  %v1141 = vpop.f32.mrf.mxu0
  %v1142 = vpop.f32.mrf.mxu0
  %v1143 = vadd.f32 0.0, %v1142
  %v1144 = vpop.f32.mrf.mxu0
  %1145 = vmatprep.mubr.bf16.mxu0 0
  %1146 = vmatmul.mubr.bf16.gmra.mxu0 %v757
  %v1147 = vpop.f32.mrf.mxu0
  %v1148 = vadd.f32 0.0, %v1147
  %v1149 = vpop.f32.mrf.mxu0
  %v1150 = vpop.f32.mrf.mxu0
  %v1151 = vadd.f32 0.0, %v1150
  %v1152 = vpop.f32.mrf.mxu0
  %1153 = vmatprep.mubr.bf16.mxu0 0
  %1154 = vmatmul.mubr.bf16.gmra.mxu0 %v760
  %v1155 = vpop.f32.mrf.mxu0
  %v1156 = vadd.f32 0.0, %v1155
  %v1157 = vpop.f32.mrf.mxu0
  %v1158 = vpop.f32.mrf.mxu0
  %v1159 = vadd.f32 0.0, %v1158
  %v1160 = vpop.f32.mrf.mxu0
  %1161 = vmatprep.mubr.bf16.mxu0 0
  %1162 = vmatmul.mubr.bf16.gmra.mxu0 %v763
  %v1163 = vpop.f32.mrf.mxu0
  %v1164 = vadd.f32 0.0, %v1163
  %v1165 = vpop.f32.mrf.mxu0
  %v1166 = vpop.f32.mrf.mxu0
  %v1167 = vadd.f32 0.0, %v1166
  %v1168 = vpop.f32.mrf.mxu0
  %1169 = vmatprep.mubr.bf16.mxu0 0
  %1170 = vmatmul.mubr.bf16.gmra.mxu0 %v766
  %v1171 = vpop.f32.mrf.mxu0
  %v1172 = vadd.f32 0.0, %v1171
  %v1173 = vpop.f32.mrf.mxu0
  %v1174 = vpop.f32.mrf.mxu0
  %v1175 = vadd.f32 0.0, %v1174
  %v1176 = vpop.f32.mrf.mxu0
  %1177 = vmatprep.mubr.bf16.mxu0 0
  %1178 = vmatmul.mubr.bf16.gmra.mxu0 %v769
  %v1179 = vpop.f32.mrf.mxu0
  %v1180 = vadd.f32 0.0, %v1179
  %v1181 = vpop.f32.mrf.mxu0
  %v1182 = vpop.f32.mrf.mxu0
  %v1183 = vadd.f32 0.0, %v1182
  %v1184 = vpop.f32.mrf.mxu0
  %1185 = vmatprep.mubr.bf16.mxu0 0
  %1186 = vmatmul.mubr.bf16.gmra.mxu0 %v772
  %v1187 = vpop.f32.mrf.mxu0
  %v1188 = vadd.f32 0.0, %v1187
  %v1189 = vpop.f32.mrf.mxu0
  %v1190 = vpop.f32.mrf.mxu0
  %v1191 = vadd.f32 0.0, %v1190
  %v1192 = vpop.f32.mrf.mxu0
  %1193 = vmatprep.mubr.bf16.mxu0 0
  %1194 = vmatmul.mubr.bf16.gmra.mxu0 %v775
  %v1195 = vpop.f32.mrf.mxu0
  %v1196 = vadd.f32 0.0, %v1195
  %v1197 = vpop.f32.mrf.mxu0
  %v1198 = vpop.f32.mrf.mxu0
  %v1199 = vadd.f32 0.0, %v1198
  %v1200 = vpop.f32.mrf.mxu0
  %1201 = vmatprep.mubr.bf16.mxu0 0
  %1202 = vmatmul.mubr.bf16.gmra.mxu0 %v778
  %v1203 = vpop.f32.mrf.mxu0
  %v1204 = vadd.f32 0.0, %v1203
  %v1205 = vpop.f32.mrf.mxu0
  %v1206 = vpop.f32.mrf.mxu0
  %v1207 = vadd.f32 0.0, %v1206
  %v1208 = vpop.f32.mrf.mxu0
  %1209 = vmatprep.mubr.bf16.mxu0 0
  %1210 = vmatmul.mubr.bf16.gmra.mxu0 %v781
  %v1211 = vpop.f32.mrf.mxu0
  %v1212 = vadd.f32 0.0, %v1211
  %v1213 = vpop.f32.mrf.mxu0
  %v1214 = vpop.f32.mrf.mxu0
  %v1215 = vadd.f32 0.0, %v1214
  %v1216 = vpop.f32.mrf.mxu0
  %1217 = vmatprep.mubr.bf16.mxu0 0
  %1218 = vmatmul.mubr.bf16.gmra.mxu0 %v784
  %v1219 = vpop.f32.mrf.mxu0
  %v1220 = vadd.f32 0.0, %v1219
  %v1221 = vpop.f32.mrf.mxu0
  %v1222 = vpop.f32.mrf.mxu0
  %v1223 = vadd.f32 0.0, %v1222
  %v1224 = vpop.f32.mrf.mxu0
  %1225 = vmatprep.mubr.bf16.mxu0 0
  %1226 = vmatmul.mubr.bf16.gmra.mxu0 %v787
  %v1227 = vpop.f32.mrf.mxu0
  %v1228 = vadd.f32 0.0, %v1227
  %v1229 = vpop.f32.mrf.mxu0
  %v1230 = vpop.f32.mrf.mxu0
  %v1231 = vadd.f32 0.0, %v1230
  %v1232 = vpop.f32.mrf.mxu0
  %1233 = vmatprep.mubr.bf16.mxu0 0
  %1234 = vmatmul.mubr.bf16.gmra.mxu0 %v790
  %v1235 = vpop.f32.mrf.mxu0
  %v1236 = vadd.f32 0.0, %v1235
  %v1237 = vpop.f32.mrf.mxu0
  %v1238 = vpop.f32.mrf.mxu0
  %v1239 = vadd.f32 0.0, %v1238
  %v1240 = vpop.f32.mrf.mxu0
  %1241 = vmatprep.mubr.bf16.mxu0 0
  %1242 = vmatmul.mubr.bf16.gmra.mxu0 %v793
  %v1243 = vpop.f32.mrf.mxu0
  %v1244 = vadd.f32 0.0, %v1243
  %v1245 = vpop.f32.mrf.mxu0
  %v1246 = vpop.f32.mrf.mxu0
  %v1247 = vadd.f32 0.0, %v1246
  %v1248 = vpop.f32.mrf.mxu0
  %1249 = vmatprep.mubr.bf16.mxu0 0
  %1250 = vmatmul.mubr.bf16.gmra.mxu0 %v796
  %v1251 = vpop.f32.mrf.mxu0
  %v1252 = vadd.f32 0.0, %v1251
  %v1253 = vpop.f32.mrf.mxu0
  %v1254 = vpop.f32.mrf.mxu0
  %v1255 = vadd.f32 0.0, %v1254
  %v1256 = vpop.f32.mrf.mxu0
  %1257 = vmatprep.mubr.bf16.mxu0 0
  %1258 = vmatmul.mubr.bf16.gmra.mxu0 %v799
  %v1259 = vpop.f32.mrf.mxu0
  %v1260 = vadd.f32 0.0, %v1259
  %v1261 = vpop.f32.mrf.mxu0
  %v1262 = vpop.f32.mrf.mxu0
  %v1263 = vadd.f32 0.0, %v1262
  %v1264 = vpop.f32.mrf.mxu0
  %1265 = vmatprep.mubr.bf16.mxu0 0
  %1266 = vmatmul.mubr.bf16.gmra.mxu0 %v802
  %v1267 = vpop.f32.mrf.mxu0
  %v1268 = vadd.f32 0.0, %v1267
  %v1269 = vpop.f32.mrf.mxu0
  %v1270 = vpop.f32.mrf.mxu0
  %v1271 = vadd.f32 0.0, %v1270
  %v1272 = vpop.f32.mrf.mxu0
  %1273 = vmatprep.mubr.bf16.mxu0 0
  %1274 = vmatmul.mubr.bf16.gmra.mxu0 %v805
  %v1275 = vpop.f32.mrf.mxu0
  %v1276 = vadd.f32 0.0, %v1275
  %v1277 = vpop.f32.mrf.mxu0
  %v1278 = vpop.f32.mrf.mxu0
  %v1279 = vadd.f32 0.0, %v1278
  %v1280 = vpop.f32.mrf.mxu0
  %1281 = vmatprep.mubr.bf16.mxu0 0
  %1282 = vmatmul.mubr.bf16.gmra.mxu0 %v808
  %v1283 = vpop.f32.mrf.mxu0
  %v1284 = vadd.f32 0.0, %v1283
  %v1285 = vpop.f32.mrf.mxu0
  %v1286 = vpop.f32.mrf.mxu0
  %v1287 = vadd.f32 0.0, %v1286
  %v1288 = vpop.f32.mrf.mxu0
  %1289 = vmatprep.mubr.bf16.mxu0 0
  %1290 = vmatmul.mubr.bf16.gmra.mxu0 %v811
  %v1291 = vpop.f32.mrf.mxu0
  %v1292 = vadd.f32 0.0, %v1291
  %v1293 = vpop.f32.mrf.mxu0
  %v1294 = vpop.f32.mrf.mxu0
  %v1295 = vadd.f32 0.0, %v1294
  %v1296 = vpop.f32.mrf.mxu0
  %1297 = vmatprep.mubr.bf16.mxu0 0
  %1298 = vmatmul.mubr.bf16.gmra.mxu0 %v814
  %v1299 = vpop.f32.mrf.mxu0
  %v1300 = vadd.f32 0.0, %v1299
  %v1301 = vpop.f32.mrf.mxu0
  %v1302 = vpop.f32.mrf.mxu0
  %v1303 = vadd.f32 0.0, %v1302
  %v1304 = vpop.f32.mrf.mxu0
  %1305 = vmatprep.mubr.bf16.mxu0 0
  %1306 = vmatmul.mubr.bf16.gmra.mxu0 %v817
  %v1307 = vpop.f32.mrf.mxu0
  %v1308 = vadd.f32 0.0, %v1307
  %v1309 = vpop.f32.mrf.mxu0
  %v1310 = vpop.f32.mrf.mxu0
  %v1311 = vadd.f32 0.0, %v1310
  %v1312 = vpop.f32.mrf.mxu0
  %1313 = vmatprep.mubr.bf16.mxu0 0
  %1314 = vmatmul.mubr.bf16.gmra.mxu0 %v820
  %v1315 = vpop.f32.mrf.mxu0
  %v1316 = vadd.f32 0.0, %v1315
  %v1317 = vpop.f32.mrf.mxu0
  %v1318 = vpop.f32.mrf.mxu0
  %v1319 = vadd.f32 0.0, %v1318
  %v1320 = vpop.f32.mrf.mxu0
  %1321 = vmatprep.mubr.bf16.mxu0 0
  %1322 = vmatmul.mubr.bf16.gmra.mxu0 %v823
  %v1323 = vpop.f32.mrf.mxu0
  %v1324 = vadd.f32 0.0, %v1323
  %v1325 = vpop.f32.mrf.mxu0
  %v1326 = vpop.f32.mrf.mxu0
  %v1327 = vadd.f32 0.0, %v1326
  %v1328 = vpop.f32.mrf.mxu0
  %1329 = vmatprep.mubr.bf16.mxu0 0
  %1330 = vmatmul.mubr.bf16.gmra.mxu0 %v826
  %v1331 = vpop.f32.mrf.mxu0
  %v1332 = vadd.f32 0.0, %v1331
  %v1333 = vpop.f32.mrf.mxu0
  %v1334 = vpop.f32.mrf.mxu0
  %v1335 = vadd.f32 0.0, %v1334
  %v1336 = vpop.f32.mrf.mxu0
  %1337 = vmatprep.mubr.bf16.mxu0 0
  %1338 = vmatmul.mubr.bf16.gmra.mxu0 %v829
  %v1339 = vpop.f32.mrf.mxu0
  %v1340 = vadd.f32 0.0, %v1339
  %v1341 = vpop.f32.mrf.mxu0
  %v1342 = vpop.f32.mrf.mxu0
  %v1343 = vadd.f32 0.0, %v1342
  %v1344 = vpop.f32.mrf.mxu0
  %1345 = vmatprep.mubr.bf16.mxu0 0
  %1346 = vmatmul.mubr.bf16.gmra.mxu0 %v832
  %v1347 = vpop.f32.mrf.mxu0
  %v1348 = vadd.f32 0.0, %v1347
  %v1349 = vpop.f32.mrf.mxu0
  %v1350 = vpop.f32.mrf.mxu0
  %v1351 = vadd.f32 0.0, %v1350
  %v1352 = vpop.f32.mrf.mxu0
  %1353 = vmatprep.mubr.bf16.mxu0 0
  %1354 = vmatmul.mubr.bf16.gmra.mxu0 %v835
  %v1355 = vpop.f32.mrf.mxu0
  %v1356 = vadd.f32 0.0, %v1355
  %v1357 = vpop.f32.mrf.mxu0
  %v1358 = vpop.f32.mrf.mxu0
  %v1359 = vadd.f32 0.0, %v1358
  %v1360 = vpop.f32.mrf.mxu0
  %1361 = vmatprep.mubr.bf16.mxu0 0
  %1362 = vmatmul.mubr.bf16.gmra.mxu0 %v838
  %v1363 = vpop.f32.mrf.mxu0
  %v1364 = vadd.f32 0.0, %v1363
  %v1365 = vpop.f32.mrf.mxu0
  %v1366 = vpop.f32.mrf.mxu0
  %v1367 = vadd.f32 0.0, %v1366
  %v1368 = vpop.f32.mrf.mxu0
  %1369 = vmatprep.mubr.bf16.mxu0 0
  %1370 = vmatmul.mubr.bf16.gmra.mxu0 %v841
  %v1371 = vpop.f32.mrf.mxu0
  %v1372 = vadd.f32 0.0, %v1371
  %v1373 = vpop.f32.mrf.mxu0
  %v1374 = vpop.f32.mrf.mxu0
  %v1375 = vadd.f32 0.0, %v1374
  %v1376 = vpop.f32.mrf.mxu0
  %1377 = vmatprep.mubr.bf16.mxu0 0
  %1378 = vmatmul.mubr.bf16.gmra.mxu0 %v844
  %v1379 = vpop.f32.mrf.mxu0
  %v1380 = vadd.f32 0.0, %v1379
  %v1381 = vpop.f32.mrf.mxu0
  %v1382 = vpop.f32.mrf.mxu0
  %v1383 = vadd.f32 0.0, %v1382
  %v1384 = vpop.f32.mrf.mxu0
  %1385 = vmatprep.mubr.bf16.mxu0 0
  %1386 = vmatmul.mubr.bf16.gmra.mxu0 %v847
  %v1387 = vpop.f32.mrf.mxu0
  %v1388 = vadd.f32 0.0, %v1387
  %v1389 = vpop.f32.mrf.mxu0
  %v1390 = vpop.f32.mrf.mxu0
  %v1391 = vadd.f32 0.0, %v1390
  %v1392 = vpop.f32.mrf.mxu0
  %1393 = vmatprep.mubr.bf16.mxu0 0
  %1394 = vmatmul.mubr.bf16.gmra.mxu0 %v850
  %v1395 = vpop.f32.mrf.mxu0
  %v1396 = vadd.f32 0.0, %v1395
  %v1397 = vpop.f32.mrf.mxu0
  %v1398 = vpop.f32.mrf.mxu0
  %v1399 = vadd.f32 0.0, %v1398
  %v1400 = vpop.f32.mrf.mxu0
  %1401 = vmatprep.mubr.bf16.mxu0 0
  %1402 = vmatmul.mubr.bf16.gmra.mxu0 %v853
  %v1403 = vpop.f32.mrf.mxu0
  %v1404 = vadd.f32 0.0, %v1403
  %v1405 = vpop.f32.mrf.mxu0
  %v1406 = vpop.f32.mrf.mxu0
  %v1407 = vadd.f32 0.0, %v1406
  %v1408 = vpop.f32.mrf.mxu0
  %1409 = vmatprep.mubr.bf16.mxu0 0
  %1410 = vmatmul.mubr.bf16.gmra.mxu0 %v856
  %v1411 = vpop.f32.mrf.mxu0
  %v1412 = vadd.f32 0.0, %v1411
  %v1413 = vpop.f32.mrf.mxu0
  %v1414 = vpop.f32.mrf.mxu0
  %v1415 = vadd.f32 0.0, %v1414
  %v1416 = vpop.f32.mrf.mxu0
  %1417 = vmatprep.mubr.bf16.mxu0 0
  %1418 = vmatmul.mubr.bf16.gmra.mxu0 %v859
  %v1419 = vpop.f32.mrf.mxu0
  %v1420 = vadd.f32 0.0, %v1419
  %v1421 = vpop.f32.mrf.mxu0
  %v1422 = vpop.f32.mrf.mxu0
  %v1423 = vadd.f32 0.0, %v1422
  %v1424 = vpop.f32.mrf.mxu0
  %1425 = vmatprep.mubr.bf16.mxu0 0
  %1426 = vmatmul.mubr.bf16.gmra.mxu0 %v862
  %v1427 = vpop.f32.mrf.mxu0
  %v1428 = vadd.f32 0.0, %v1427
  %v1429 = vpop.f32.mrf.mxu0
  %v1430 = vpop.f32.mrf.mxu0
  %v1431 = vadd.f32 0.0, %v1430
  %v1432 = vpop.f32.mrf.mxu0
  %1433 = vmatprep.mubr.bf16.mxu0 0
  %1434 = vmatmul.mubr.bf16.gmra.mxu0 %v865
  %v1435 = vpop.f32.mrf.mxu0
  %v1436 = vadd.f32 0.0, %v1435
  %v1437 = vpop.f32.mrf.mxu0
  %v1438 = vpop.f32.mrf.mxu0
  %v1439 = vadd.f32 0.0, %v1438
  %v1440 = vpop.f32.mrf.mxu0
  %1441 = vmatprep.mubr.bf16.mxu0 0
  %1442 = vmatmul.mubr.bf16.gmra.mxu0 %v868
  %v1443 = vpop.f32.mrf.mxu0
  %v1444 = vadd.f32 0.0, %v1443
  %v1445 = vpop.f32.mrf.mxu0
  %v1446 = vpop.f32.mrf.mxu0
  %v1447 = vadd.f32 0.0, %v1446
  %v1448 = vpop.f32.mrf.mxu0
  %1449 = vmatprep.mubr.bf16.mxu0 0
  %1450 = vmatmul.mubr.bf16.gmra.mxu0 %v871
  %v1451 = vpop.f32.mrf.mxu0
  %v1452 = vadd.f32 0.0, %v1451
  %v1453 = vpop.f32.mrf.mxu0
  %v1454 = vpop.f32.mrf.mxu0
  %v1455 = vadd.f32 0.0, %v1454
  %v1456 = vpop.f32.mrf.mxu0
  %1457 = vmatprep.mubr.bf16.mxu0 0
  %1458 = vmatmul.mubr.bf16.gmra.mxu0 %v874
  %v1459 = vpop.f32.mrf.mxu0
  %v1460 = vadd.f32 0.0, %v1459
  %v1461 = vpop.f32.mrf.mxu0
  %v1462 = vpop.f32.mrf.mxu0
  %v1463 = vadd.f32 0.0, %v1462
  %v1464 = vpop.f32.mrf.mxu0
  %1465 = vmatprep.mubr.bf16.mxu0 0
  %1466 = vmatmul.mubr.bf16.gmra.mxu0 %v877
  %v1467 = vpop.f32.mrf.mxu0
  %v1468 = vadd.f32 0.0, %v1467
  %v1469 = vpop.f32.mrf.mxu0
  %v1470 = vpop.f32.mrf.mxu0
  %v1471 = vadd.f32 0.0, %v1470
  %v1472 = vpop.f32.mrf.mxu0
  %1473 = vmatprep.mubr.bf16.mxu0 0
  %1474 = vmatmul.mubr.bf16.gmra.mxu0 %v880
  %v1475 = vpop.f32.mrf.mxu0
  %v1476 = vadd.f32 0.0, %v1475
  %v1477 = vpop.f32.mrf.mxu0
  %v1478 = vpop.f32.mrf.mxu0
  %v1479 = vadd.f32 0.0, %v1478
  %v1480 = vpop.f32.mrf.mxu0
  %1481 = vmatprep.mubr.bf16.mxu0 0
  %1482 = vmatmul.mubr.bf16.gmra.mxu0 %v883
  %v1483 = vpop.f32.mrf.mxu0
  %v1484 = vadd.f32 0.0, %v1483
  %v1485 = vpop.f32.mrf.mxu0
  %v1486 = vpop.f32.mrf.mxu0
  %v1487 = vadd.f32 0.0, %v1486
  %v1488 = vpop.f32.mrf.mxu0
  %1489 = vmatprep.mubr.bf16.mxu0 0
  %1490 = vmatmul.mubr.bf16.gmra.mxu0 %v886
  %v1491 = vpop.f32.mrf.mxu0
  %v1492 = vadd.f32 0.0, %v1491
  %v1493 = vpop.f32.mrf.mxu0
  %v1494 = vpop.f32.mrf.mxu0
  %v1495 = vadd.f32 0.0, %v1494
  %v1496 = vpop.f32.mrf.mxu0
  %1497 = vmatprep.mubr.bf16.mxu0 0
  %1498 = vmatmul.mubr.bf16.gmra.mxu0 %v889
  %v1499 = vpop.f32.mrf.mxu0
  %v1500 = vadd.f32 0.0, %v1499
  %v1501 = vpop.f32.mrf.mxu0
  %v1502 = vpop.f32.mrf.mxu0
  %v1503 = vadd.f32 0.0, %v1502
  %v1504 = vpop.f32.mrf.mxu0
  %1505 = vmatprep.mubr.bf16.mxu0 0
  %1506 = vmatmul.mubr.bf16.gmra.mxu0 %v892
  %v1507 = vpop.f32.mrf.mxu0
  %v1508 = vadd.f32 0.0, %v1507
  %v1509 = vpop.f32.mrf.mxu0
  %v1510 = vpop.f32.mrf.mxu0
  %v1511 = vadd.f32 0.0, %v1510
  %v1512 = vpop.f32.mrf.mxu0
  %1513 = vmatprep.mubr.bf16.mxu0 0
  %1514 = vmatmul.mubr.bf16.gmra.mxu0 %v895
  %v1515 = vpop.f32.mrf.mxu0
  %v1516 = vadd.f32 0.0, %v1515
  %v1517 = vpop.f32.mrf.mxu0
  %v1518 = vpop.f32.mrf.mxu0
  %v1519 = vadd.f32 0.0, %v1518
  %v1520 = vpop.f32.mrf.mxu0
  %1521 = vmatprep.mubr.bf16.mxu0 0
  %1522 = vmatmul.mubr.bf16.gmra.mxu0 %v898
  %v1523 = vpop.f32.mrf.mxu0
  %v1524 = vadd.f32 0.0, %v1523
  %v1525 = vpop.f32.mrf.mxu0
  %v1526 = vpop.f32.mrf.mxu0
  %v1527 = vadd.f32 0.0, %v1526
  %v1528 = vpop.f32.mrf.mxu0
  %1529 = vmatprep.mubr.bf16.mxu0 0
  %1530 = vmatmul.mubr.bf16.gmra.mxu0 %v901
  %v1531 = vpop.f32.mrf.mxu0
  %v1532 = vadd.f32 0.0, %v1531
  %v1533 = vpop.f32.mrf.mxu0
  %v1534 = vpop.f32.mrf.mxu0
  %v1535 = vadd.f32 0.0, %v1534
  %v1536 = vpop.f32.mrf.mxu0
  %1537 = vmatprep.mubr.bf16.mxu0 0
  %1538 = vmatmul.mubr.bf16.gmra.mxu0 %v904
  %v1539 = vpop.f32.mrf.mxu0
  %v1540 = vadd.f32 0.0, %v1539
  %v1541 = vpop.f32.mrf.mxu0
  %v1542 = vpop.f32.mrf.mxu0
  %v1543 = vadd.f32 0.0, %v1542
  %v1544 = vpop.f32.mrf.mxu0
  %1545 = vmatprep.mubr.bf16.mxu0 0
  %1546 = vmatmul.mubr.bf16.gmra.mxu0 %v907
  %v1547 = vpop.f32.mrf.mxu0
  %v1548 = vadd.f32 0.0, %v1547
  %v1549 = vpop.f32.mrf.mxu0
  %v1550 = vpop.f32.mrf.mxu0
  %v1551 = vadd.f32 0.0, %v1550
  %v1552 = vpop.f32.mrf.mxu0
  %1553 = vmatprep.mubr.bf16.mxu0 0
  %1554 = vmatmul.mubr.bf16.gmra.mxu0 %v910
  %v1555 = vpop.f32.mrf.mxu0
  %v1556 = vadd.f32 0.0, %v1555
  %v1557 = vpop.f32.mrf.mxu0
  %v1558 = vpop.f32.mrf.mxu0
  %v1559 = vadd.f32 0.0, %v1558
  %v1560 = vpop.f32.mrf.mxu0
  %1561 = vmatprep.mubr.bf16.mxu0 0
  %1562 = vmatmul.mubr.bf16.gmra.mxu0 %v913
  %v1563 = vpop.f32.mrf.mxu0
  %v1564 = vadd.f32 0.0, %v1563
  %v1565 = vpop.f32.mrf.mxu0
  %v1566 = vpop.f32.mrf.mxu0
  %v1567 = vadd.f32 0.0, %v1566
  %v1568 = vpop.f32.mrf.mxu0
  %1569 = vmatprep.mubr.bf16.mxu0 0
  %1570 = vmatmul.mubr.bf16.gmra.mxu0 %v916
  %v1571 = vpop.f32.mrf.mxu0
  %v1572 = vadd.f32 0.0, %v1571
  %v1573 = vpop.f32.mrf.mxu0
  %v1574 = vpop.f32.mrf.mxu0
  %v1575 = vadd.f32 0.0, %v1574
  %v1576 = vpop.f32.mrf.mxu0
  %1577 = vmatprep.mubr.bf16.mxu0 0
  %1578 = vmatmul.mubr.bf16.gmra.mxu0 %v919
  %v1579 = vpop.f32.mrf.mxu0
  %v1580 = vadd.f32 0.0, %v1579
  %v1581 = vpop.f32.mrf.mxu0
  %v1582 = vpop.f32.mrf.mxu0
  %v1583 = vadd.f32 0.0, %v1582
  %v1584 = vpop.f32.mrf.mxu0
  %1585 = vmatprep.mubr.bf16.mxu0 0
  %1586 = vmatmul.mubr.bf16.gmra.mxu0 %v922
  %v1587 = vpop.f32.mrf.mxu0
  %v1588 = vadd.f32 0.0, %v1587
  %v1589 = vpop.f32.mrf.mxu0
  %v1590 = vpop.f32.mrf.mxu0
  %v1591 = vadd.f32 0.0, %v1590
  %v1592 = vpop.f32.mrf.mxu0
  %1593 = vmatprep.mubr.bf16.mxu0 0
  %1594 = vmatmul.mubr.bf16.gmra.mxu0 %v925
  %v1595 = vpop.f32.mrf.mxu0
  %v1596 = vadd.f32 0.0, %v1595
  %v1597 = vpop.f32.mrf.mxu0
  %v1598 = vpop.f32.mrf.mxu0
  %v1599 = vadd.f32 0.0, %v1598
  %v1600 = vpop.f32.mrf.mxu0
  %1601 = vmatprep.mubr.bf16.mxu0 0
  %1602 = vmatmul.mubr.bf16.gmra.mxu0 %v928
  %v1603 = vpop.f32.mrf.mxu0
  %v1604 = vadd.f32 0.0, %v1603
  %v1605 = vpop.f32.mrf.mxu0
  %v1606 = vpop.f32.mrf.mxu0
  %v1607 = vadd.f32 0.0, %v1606
  %v1608 = vpop.f32.mrf.mxu0
  %1609 = vmatprep.mubr.bf16.mxu0 0
  %1610 = vmatmul.mubr.bf16.gmra.mxu0 %v931
  %v1611 = vpop.f32.mrf.mxu0
  %v1612 = vadd.f32 0.0, %v1611
  %v1613 = vpop.f32.mrf.mxu0
  %v1614 = vpop.f32.mrf.mxu0
  %v1615 = vadd.f32 0.0, %v1614
  %v1616 = vpop.f32.mrf.mxu0
  %1617 = vmatprep.mubr.bf16.mxu0 0
  %1618 = vmatmul.mubr.bf16.gmra.mxu0 %v934
  %v1619 = vpop.f32.mrf.mxu0
  %v1620 = vadd.f32 0.0, %v1619
  %v1621 = vpop.f32.mrf.mxu0
  %v1622 = vpop.f32.mrf.mxu0
  %v1623 = vadd.f32 0.0, %v1622
  %v1624 = vpop.f32.mrf.mxu0
  %1625 = vmatprep.mubr.bf16.mxu0 0
  %1626 = vmatmul.mubr.bf16.gmra.mxu0 %v937
  %v1627 = vpop.f32.mrf.mxu0
  %v1628 = vadd.f32 0.0, %v1627
  %v1629 = vpop.f32.mrf.mxu0
  %v1630 = vpop.f32.mrf.mxu0
  %v1631 = vadd.f32 0.0, %v1630
  %v1632 = vpop.f32.mrf.mxu0
  %1633 = vmatprep.mubr.bf16.mxu0 0
  %1634 = vmatmul.mubr.bf16.gmra.mxu0 %v940
  %v1635 = vpop.f32.mrf.mxu0
  %v1636 = vadd.f32 0.0, %v1635
  %v1637 = vpop.f32.mrf.mxu0
  %v1638 = vpop.f32.mrf.mxu0
  %v1639 = vadd.f32 0.0, %v1638
  %v1640 = vpop.f32.mrf.mxu0
  %1641 = vmatprep.mubr.bf16.mxu0 0
  %1642 = vmatmul.mubr.bf16.gmra.mxu0 %v943
  %v1643 = vpop.f32.mrf.mxu0
  %v1644 = vadd.f32 0.0, %v1643
  %v1645 = vpop.f32.mrf.mxu0
  %v1646 = vpop.f32.mrf.mxu0
  %v1647 = vadd.f32 0.0, %v1646
  %v1648 = vpop.f32.mrf.mxu0
  %1649 = vmatprep.mubr.bf16.mxu0 0
  %1650 = vmatmul.mubr.bf16.gmra.mxu0 %v946
  %v1651 = vpop.f32.mrf.mxu0
  %v1652 = vadd.f32 0.0, %v1651
  %v1653 = vpop.f32.mrf.mxu0
  %v1654 = vpop.f32.mrf.mxu0
  %v1655 = vadd.f32 0.0, %v1654
  %v1656 = vpop.f32.mrf.mxu0
  %1657 = vmatprep.mubr.bf16.mxu0 0
  %1658 = vmatmul.mubr.bf16.gmra.mxu0 %v949
  %v1659 = vpop.f32.mrf.mxu0
  %v1660 = vadd.f32 0.0, %v1659
  %v1661 = vpop.f32.mrf.mxu0
  %v1662 = vpop.f32.mrf.mxu0
  %v1663 = vadd.f32 0.0, %v1662
  %v1664 = vpop.f32.mrf.mxu0
  %1665 = vmatprep.mubr.bf16.mxu0 0
  %1666 = vmatmul.mubr.bf16.gmra.mxu0 %v952
  %v1667 = vpop.f32.mrf.mxu0
  %v1668 = vadd.f32 0.0, %v1667
  %v1669 = vpop.f32.mrf.mxu0
  %v1670 = vpop.f32.mrf.mxu0
  %v1671 = vadd.f32 0.0, %v1670
  %v1672 = vpop.f32.mrf.mxu0
  %1673 = vmatprep.mubr.bf16.mxu0 0
  %1674 = vmatmul.mubr.bf16.gmra.mxu0 %v955
  %v1675 = vpop.f32.mrf.mxu0
  %v1676 = vadd.f32 0.0, %v1675
  %v1677 = vpop.f32.mrf.mxu0
  %v1678 = vpop.f32.mrf.mxu0
  %v1679 = vadd.f32 0.0, %v1678
  %v1680 = vpop.f32.mrf.mxu0
  %1681 = vmatprep.mubr.bf16.mxu0 0
  %1682 = vmatmul.mubr.bf16.gmra.mxu0 %v958
  %v1683 = vpop.f32.mrf.mxu0
  %v1684 = vadd.f32 0.0, %v1683
  %v1685 = vpop.f32.mrf.mxu0
  %v1686 = vpop.f32.mrf.mxu0
  %v1687 = vadd.f32 0.0, %v1686
  %v1688 = vpop.f32.mrf.mxu0
  %1689 = vmatprep.mubr.bf16.mxu0 0
  %1690 = vmatmul.mubr.bf16.gmra.mxu0 %v961
  %v1691 = vpop.f32.mrf.mxu0
  %v1692 = vadd.f32 0.0, %v1691
  %v1693 = vpop.f32.mrf.mxu0
  %v1694 = vpop.f32.mrf.mxu0
  %v1695 = vadd.f32 0.0, %v1694
  %v1696 = vpop.f32.mrf.mxu0
  %1697 = vmatprep.mubr.bf16.mxu0 0
  %1698 = vmatmul.mubr.bf16.gmra.mxu0 %v964
  %v1699 = vpop.f32.mrf.mxu0
  %v1700 = vadd.f32 0.0, %v1699
  %v1701 = vpop.f32.mrf.mxu0
  %v1702 = vpop.f32.mrf.mxu0
  %v1703 = vadd.f32 0.0, %v1702
  %v1704 = vpop.f32.mrf.mxu0
  %1705 = vmatprep.mubr.bf16.mxu0 0
  %1706 = vmatmul.mubr.bf16.gmra.mxu0 %v967
  %v1707 = vpop.f32.mrf.mxu0
  %v1708 = vadd.f32 0.0, %v1707
  %v1709 = vpop.f32.mrf.mxu0
  %v1710 = vpop.f32.mrf.mxu0
  %v1711 = vadd.f32 0.0, %v1710
  %v1712 = vpop.f32.mrf.mxu0
  %1713 = vmatprep.mubr.bf16.mxu0 0
  %1714 = vmatmul.mubr.bf16.gmra.mxu0 %v970
  %v1715 = vpop.f32.mrf.mxu0
  %v1716 = vadd.f32 0.0, %v1715
  %v1717 = vpop.f32.mrf.mxu0
  %v1718 = vpop.f32.mrf.mxu0
  %v1719 = vadd.f32 0.0, %v1718
  %v1720 = vpop.f32.mrf.mxu0
  %1721 = vmatprep.mubr.bf16.mxu0 0
  %1722 = vmatmul.mubr.bf16.gmra.mxu0 %v973
  %v1723 = vpop.f32.mrf.mxu0
  %v1724 = vadd.f32 0.0, %v1723
  %v1725 = vpop.f32.mrf.mxu0
  %v1726 = vpop.f32.mrf.mxu0
  %v1727 = vadd.f32 0.0, %v1726
  %v1728 = vpop.f32.mrf.mxu0
  %1729 = vmatprep.mubr.bf16.mxu0 0
  %1730 = vmatmul.mubr.bf16.gmra.mxu0 %v976
  %v1731 = vpop.f32.mrf.mxu0
  %v1732 = vadd.f32 0.0, %v1731
  %v1733 = vpop.f32.mrf.mxu0
  %v1734 = vpop.f32.mrf.mxu0
  %v1735 = vadd.f32 0.0, %v1734
  %v1736 = vpop.f32.mrf.mxu0
  %1737 = vmatprep.mubr.bf16.mxu0 0
  %1738 = vmatmul.mubr.bf16.gmra.mxu0 %v979
  %v1739 = vpop.f32.mrf.mxu0
  %v1740 = vadd.f32 0.0, %v1739
  %v1741 = vpop.f32.mrf.mxu0
  %v1742 = vpop.f32.mrf.mxu0
  %v1743 = vadd.f32 0.0, %v1742
  %v1744 = vpop.f32.mrf.mxu0
  %1745 = vmatprep.mubr.bf16.mxu0 0
  %1746 = vmatmul.mubr.bf16.gmra.mxu0 %v982
  %v1747 = vpop.f32.mrf.mxu0
  %v1748 = vadd.f32 0.0, %v1747
  %v1749 = vpop.f32.mrf.mxu0
  %v1750 = vpop.f32.mrf.mxu0
  %v1751 = vadd.f32 0.0, %v1750
  %v1752 = vpop.f32.mrf.mxu0
  %1753 = vmatprep.mubr.bf16.mxu0 0
  %1754 = vmatmul.mubr.bf16.gmra.mxu0 %v985
  %v1755 = vpop.f32.mrf.mxu0
  %v1756 = vadd.f32 0.0, %v1755
  %v1757 = vpop.f32.mrf.mxu0
  %v1758 = vpop.f32.mrf.mxu0
  %v1759 = vadd.f32 0.0, %v1758
  %v1760 = vpop.f32.mrf.mxu0
  %1761 = vmatprep.mubr.bf16.mxu0 0
  %1762 = vmatmul.mubr.bf16.gmra.mxu0 %v988
  %v1763 = vpop.f32.mrf.mxu0
  %v1764 = vadd.f32 0.0, %v1763
  %v1765 = vpop.f32.mrf.mxu0
  %v1766 = vpop.f32.mrf.mxu0
  %v1767 = vadd.f32 0.0, %v1766
  %v1768 = vpop.f32.mrf.mxu0
  %1769 = vmatprep.mubr.bf16.mxu0 0
  %1770 = vmatmul.mubr.bf16.gmra.mxu0 %v991
  %v1771 = vpop.f32.mrf.mxu0
  %v1772 = vadd.f32 0.0, %v1771
  %v1773 = vpop.f32.mrf.mxu0
  %v1774 = vpop.f32.mrf.mxu0
  %v1775 = vadd.f32 0.0, %v1774
  %v1776 = vpop.f32.mrf.mxu0
  %1777 = vmatprep.mubr.bf16.mxu0 0
  %1778 = vmatmul.mubr.bf16.gmra.mxu0 %v994
  %v1779 = vpop.f32.mrf.mxu0
  %v1780 = vadd.f32 0.0, %v1779
  %v1781 = vpop.f32.mrf.mxu0
  %v1782 = vpop.f32.mrf.mxu0
  %v1783 = vadd.f32 0.0, %v1782
  %v1784 = vpop.f32.mrf.mxu0
  %1785 = vmatprep.mubr.bf16.mxu0 0
  %1786 = vmatmul.mubr.bf16.gmra.mxu0 %v997
  %v1787 = vpop.f32.mrf.mxu0
  %v1788 = vadd.f32 0.0, %v1787
  %v1789 = vpop.f32.mrf.mxu0
  %v1790 = vpop.f32.mrf.mxu0
  %v1791 = vadd.f32 0.0, %v1790
  %v1792 = vpop.f32.mrf.mxu0
  %1793 = vmatprep.mubr.bf16.mxu0 0
  %1794 = vmatmul.mubr.bf16.gmra.mxu0 %v1000
  %v1795 = vpop.f32.mrf.mxu0
  %v1796 = vadd.f32 0.0, %v1795
  %v1797 = vpop.f32.mrf.mxu0
  %v1798 = vpop.f32.mrf.mxu0
  %v1799 = vadd.f32 0.0, %v1798
  %v1800 = vpop.f32.mrf.mxu0
  %1801 = vmatprep.mubr.bf16.mxu0 0
  %1802 = vmatmul.mubr.bf16.gmra.mxu0 %v1003
  %v1803 = vpop.f32.mrf.mxu0
  %v1804 = vadd.f32 0.0, %v1803
  %v1805 = vpop.f32.mrf.mxu0
  %v1806 = vpop.f32.mrf.mxu0
  %v1807 = vadd.f32 0.0, %v1806
  %v1808 = vpop.f32.mrf.mxu0
  %1809 = vmatprep.mubr.bf16.mxu0 0
  %1810 = vmatmul.mubr.bf16.gmra.mxu0 %v1006
  %v1811 = vpop.f32.mrf.mxu0
  %v1812 = vadd.f32 0.0, %v1811
  %v1813 = vpop.f32.mrf.mxu0
  %v1814 = vpop.f32.mrf.mxu0
  %v1815 = vadd.f32 0.0, %v1814
  %v1816 = vpop.f32.mrf.mxu0
  %1817 = vmatprep.mubr.bf16.mxu0 0
  %1818 = vmatmul.mubr.bf16.gmra.mxu0 %v1009
  %v1819 = vpop.f32.mrf.mxu0
  %v1820 = vadd.f32 0.0, %v1819
  %v1821 = vpop.f32.mrf.mxu0
  %v1822 = vpop.f32.mrf.mxu0
  %v1823 = vadd.f32 0.0, %v1822
  %v1824 = vpop.f32.mrf.mxu0
  %1825 = vmatprep.mubr.bf16.mxu0 0
  %1826 = vmatmul.mubr.bf16.gmra.mxu0 %v1012
  %v1827 = vpop.f32.mrf.mxu0
  %v1828 = vadd.f32 0.0, %v1827
  %v1829 = vpop.f32.mrf.mxu0
  %v1830 = vpop.f32.mrf.mxu0
  %v1831 = vadd.f32 0.0, %v1830
  %v1832 = vpop.f32.mrf.mxu0
  %1833 = vmatprep.mubr.bf16.mxu0 0
  %1834 = vmatmul.mubr.bf16.gmra.mxu0 %v1015
  %v1835 = vpop.f32.mrf.mxu0
  %v1836 = vadd.f32 0.0, %v1835
  %v1837 = vpop.f32.mrf.mxu0
  %v1838 = vpop.f32.mrf.mxu0
  %v1839 = vadd.f32 0.0, %v1838
  %v1840 = vpop.f32.mrf.mxu0
  %1841 = vmatprep.mubr.bf16.mxu0 0
  %1842 = vmatmul.mubr.bf16.gmra.mxu0 %v1018
  %v1843 = vpop.f32.mrf.mxu0
  %v1844 = vadd.f32 0.0, %v1843
  %v1845 = vpop.f32.mrf.mxu0
  %v1846 = vpop.f32.mrf.mxu0
  %v1847 = vadd.f32 0.0, %v1846
  %v1848 = vpop.f32.mrf.mxu0
  %1849 = vmatprep.mubr.bf16.mxu0 0
  %1850 = vmatmul.mubr.bf16.gmra.mxu0 %v1021
  %v1851 = vpop.f32.mrf.mxu0
  %v1852 = vadd.f32 0.0, %v1851
  %v1853 = vpop.f32.mrf.mxu0
  %v1854 = vpop.f32.mrf.mxu0
  %v1855 = vadd.f32 0.0, %v1854
  %v1856 = vpop.f32.mrf.mxu0
  %1857 = vmatprep.mubr.bf16.mxu0 0
  %1858 = vmatmul.mubr.bf16.gmra.mxu0 %v1024
  %v1859 = vpop.f32.mrf.mxu0
  %v1860 = vadd.f32 0.0, %v1859
  %v1861 = vpop.f32.mrf.mxu0
  %v1862 = vpop.f32.mrf.mxu0
  %v1863 = vadd.f32 0.0, %v1862
  %v1864 = vpop.f32.mrf.mxu0
  %1865 = vdwg.mxu0
  %v1866 = vld [vmem:[%s2] sm:$0x1]
  %v1868 = vlaneseq
  %v1869 = vshrl.u32 %v1868, 7
  %v1870 = vsub.s32 0, %v1869
  %v1871 = vrot.slane %v1866, %v1870
  %v1873 = vmul.f32 %v1068, %v1871
  %v1874 = vmul.f32 %v1071, %v1871
  %v1875 = vmul.f32 %v1076, %v1871
  %v1876 = vmul.f32 %v1079, %v1871
  %v1877 = vmul.f32 %v1084, %v1871
  %v1878 = vmul.f32 %v1087, %v1871
  %v1879 = vmul.f32 %v1092, %v1871
  %v1880 = vmul.f32 %v1095, %v1871
  %v1881 = vmul.f32 %v1100, %v1871
  %v1882 = vmul.f32 %v1103, %v1871
  %v1883 = vmul.f32 %v1108, %v1871
  %v1884 = vmul.f32 %v1111, %v1871
  %v1885 = vmul.f32 %v1116, %v1871
  %v1886 = vmul.f32 %v1119, %v1871
  %v1887 = vmul.f32 %v1124, %v1871
  %v1888 = vmul.f32 %v1127, %v1871
  %v1889 = vmul.f32 %v1132, %v1871
  %v1890 = vmul.f32 %v1135, %v1871
  %v1891 = vmul.f32 %v1140, %v1871
  %v1892 = vmul.f32 %v1143, %v1871
  %v1893 = vmul.f32 %v1148, %v1871
  %v1894 = vmul.f32 %v1151, %v1871
  %v1895 = vmul.f32 %v1156, %v1871
  %v1896 = vmul.f32 %v1159, %v1871
  %v1897 = vmul.f32 %v1164, %v1871
  %v1898 = vmul.f32 %v1167, %v1871
  %v1899 = vmul.f32 %v1172, %v1871
  %v1900 = vmul.f32 %v1175, %v1871
  %v1901 = vmul.f32 %v1180, %v1871
  %v1902 = vmul.f32 %v1183, %v1871
  %v1903 = vmul.f32 %v1188, %v1871
  %v1904 = vmul.f32 %v1191, %v1871
  %v1905 = vmul.f32 %v1196, %v1871
  %v1906 = vmul.f32 %v1199, %v1871
  %v1907 = vmul.f32 %v1204, %v1871
  %v1908 = vmul.f32 %v1207, %v1871
  %v1909 = vmul.f32 %v1212, %v1871
  %v1910 = vmul.f32 %v1215, %v1871
  %v1911 = vmul.f32 %v1220, %v1871
  %v1912 = vmul.f32 %v1223, %v1871
  %v1913 = vmul.f32 %v1228, %v1871
  %v1914 = vmul.f32 %v1231, %v1871
  %v1915 = vmul.f32 %v1236, %v1871
  %v1916 = vmul.f32 %v1239, %v1871
  %v1917 = vmul.f32 %v1244, %v1871
  %v1918 = vmul.f32 %v1247, %v1871
  %v1919 = vmul.f32 %v1252, %v1871
  %v1920 = vmul.f32 %v1255, %v1871
  %v1921 = vmul.f32 %v1260, %v1871
  %v1922 = vmul.f32 %v1263, %v1871
  %v1923 = vmul.f32 %v1268, %v1871
  %v1924 = vmul.f32 %v1271, %v1871
  %v1925 = vmul.f32 %v1276, %v1871
  %v1926 = vmul.f32 %v1279, %v1871
  %v1927 = vmul.f32 %v1284, %v1871
  %v1928 = vmul.f32 %v1287, %v1871
  %v1929 = vmul.f32 %v1292, %v1871
  %v1930 = vmul.f32 %v1295, %v1871
  %v1931 = vmul.f32 %v1300, %v1871
  %v1932 = vmul.f32 %v1303, %v1871
  %v1933 = vmul.f32 %v1308, %v1871
  %v1934 = vmul.f32 %v1311, %v1871
  %v1935 = vmul.f32 %v1316, %v1871
  %v1936 = vmul.f32 %v1319, %v1871
  %v1937 = vmul.f32 %v1324, %v1871
  %v1938 = vmul.f32 %v1327, %v1871
  %v1939 = vmul.f32 %v1332, %v1871
  %v1940 = vmul.f32 %v1335, %v1871
  %v1941 = vmul.f32 %v1340, %v1871
  %v1942 = vmul.f32 %v1343, %v1871
  %v1943 = vmul.f32 %v1348, %v1871
  %v1944 = vmul.f32 %v1351, %v1871
  %v1945 = vmul.f32 %v1356, %v1871
  %v1946 = vmul.f32 %v1359, %v1871
  %v1947 = vmul.f32 %v1364, %v1871
  %v1948 = vmul.f32 %v1367, %v1871
  %v1949 = vmul.f32 %v1372, %v1871
  %v1950 = vmul.f32 %v1375, %v1871
  %v1951 = vmul.f32 %v1380, %v1871
  %v1952 = vmul.f32 %v1383, %v1871
  %v1953 = vmul.f32 %v1388, %v1871
  %v1954 = vmul.f32 %v1391, %v1871
  %v1955 = vmul.f32 %v1396, %v1871
  %v1956 = vmul.f32 %v1399, %v1871
  %v1957 = vmul.f32 %v1404, %v1871
  %v1958 = vmul.f32 %v1407, %v1871
  %v1959 = vmul.f32 %v1412, %v1871
  %v1960 = vmul.f32 %v1415, %v1871
  %v1961 = vmul.f32 %v1420, %v1871
  %v1962 = vmul.f32 %v1423, %v1871
  %v1963 = vmul.f32 %v1428, %v1871
  %v1964 = vmul.f32 %v1431, %v1871
  %v1965 = vmul.f32 %v1436, %v1871
  %v1966 = vmul.f32 %v1439, %v1871
  %v1967 = vmul.f32 %v1444, %v1871
  %v1968 = vmul.f32 %v1447, %v1871
  %v1969 = vmul.f32 %v1452, %v1871
  %v1970 = vmul.f32 %v1455, %v1871
  %v1971 = vmul.f32 %v1460, %v1871
  %v1972 = vmul.f32 %v1463, %v1871
  %v1973 = vmul.f32 %v1468, %v1871
  %v1974 = vmul.f32 %v1471, %v1871
  %v1975 = vmul.f32 %v1476, %v1871
  %v1976 = vmul.f32 %v1479, %v1871
  %v1977 = vmul.f32 %v1484, %v1871
  %v1978 = vmul.f32 %v1487, %v1871
  %v1979 = vmul.f32 %v1492, %v1871
  %v1980 = vmul.f32 %v1495, %v1871
  %v1981 = vmul.f32 %v1500, %v1871
  %v1982 = vmul.f32 %v1503, %v1871
  %v1983 = vmul.f32 %v1508, %v1871
  %v1984 = vmul.f32 %v1511, %v1871
  %v1985 = vmul.f32 %v1516, %v1871
  %v1986 = vmul.f32 %v1519, %v1871
  %v1987 = vmul.f32 %v1524, %v1871
  %v1988 = vmul.f32 %v1527, %v1871
  %v1989 = vmul.f32 %v1532, %v1871
  %v1990 = vmul.f32 %v1535, %v1871
  %v1991 = vmul.f32 %v1540, %v1871
  %v1992 = vmul.f32 %v1543, %v1871
  %v1993 = vmul.f32 %v1548, %v1871
  %v1994 = vmul.f32 %v1551, %v1871
  %v1995 = vmul.f32 %v1556, %v1871
  %v1996 = vmul.f32 %v1559, %v1871
  %v1997 = vmul.f32 %v1564, %v1871
  %v1998 = vmul.f32 %v1567, %v1871
  %v1999 = vmul.f32 %v1572, %v1871
  %v2000 = vmul.f32 %v1575, %v1871
  %v2001 = vmul.f32 %v1580, %v1871
  %v2002 = vmul.f32 %v1583, %v1871
  %v2003 = vmul.f32 %v1588, %v1871
  %v2004 = vmul.f32 %v1591, %v1871
  %v2005 = vmul.f32 %v1596, %v1871
  %v2006 = vmul.f32 %v1599, %v1871
  %v2007 = vmul.f32 %v1604, %v1871
  %v2008 = vmul.f32 %v1607, %v1871
  %v2009 = vmul.f32 %v1612, %v1871
  %v2010 = vmul.f32 %v1615, %v1871
  %v2011 = vmul.f32 %v1620, %v1871
  %v2012 = vmul.f32 %v1623, %v1871
  %v2013 = vmul.f32 %v1628, %v1871
  %v2014 = vmul.f32 %v1631, %v1871
  %v2015 = vmul.f32 %v1636, %v1871
  %v2016 = vmul.f32 %v1639, %v1871
  %v2017 = vmul.f32 %v1644, %v1871
  %v2018 = vmul.f32 %v1647, %v1871
  %v2019 = vmul.f32 %v1652, %v1871
  %v2020 = vmul.f32 %v1655, %v1871
  %v2021 = vmul.f32 %v1660, %v1871
  %v2022 = vmul.f32 %v1663, %v1871
  %v2023 = vmul.f32 %v1668, %v1871
  %v2024 = vmul.f32 %v1671, %v1871
  %v2025 = vmul.f32 %v1676, %v1871
  %v2026 = vmul.f32 %v1679, %v1871
  %v2027 = vmul.f32 %v1684, %v1871
  %v2028 = vmul.f32 %v1687, %v1871
  %v2029 = vmul.f32 %v1692, %v1871
  %v2030 = vmul.f32 %v1695, %v1871
  %v2031 = vmul.f32 %v1700, %v1871
  %v2032 = vmul.f32 %v1703, %v1871
  %v2033 = vmul.f32 %v1708, %v1871
  %v2034 = vmul.f32 %v1711, %v1871
  %v2035 = vmul.f32 %v1716, %v1871
  %v2036 = vmul.f32 %v1719, %v1871
  %v2037 = vmul.f32 %v1724, %v1871
  %v2038 = vmul.f32 %v1727, %v1871
  %v2039 = vmul.f32 %v1732, %v1871
  %v2040 = vmul.f32 %v1735, %v1871
  %v2041 = vmul.f32 %v1740, %v1871
  %v2042 = vmul.f32 %v1743, %v1871
  %v2043 = vmul.f32 %v1748, %v1871
  %v2044 = vmul.f32 %v1751, %v1871
  %v2045 = vmul.f32 %v1756, %v1871
  %v2046 = vmul.f32 %v1759, %v1871
  %v2047 = vmul.f32 %v1764, %v1871
  %v2048 = vmul.f32 %v1767, %v1871
  %v2049 = vmul.f32 %v1772, %v1871
  %v2050 = vmul.f32 %v1775, %v1871
  %v2051 = vmul.f32 %v1780, %v1871
  %v2052 = vmul.f32 %v1783, %v1871
  %v2053 = vmul.f32 %v1788, %v1871
  %v2054 = vmul.f32 %v1791, %v1871
  %v2055 = vmul.f32 %v1796, %v1871
  %v2056 = vmul.f32 %v1799, %v1871
  %v2057 = vmul.f32 %v1804, %v1871
  %v2058 = vmul.f32 %v1807, %v1871
  %v2059 = vmul.f32 %v1812, %v1871
  %v2060 = vmul.f32 %v1815, %v1871
  %v2061 = vmul.f32 %v1820, %v1871
  %v2062 = vmul.f32 %v1823, %v1871
  %v2063 = vmul.f32 %v1828, %v1871
  %v2064 = vmul.f32 %v1831, %v1871
  %v2065 = vmul.f32 %v1836, %v1871
  %v2066 = vmul.f32 %v1839, %v1871
  %v2067 = vmul.f32 %v1844, %v1871
  %v2068 = vmul.f32 %v1847, %v1871
  %v2069 = vmul.f32 %v1852, %v1871
  %v2070 = vmul.f32 %v1855, %v1871
  %v2071 = vmul.f32 %v1860, %v1871
  %v2072 = vmul.f32 %v1863, %v1871
  %v2073 = vld [vmem:[%s3] sm:$0x1]
  %v2075 = vlaneseq
  %v2076 = vshrl.u32 %v2075, 7
  %v2077 = vsub.s32 0, %v2076
  %v2078 = vrot.slane %v2073, %v2077
  %v2080 = vadd.f32 %v1873, %v2078
  %v2081 = vadd.f32 %v1874, %v2078
  %v2082 = vadd.f32 %v1875, %v2078
  %v2083 = vadd.f32 %v1876, %v2078
  %v2084 = vadd.f32 %v1877, %v2078
  %v2085 = vadd.f32 %v1878, %v2078
  %v2086 = vadd.f32 %v1879, %v2078
  %v2087 = vadd.f32 %v1880, %v2078
  %v2088 = vadd.f32 %v1881, %v2078
  %v2089 = vadd.f32 %v1882, %v2078
  %v2090 = vadd.f32 %v1883, %v2078
  %v2091 = vadd.f32 %v1884, %v2078
  %v2092 = vadd.f32 %v1885, %v2078
  %v2093 = vadd.f32 %v1886, %v2078
  %v2094 = vadd.f32 %v1887, %v2078
  %v2095 = vadd.f32 %v1888, %v2078
  %v2096 = vadd.f32 %v1889, %v2078
  %v2097 = vadd.f32 %v1890, %v2078
  %v2098 = vadd.f32 %v1891, %v2078
  %v2099 = vadd.f32 %v1892, %v2078
  %v2100 = vadd.f32 %v1893, %v2078
  %v2101 = vadd.f32 %v1894, %v2078
  %v2102 = vadd.f32 %v1895, %v2078
  %v2103 = vadd.f32 %v1896, %v2078
  %v2104 = vadd.f32 %v1897, %v2078
  %v2105 = vadd.f32 %v1898, %v2078
  %v2106 = vadd.f32 %v1899, %v2078
  %v2107 = vadd.f32 %v1900, %v2078
  %v2108 = vadd.f32 %v1901, %v2078
  %v2109 = vadd.f32 %v1902, %v2078
  %v2110 = vadd.f32 %v1903, %v2078
  %v2111 = vadd.f32 %v1904, %v2078
  %v2112 = vadd.f32 %v1905, %v2078
  %v2113 = vadd.f32 %v1906, %v2078
  %v2114 = vadd.f32 %v1907, %v2078
  %v2115 = vadd.f32 %v1908, %v2078
  %v2116 = vadd.f32 %v1909, %v2078
  %v2117 = vadd.f32 %v1910, %v2078
  %v2118 = vadd.f32 %v1911, %v2078
  %v2119 = vadd.f32 %v1912, %v2078
  %v2120 = vadd.f32 %v1913, %v2078
  %v2121 = vadd.f32 %v1914, %v2078
  %v2122 = vadd.f32 %v1915, %v2078
  %v2123 = vadd.f32 %v1916, %v2078
  %v2124 = vadd.f32 %v1917, %v2078
  %v2125 = vadd.f32 %v1918, %v2078
  %v2126 = vadd.f32 %v1919, %v2078
  %v2127 = vadd.f32 %v1920, %v2078
  %v2128 = vadd.f32 %v1921, %v2078
  %v2129 = vadd.f32 %v1922, %v2078
  %v2130 = vadd.f32 %v1923, %v2078
  %v2131 = vadd.f32 %v1924, %v2078
  %v2132 = vadd.f32 %v1925, %v2078
  %v2133 = vadd.f32 %v1926, %v2078
  %v2134 = vadd.f32 %v1927, %v2078
  %v2135 = vadd.f32 %v1928, %v2078
  %v2136 = vadd.f32 %v1929, %v2078
  %v2137 = vadd.f32 %v1930, %v2078
  %v2138 = vadd.f32 %v1931, %v2078
  %v2139 = vadd.f32 %v1932, %v2078
  %v2140 = vadd.f32 %v1933, %v2078
  %v2141 = vadd.f32 %v1934, %v2078
  %v2142 = vadd.f32 %v1935, %v2078
  %v2143 = vadd.f32 %v1936, %v2078
  %v2144 = vadd.f32 %v1937, %v2078
  %v2145 = vadd.f32 %v1938, %v2078
  %v2146 = vadd.f32 %v1939, %v2078
  %v2147 = vadd.f32 %v1940, %v2078
  %v2148 = vadd.f32 %v1941, %v2078
  %v2149 = vadd.f32 %v1942, %v2078
  %v2150 = vadd.f32 %v1943, %v2078
  %v2151 = vadd.f32 %v1944, %v2078
  %v2152 = vadd.f32 %v1945, %v2078
  %v2153 = vadd.f32 %v1946, %v2078
  %v2154 = vadd.f32 %v1947, %v2078
  %v2155 = vadd.f32 %v1948, %v2078
  %v2156 = vadd.f32 %v1949, %v2078
  %v2157 = vadd.f32 %v1950, %v2078
  %v2158 = vadd.f32 %v1951, %v2078
  %v2159 = vadd.f32 %v1952, %v2078
  %v2160 = vadd.f32 %v1953, %v2078
  %v2161 = vadd.f32 %v1954, %v2078
  %v2162 = vadd.f32 %v1955, %v2078
  %v2163 = vadd.f32 %v1956, %v2078
  %v2164 = vadd.f32 %v1957, %v2078
  %v2165 = vadd.f32 %v1958, %v2078
  %v2166 = vadd.f32 %v1959, %v2078
  %v2167 = vadd.f32 %v1960, %v2078
  %v2168 = vadd.f32 %v1961, %v2078
  %v2169 = vadd.f32 %v1962, %v2078
  %v2170 = vadd.f32 %v1963, %v2078
  %v2171 = vadd.f32 %v1964, %v2078
  %v2172 = vadd.f32 %v1965, %v2078
  %v2173 = vadd.f32 %v1966, %v2078
  %v2174 = vadd.f32 %v1967, %v2078
  %v2175 = vadd.f32 %v1968, %v2078
  %v2176 = vadd.f32 %v1969, %v2078
  %v2177 = vadd.f32 %v1970, %v2078
  %v2178 = vadd.f32 %v1971, %v2078
  %v2179 = vadd.f32 %v1972, %v2078
  %v2180 = vadd.f32 %v1973, %v2078
  %v2181 = vadd.f32 %v1974, %v2078
  %v2182 = vadd.f32 %v1975, %v2078
  %v2183 = vadd.f32 %v1976, %v2078
  %v2184 = vadd.f32 %v1977, %v2078
  %v2185 = vadd.f32 %v1978, %v2078
  %v2186 = vadd.f32 %v1979, %v2078
  %v2187 = vadd.f32 %v1980, %v2078
  %v2188 = vadd.f32 %v1981, %v2078
  %v2189 = vadd.f32 %v1982, %v2078
  %v2190 = vadd.f32 %v1983, %v2078
  %v2191 = vadd.f32 %v1984, %v2078
  %v2192 = vadd.f32 %v1985, %v2078
  %v2193 = vadd.f32 %v1986, %v2078
  %v2194 = vadd.f32 %v1987, %v2078
  %v2195 = vadd.f32 %v1988, %v2078
  %v2196 = vadd.f32 %v1989, %v2078
  %v2197 = vadd.f32 %v1990, %v2078
  %v2198 = vadd.f32 %v1991, %v2078
  %v2199 = vadd.f32 %v1992, %v2078
  %v2200 = vadd.f32 %v1993, %v2078
  %v2201 = vadd.f32 %v1994, %v2078
  %v2202 = vadd.f32 %v1995, %v2078
  %v2203 = vadd.f32 %v1996, %v2078
  %v2204 = vadd.f32 %v1997, %v2078
  %v2205 = vadd.f32 %v1998, %v2078
  %v2206 = vadd.f32 %v1999, %v2078
  %v2207 = vadd.f32 %v2000, %v2078
  %v2208 = vadd.f32 %v2001, %v2078
  %v2209 = vadd.f32 %v2002, %v2078
  %v2210 = vadd.f32 %v2003, %v2078
  %v2211 = vadd.f32 %v2004, %v2078
  %v2212 = vadd.f32 %v2005, %v2078
  %v2213 = vadd.f32 %v2006, %v2078
  %v2214 = vadd.f32 %v2007, %v2078
  %v2215 = vadd.f32 %v2008, %v2078
  %v2216 = vadd.f32 %v2009, %v2078
  %v2217 = vadd.f32 %v2010, %v2078
  %v2218 = vadd.f32 %v2011, %v2078
  %v2219 = vadd.f32 %v2012, %v2078
  %v2220 = vadd.f32 %v2013, %v2078
  %v2221 = vadd.f32 %v2014, %v2078
  %v2222 = vadd.f32 %v2015, %v2078
  %v2223 = vadd.f32 %v2016, %v2078
  %v2224 = vadd.f32 %v2017, %v2078
  %v2225 = vadd.f32 %v2018, %v2078
  %v2226 = vadd.f32 %v2019, %v2078
  %v2227 = vadd.f32 %v2020, %v2078
  %v2228 = vadd.f32 %v2021, %v2078
  %v2229 = vadd.f32 %v2022, %v2078
  %v2230 = vadd.f32 %v2023, %v2078
  %v2231 = vadd.f32 %v2024, %v2078
  %v2232 = vadd.f32 %v2025, %v2078
  %v2233 = vadd.f32 %v2026, %v2078
  %v2234 = vadd.f32 %v2027, %v2078
  %v2235 = vadd.f32 %v2028, %v2078
  %v2236 = vadd.f32 %v2029, %v2078
  %v2237 = vadd.f32 %v2030, %v2078
  %v2238 = vadd.f32 %v2031, %v2078
  %v2239 = vadd.f32 %v2032, %v2078
  %v2240 = vadd.f32 %v2033, %v2078
  %v2241 = vadd.f32 %v2034, %v2078
  %v2242 = vadd.f32 %v2035, %v2078
  %v2243 = vadd.f32 %v2036, %v2078
  %v2244 = vadd.f32 %v2037, %v2078
  %v2245 = vadd.f32 %v2038, %v2078
  %v2246 = vadd.f32 %v2039, %v2078
  %v2247 = vadd.f32 %v2040, %v2078
  %v2248 = vadd.f32 %v2041, %v2078
  %v2249 = vadd.f32 %v2042, %v2078
  %v2250 = vadd.f32 %v2043, %v2078
  %v2251 = vadd.f32 %v2044, %v2078
  %v2252 = vadd.f32 %v2045, %v2078
  %v2253 = vadd.f32 %v2046, %v2078
  %v2254 = vadd.f32 %v2047, %v2078
  %v2255 = vadd.f32 %v2048, %v2078
  %v2256 = vadd.f32 %v2049, %v2078
  %v2257 = vadd.f32 %v2050, %v2078
  %v2258 = vadd.f32 %v2051, %v2078
  %v2259 = vadd.f32 %v2052, %v2078
  %v2260 = vadd.f32 %v2053, %v2078
  %v2261 = vadd.f32 %v2054, %v2078
  %v2262 = vadd.f32 %v2055, %v2078
  %v2263 = vadd.f32 %v2056, %v2078
  %v2264 = vadd.f32 %v2057, %v2078
  %v2265 = vadd.f32 %v2058, %v2078
  %v2266 = vadd.f32 %v2059, %v2078
  %v2267 = vadd.f32 %v2060, %v2078
  %v2268 = vadd.f32 %v2061, %v2078
  %v2269 = vadd.f32 %v2062, %v2078
  %v2270 = vadd.f32 %v2063, %v2078
  %v2271 = vadd.f32 %v2064, %v2078
  %v2272 = vadd.f32 %v2065, %v2078
  %v2273 = vadd.f32 %v2066, %v2078
  %v2274 = vadd.f32 %v2067, %v2078
  %v2275 = vadd.f32 %v2068, %v2078
  %v2276 = vadd.f32 %v2069, %v2078
  %v2277 = vadd.f32 %v2070, %v2078
  %v2278 = vadd.f32 %v2071, %v2078
  %v2279 = vadd.f32 %v2072, %v2078
  %v2280 = vmax.f32 %v2080, 0.0
  %v2281 = vmax.f32 %v2081, 0.0
  %v2282 = vmax.f32 %v2082, 0.0
  %v2283 = vmax.f32 %v2083, 0.0
  %v2284 = vmax.f32 %v2084, 0.0
  %v2285 = vmax.f32 %v2085, 0.0
  %v2286 = vmax.f32 %v2086, 0.0
  %v2287 = vmax.f32 %v2087, 0.0
  %v2288 = vmax.f32 %v2088, 0.0
  %v2289 = vmax.f32 %v2089, 0.0
  %v2290 = vmax.f32 %v2090, 0.0
  %v2291 = vmax.f32 %v2091, 0.0
  %v2292 = vmax.f32 %v2092, 0.0
  %v2293 = vmax.f32 %v2093, 0.0
  %v2294 = vmax.f32 %v2094, 0.0
  %v2295 = vmax.f32 %v2095, 0.0
  %v2296 = vmax.f32 %v2096, 0.0
  %v2297 = vmax.f32 %v2097, 0.0
  %v2298 = vmax.f32 %v2098, 0.0
  %v2299 = vmax.f32 %v2099, 0.0
  %v2300 = vmax.f32 %v2100, 0.0
  %v2301 = vmax.f32 %v2101, 0.0
  %v2302 = vmax.f32 %v2102, 0.0
  %v2303 = vmax.f32 %v2103, 0.0
  %v2304 = vmax.f32 %v2104, 0.0
  %v2305 = vmax.f32 %v2105, 0.0
  %v2306 = vmax.f32 %v2106, 0.0
  %v2307 = vmax.f32 %v2107, 0.0
  %v2308 = vmax.f32 %v2108, 0.0
  %v2309 = vmax.f32 %v2109, 0.0
  %v2310 = vmax.f32 %v2110, 0.0
  %v2311 = vmax.f32 %v2111, 0.0
  %v2312 = vmax.f32 %v2112, 0.0
  %v2313 = vmax.f32 %v2113, 0.0
  %v2314 = vmax.f32 %v2114, 0.0
  %v2315 = vmax.f32 %v2115, 0.0
  %v2316 = vmax.f32 %v2116, 0.0
  %v2317 = vmax.f32 %v2117, 0.0
  %v2318 = vmax.f32 %v2118, 0.0
  %v2319 = vmax.f32 %v2119, 0.0
  %v2320 = vmax.f32 %v2120, 0.0
  %v2321 = vmax.f32 %v2121, 0.0
  %v2322 = vmax.f32 %v2122, 0.0
  %v2323 = vmax.f32 %v2123, 0.0
  %v2324 = vmax.f32 %v2124, 0.0
  %v2325 = vmax.f32 %v2125, 0.0
  %v2326 = vmax.f32 %v2126, 0.0
  %v2327 = vmax.f32 %v2127, 0.0
  %v2328 = vmax.f32 %v2128, 0.0
  %v2329 = vmax.f32 %v2129, 0.0
  %v2330 = vmax.f32 %v2130, 0.0
  %v2331 = vmax.f32 %v2131, 0.0
  %v2332 = vmax.f32 %v2132, 0.0
  %v2333 = vmax.f32 %v2133, 0.0
  %v2334 = vmax.f32 %v2134, 0.0
  %v2335 = vmax.f32 %v2135, 0.0
  %v2336 = vmax.f32 %v2136, 0.0
  %v2337 = vmax.f32 %v2137, 0.0
  %v2338 = vmax.f32 %v2138, 0.0
  %v2339 = vmax.f32 %v2139, 0.0
  %v2340 = vmax.f32 %v2140, 0.0
  %v2341 = vmax.f32 %v2141, 0.0
  %v2342 = vmax.f32 %v2142, 0.0
  %v2343 = vmax.f32 %v2143, 0.0
  %v2344 = vmax.f32 %v2144, 0.0
  %v2345 = vmax.f32 %v2145, 0.0
  %v2346 = vmax.f32 %v2146, 0.0
  %v2347 = vmax.f32 %v2147, 0.0
  %v2348 = vmax.f32 %v2148, 0.0
  %v2349 = vmax.f32 %v2149, 0.0
  %v2350 = vmax.f32 %v2150, 0.0
  %v2351 = vmax.f32 %v2151, 0.0
  %v2352 = vmax.f32 %v2152, 0.0
  %v2353 = vmax.f32 %v2153, 0.0
  %v2354 = vmax.f32 %v2154, 0.0
  %v2355 = vmax.f32 %v2155, 0.0
  %v2356 = vmax.f32 %v2156, 0.0
  %v2357 = vmax.f32 %v2157, 0.0
  %v2358 = vmax.f32 %v2158, 0.0
  %v2359 = vmax.f32 %v2159, 0.0
  %v2360 = vmax.f32 %v2160, 0.0
  %v2361 = vmax.f32 %v2161, 0.0
  %v2362 = vmax.f32 %v2162, 0.0
  %v2363 = vmax.f32 %v2163, 0.0
  %v2364 = vmax.f32 %v2164, 0.0
  %v2365 = vmax.f32 %v2165, 0.0
  %v2366 = vmax.f32 %v2166, 0.0
  %v2367 = vmax.f32 %v2167, 0.0
  %v2368 = vmax.f32 %v2168, 0.0
  %v2369 = vmax.f32 %v2169, 0.0
  %v2370 = vmax.f32 %v2170, 0.0
  %v2371 = vmax.f32 %v2171, 0.0
  %v2372 = vmax.f32 %v2172, 0.0
  %v2373 = vmax.f32 %v2173, 0.0
  %v2374 = vmax.f32 %v2174, 0.0
  %v2375 = vmax.f32 %v2175, 0.0
  %v2376 = vmax.f32 %v2176, 0.0
  %v2377 = vmax.f32 %v2177, 0.0
  %v2378 = vmax.f32 %v2178, 0.0
  %v2379 = vmax.f32 %v2179, 0.0
  %v2380 = vmax.f32 %v2180, 0.0
  %v2381 = vmax.f32 %v2181, 0.0
  %v2382 = vmax.f32 %v2182, 0.0
  %v2383 = vmax.f32 %v2183, 0.0
  %v2384 = vmax.f32 %v2184, 0.0
  %v2385 = vmax.f32 %v2185, 0.0
  %v2386 = vmax.f32 %v2186, 0.0
  %v2387 = vmax.f32 %v2187, 0.0
  %v2388 = vmax.f32 %v2188, 0.0
  %v2389 = vmax.f32 %v2189, 0.0
  %v2390 = vmax.f32 %v2190, 0.0
  %v2391 = vmax.f32 %v2191, 0.0
  %v2392 = vmax.f32 %v2192, 0.0
  %v2393 = vmax.f32 %v2193, 0.0
  %v2394 = vmax.f32 %v2194, 0.0
  %v2395 = vmax.f32 %v2195, 0.0
  %v2396 = vmax.f32 %v2196, 0.0
  %v2397 = vmax.f32 %v2197, 0.0
  %v2398 = vmax.f32 %v2198, 0.0
  %v2399 = vmax.f32 %v2199, 0.0
  %v2400 = vmax.f32 %v2200, 0.0
  %v2401 = vmax.f32 %v2201, 0.0
  %v2402 = vmax.f32 %v2202, 0.0
  %v2403 = vmax.f32 %v2203, 0.0
  %v2404 = vmax.f32 %v2204, 0.0
  %v2405 = vmax.f32 %v2205, 0.0
  %v2406 = vmax.f32 %v2206, 0.0
  %v2407 = vmax.f32 %v2207, 0.0
  %v2408 = vmax.f32 %v2208, 0.0
  %v2409 = vmax.f32 %v2209, 0.0
  %v2410 = vmax.f32 %v2210, 0.0
  %v2411 = vmax.f32 %v2211, 0.0
  %v2412 = vmax.f32 %v2212, 0.0
  %v2413 = vmax.f32 %v2213, 0.0
  %v2414 = vmax.f32 %v2214, 0.0
  %v2415 = vmax.f32 %v2215, 0.0
  %v2416 = vmax.f32 %v2216, 0.0
  %v2417 = vmax.f32 %v2217, 0.0
  %v2418 = vmax.f32 %v2218, 0.0
  %v2419 = vmax.f32 %v2219, 0.0
  %v2420 = vmax.f32 %v2220, 0.0
  %v2421 = vmax.f32 %v2221, 0.0
  %v2422 = vmax.f32 %v2222, 0.0
  %v2423 = vmax.f32 %v2223, 0.0
  %v2424 = vmax.f32 %v2224, 0.0
  %v2425 = vmax.f32 %v2225, 0.0
  %v2426 = vmax.f32 %v2226, 0.0
  %v2427 = vmax.f32 %v2227, 0.0
  %v2428 = vmax.f32 %v2228, 0.0
  %v2429 = vmax.f32 %v2229, 0.0
  %v2430 = vmax.f32 %v2230, 0.0
  %v2431 = vmax.f32 %v2231, 0.0
  %v2432 = vmax.f32 %v2232, 0.0
  %v2433 = vmax.f32 %v2233, 0.0
  %v2434 = vmax.f32 %v2234, 0.0
  %v2435 = vmax.f32 %v2235, 0.0
  %v2436 = vmax.f32 %v2236, 0.0
  %v2437 = vmax.f32 %v2237, 0.0
  %v2438 = vmax.f32 %v2238, 0.0
  %v2439 = vmax.f32 %v2239, 0.0
  %v2440 = vmax.f32 %v2240, 0.0
  %v2441 = vmax.f32 %v2241, 0.0
  %v2442 = vmax.f32 %v2242, 0.0
  %v2443 = vmax.f32 %v2243, 0.0
  %v2444 = vmax.f32 %v2244, 0.0
  %v2445 = vmax.f32 %v2245, 0.0
  %v2446 = vmax.f32 %v2246, 0.0
  %v2447 = vmax.f32 %v2247, 0.0
  %v2448 = vmax.f32 %v2248, 0.0
  %v2449 = vmax.f32 %v2249, 0.0
  %v2450 = vmax.f32 %v2250, 0.0
  %v2451 = vmax.f32 %v2251, 0.0
  %v2452 = vmax.f32 %v2252, 0.0
  %v2453 = vmax.f32 %v2253, 0.0
  %v2454 = vmax.f32 %v2254, 0.0
  %v2455 = vmax.f32 %v2255, 0.0
  %v2456 = vmax.f32 %v2256, 0.0
  %v2457 = vmax.f32 %v2257, 0.0
  %v2458 = vmax.f32 %v2258, 0.0
  %v2459 = vmax.f32 %v2259, 0.0
  %v2460 = vmax.f32 %v2260, 0.0
  %v2461 = vmax.f32 %v2261, 0.0
  %v2462 = vmax.f32 %v2262, 0.0
  %v2463 = vmax.f32 %v2263, 0.0
  %v2464 = vmax.f32 %v2264, 0.0
  %v2465 = vmax.f32 %v2265, 0.0
  %v2466 = vmax.f32 %v2266, 0.0
  %v2467 = vmax.f32 %v2267, 0.0
  %v2468 = vmax.f32 %v2268, 0.0
  %v2469 = vmax.f32 %v2269, 0.0
  %v2470 = vmax.f32 %v2270, 0.0
  %v2471 = vmax.f32 %v2271, 0.0
  %v2472 = vmax.f32 %v2272, 0.0
  %v2473 = vmax.f32 %v2273, 0.0
  %v2474 = vmax.f32 %v2274, 0.0
  %v2475 = vmax.f32 %v2275, 0.0
  %v2476 = vmax.f32 %v2276, 0.0
  %v2477 = vmax.f32 %v2277, 0.0
  %v2478 = vmax.f32 %v2278, 0.0
  %v2479 = vmax.f32 %v2279, 0.0
  %vm2480 = vcmask 261120
  %v2481 = vsel %vm2480, %v2280, -inf
  %v2482 = vsel %vm2480, %v2305, -inf
  %v2483 = vmax.f32 %v2481, %v2482
  %v2484 = vsel %vm2480, %v2330, -inf
  %v2485 = vmax.f32 %v2483, %v2484
  %v2486 = vsel %vm2480, %v2355, -inf
  %v2487 = vmax.f32 %v2485, %v2486
  %v2488 = vsel %vm2480, %v2281, -inf
  %v2489 = vsel %vm2480, %v2306, -inf
  %v2490 = vmax.f32 %v2488, %v2489
  %v2491 = vsel %vm2480, %v2331, -inf
  %v2492 = vmax.f32 %v2490, %v2491
  %v2493 = vsel %vm2480, %v2356, -inf
  %v2494 = vmax.f32 %v2492, %v2493
  %v2495 = vsel %vm2480, %v2282, -inf
  %v2496 = vsel %vm2480, %v2307, -inf
  %v2497 = vmax.f32 %v2495, %v2496
  %v2498 = vsel %vm2480, %v2332, -inf
  %v2499 = vmax.f32 %v2497, %v2498
  %v2500 = vsel %vm2480, %v2357, -inf
  %v2501 = vmax.f32 %v2499, %v2500
  %v2502 = vsel %vm2480, %v2283, -inf
  %v2503 = vsel %vm2480, %v2308, -inf
  %v2504 = vmax.f32 %v2502, %v2503
  %v2505 = vsel %vm2480, %v2333, -inf
  %v2506 = vmax.f32 %v2504, %v2505
  %v2507 = vsel %vm2480, %v2358, -inf
  %v2508 = vmax.f32 %v2506, %v2507
  %v2509 = vsel %vm2480, %v2284, -inf
  %v2510 = vsel %vm2480, %v2309, -inf
  %v2511 = vmax.f32 %v2509, %v2510
  %v2512 = vsel %vm2480, %v2334, -inf
  %v2513 = vmax.f32 %v2511, %v2512
  %v2514 = vsel %vm2480, %v2359, -inf
  %v2515 = vmax.f32 %v2513, %v2514
  %v2516 = vsel %vm2480, %v2285, -inf
  %v2517 = vsel %vm2480, %v2310, -inf
  %v2518 = vmax.f32 %v2516, %v2517
  %v2519 = vsel %vm2480, %v2335, -inf
  %v2520 = vmax.f32 %v2518, %v2519
  %v2521 = vsel %vm2480, %v2360, -inf
  %v2522 = vmax.f32 %v2520, %v2521
  %v2523 = vsel %vm2480, %v2286, -inf
  %v2524 = vsel %vm2480, %v2311, -inf
  %v2525 = vmax.f32 %v2523, %v2524
  %v2526 = vsel %vm2480, %v2336, -inf
  %v2527 = vmax.f32 %v2525, %v2526
  %v2528 = vsel %vm2480, %v2361, -inf
  %v2529 = vmax.f32 %v2527, %v2528
  %v2530 = vsel %vm2480, %v2287, -inf
  %v2531 = vsel %vm2480, %v2312, -inf
  %v2532 = vmax.f32 %v2530, %v2531
  %v2533 = vsel %vm2480, %v2337, -inf
  %v2534 = vmax.f32 %v2532, %v2533
  %v2535 = vsel %vm2480, %v2362, -inf
  %v2536 = vmax.f32 %v2534, %v2535
  %v2537 = vsel %vm2480, %v2288, -inf
  %v2538 = vsel %vm2480, %v2313, -inf
  %v2539 = vmax.f32 %v2537, %v2538
  %v2540 = vsel %vm2480, %v2338, -inf
  %v2541 = vmax.f32 %v2539, %v2540
  %v2542 = vsel %vm2480, %v2363, -inf
  %v2543 = vmax.f32 %v2541, %v2542
  %v2544 = vsel %vm2480, %v2289, -inf
  %v2545 = vsel %vm2480, %v2314, -inf
  %v2546 = vmax.f32 %v2544, %v2545
  %v2547 = vsel %vm2480, %v2339, -inf
  %v2548 = vmax.f32 %v2546, %v2547
  %v2549 = vsel %vm2480, %v2364, -inf
  %v2550 = vmax.f32 %v2548, %v2549
  %v2551 = vsel %vm2480, %v2290, -inf
  %v2552 = vsel %vm2480, %v2315, -inf
  %v2553 = vmax.f32 %v2551, %v2552
  %v2554 = vsel %vm2480, %v2340, -inf
  %v2555 = vmax.f32 %v2553, %v2554
  %v2556 = vsel %vm2480, %v2365, -inf
  %v2557 = vmax.f32 %v2555, %v2556
  %v2558 = vsel %vm2480, %v2291, -inf
  %v2559 = vsel %vm2480, %v2316, -inf
  %v2560 = vmax.f32 %v2558, %v2559
  %v2561 = vsel %vm2480, %v2341, -inf
  %v2562 = vmax.f32 %v2560, %v2561
  %v2563 = vsel %vm2480, %v2366, -inf
  %v2564 = vmax.f32 %v2562, %v2563
  %v2565 = vsel %vm2480, %v2292, -inf
  %v2566 = vsel %vm2480, %v2317, -inf
  %v2567 = vmax.f32 %v2565, %v2566
  %v2568 = vsel %vm2480, %v2342, -inf
  %v2569 = vmax.f32 %v2567, %v2568
  %v2570 = vsel %vm2480, %v2367, -inf
  %v2571 = vmax.f32 %v2569, %v2570
  %v2572 = vsel %vm2480, %v2293, -inf
  %v2573 = vsel %vm2480, %v2318, -inf
  %v2574 = vmax.f32 %v2572, %v2573
  %v2575 = vsel %vm2480, %v2343, -inf
  %v2576 = vmax.f32 %v2574, %v2575
  %v2577 = vsel %vm2480, %v2368, -inf
  %v2578 = vmax.f32 %v2576, %v2577
  %v2579 = vsel %vm2480, %v2294, -inf
  %v2580 = vsel %vm2480, %v2319, -inf
  %v2581 = vmax.f32 %v2579, %v2580
  %v2582 = vsel %vm2480, %v2344, -inf
  %v2583 = vmax.f32 %v2581, %v2582
  %v2584 = vsel %vm2480, %v2369, -inf
  %v2585 = vmax.f32 %v2583, %v2584
  %v2586 = vsel %vm2480, %v2295, -inf
  %v2587 = vsel %vm2480, %v2320, -inf
  %v2588 = vmax.f32 %v2586, %v2587
  %v2589 = vsel %vm2480, %v2345, -inf
  %v2590 = vmax.f32 %v2588, %v2589
  %v2591 = vsel %vm2480, %v2370, -inf
  %v2592 = vmax.f32 %v2590, %v2591
  %v2593 = vsel %vm2480, %v2296, -inf
  %v2594 = vsel %vm2480, %v2321, -inf
  %v2595 = vmax.f32 %v2593, %v2594
  %v2596 = vsel %vm2480, %v2346, -inf
  %v2597 = vmax.f32 %v2595, %v2596
  %v2598 = vsel %vm2480, %v2371, -inf
  %v2599 = vmax.f32 %v2597, %v2598
  %v2600 = vsel %vm2480, %v2297, -inf
  %v2601 = vsel %vm2480, %v2322, -inf
  %v2602 = vmax.f32 %v2600, %v2601
  %v2603 = vsel %vm2480, %v2347, -inf
  %v2604 = vmax.f32 %v2602, %v2603
  %v2605 = vsel %vm2480, %v2372, -inf
  %v2606 = vmax.f32 %v2604, %v2605
  %v2607 = vsel %vm2480, %v2298, -inf
  %v2608 = vsel %vm2480, %v2323, -inf
  %v2609 = vmax.f32 %v2607, %v2608
  %v2610 = vsel %vm2480, %v2348, -inf
  %v2611 = vmax.f32 %v2609, %v2610
  %v2612 = vsel %vm2480, %v2373, -inf
  %v2613 = vmax.f32 %v2611, %v2612
  %v2614 = vsel %vm2480, %v2299, -inf
  %v2615 = vsel %vm2480, %v2324, -inf
  %v2616 = vmax.f32 %v2614, %v2615
  %v2617 = vsel %vm2480, %v2349, -inf
  %v2618 = vmax.f32 %v2616, %v2617
  %v2619 = vsel %vm2480, %v2374, -inf
  %v2620 = vmax.f32 %v2618, %v2619
  %v2621 = vsel %vm2480, %v2300, -inf
  %v2622 = vsel %vm2480, %v2325, -inf
  %v2623 = vmax.f32 %v2621, %v2622
  %v2624 = vsel %vm2480, %v2350, -inf
  %v2625 = vmax.f32 %v2623, %v2624
  %v2626 = vsel %vm2480, %v2375, -inf
  %v2627 = vmax.f32 %v2625, %v2626
  %v2628 = vsel %vm2480, %v2301, -inf
  %v2629 = vsel %vm2480, %v2326, -inf
  %v2630 = vmax.f32 %v2628, %v2629
  %v2631 = vsel %vm2480, %v2351, -inf
  %v2632 = vmax.f32 %v2630, %v2631
  %v2633 = vsel %vm2480, %v2376, -inf
  %v2634 = vmax.f32 %v2632, %v2633
  %v2635 = vsel %vm2480, %v2302, -inf
  %v2636 = vsel %vm2480, %v2327, -inf
  %v2637 = vmax.f32 %v2635, %v2636
  %v2638 = vsel %vm2480, %v2352, -inf
  %v2639 = vmax.f32 %v2637, %v2638
  %v2640 = vsel %vm2480, %v2377, -inf
  %v2641 = vmax.f32 %v2639, %v2640
  %v2642 = vsel %vm2480, %v2303, -inf
  %v2643 = vsel %vm2480, %v2328, -inf
  %v2644 = vmax.f32 %v2642, %v2643
  %v2645 = vsel %vm2480, %v2353, -inf
  %v2646 = vmax.f32 %v2644, %v2645
  %v2647 = vsel %vm2480, %v2378, -inf
  %v2648 = vmax.f32 %v2646, %v2647
  %v2649 = vsel %vm2480, %v2304, -inf
  %v2650 = vsel %vm2480, %v2329, -inf
  %v2651 = vmax.f32 %v2649, %v2650
  %v2652 = vsel %vm2480, %v2354, -inf
  %v2653 = vmax.f32 %v2651, %v2652
  %v2654 = vsel %vm2480, %v2379, -inf
  %v2655 = vmax.f32 %v2653, %v2654
  %v2656 = vsel %vm2480, %v2380, -inf
  %v2657 = vsel %vm2480, %v2405, -inf
  %v2658 = vmax.f32 %v2656, %v2657
  %v2659 = vsel %vm2480, %v2430, -inf
  %v2660 = vmax.f32 %v2658, %v2659
  %v2661 = vsel %vm2480, %v2455, -inf
  %v2662 = vmax.f32 %v2660, %v2661
  %v2663 = vsel %vm2480, %v2381, -inf
  %v2664 = vsel %vm2480, %v2406, -inf
  %v2665 = vmax.f32 %v2663, %v2664
  %v2666 = vsel %vm2480, %v2431, -inf
  %v2667 = vmax.f32 %v2665, %v2666
  %v2668 = vsel %vm2480, %v2456, -inf
  %v2669 = vmax.f32 %v2667, %v2668
  %v2670 = vsel %vm2480, %v2382, -inf
  %v2671 = vsel %vm2480, %v2407, -inf
  %v2672 = vmax.f32 %v2670, %v2671
  %v2673 = vsel %vm2480, %v2432, -inf
  %v2674 = vmax.f32 %v2672, %v2673
  %v2675 = vsel %vm2480, %v2457, -inf
  %v2676 = vmax.f32 %v2674, %v2675
  %v2677 = vsel %vm2480, %v2383, -inf
  %v2678 = vsel %vm2480, %v2408, -inf
  %v2679 = vmax.f32 %v2677, %v2678
  %v2680 = vsel %vm2480, %v2433, -inf
  %v2681 = vmax.f32 %v2679, %v2680
  %v2682 = vsel %vm2480, %v2458, -inf
  %v2683 = vmax.f32 %v2681, %v2682
  %v2684 = vsel %vm2480, %v2384, -inf
  %v2685 = vsel %vm2480, %v2409, -inf
  %v2686 = vmax.f32 %v2684, %v2685
  %v2687 = vsel %vm2480, %v2434, -inf
  %v2688 = vmax.f32 %v2686, %v2687
  %v2689 = vsel %vm2480, %v2459, -inf
  %v2690 = vmax.f32 %v2688, %v2689
  %v2691 = vsel %vm2480, %v2385, -inf
  %v2692 = vsel %vm2480, %v2410, -inf
  %v2693 = vmax.f32 %v2691, %v2692
  %v2694 = vsel %vm2480, %v2435, -inf
  %v2695 = vmax.f32 %v2693, %v2694
  %v2696 = vsel %vm2480, %v2460, -inf
  %v2697 = vmax.f32 %v2695, %v2696
  %v2698 = vsel %vm2480, %v2386, -inf
  %v2699 = vsel %vm2480, %v2411, -inf
  %v2700 = vmax.f32 %v2698, %v2699
  %v2701 = vsel %vm2480, %v2436, -inf
  %v2702 = vmax.f32 %v2700, %v2701
  %v2703 = vsel %vm2480, %v2461, -inf
  %v2704 = vmax.f32 %v2702, %v2703
  %v2705 = vsel %vm2480, %v2387, -inf
  %v2706 = vsel %vm2480, %v2412, -inf
  %v2707 = vmax.f32 %v2705, %v2706
  %v2708 = vsel %vm2480, %v2437, -inf
  %v2709 = vmax.f32 %v2707, %v2708
  %v2710 = vsel %vm2480, %v2462, -inf
  %v2711 = vmax.f32 %v2709, %v2710
  %v2712 = vsel %vm2480, %v2388, -inf
  %v2713 = vsel %vm2480, %v2413, -inf
  %v2714 = vmax.f32 %v2712, %v2713
  %v2715 = vsel %vm2480, %v2438, -inf
  %v2716 = vmax.f32 %v2714, %v2715
  %v2717 = vsel %vm2480, %v2463, -inf
  %v2718 = vmax.f32 %v2716, %v2717
  %v2719 = vsel %vm2480, %v2389, -inf
  %v2720 = vsel %vm2480, %v2414, -inf
  %v2721 = vmax.f32 %v2719, %v2720
  %v2722 = vsel %vm2480, %v2439, -inf
  %v2723 = vmax.f32 %v2721, %v2722
  %v2724 = vsel %vm2480, %v2464, -inf
  %v2725 = vmax.f32 %v2723, %v2724
  %v2726 = vsel %vm2480, %v2390, -inf
  %v2727 = vsel %vm2480, %v2415, -inf
  %v2728 = vmax.f32 %v2726, %v2727
  %v2729 = vsel %vm2480, %v2440, -inf
  %v2730 = vmax.f32 %v2728, %v2729
  %v2731 = vsel %vm2480, %v2465, -inf
  %v2732 = vmax.f32 %v2730, %v2731
  %v2733 = vsel %vm2480, %v2391, -inf
  %v2734 = vsel %vm2480, %v2416, -inf
  %v2735 = vmax.f32 %v2733, %v2734
  %v2736 = vsel %vm2480, %v2441, -inf
  %v2737 = vmax.f32 %v2735, %v2736
  %v2738 = vsel %vm2480, %v2466, -inf
  %v2739 = vmax.f32 %v2737, %v2738
  %v2740 = vsel %vm2480, %v2392, -inf
  %v2741 = vsel %vm2480, %v2417, -inf
  %v2742 = vmax.f32 %v2740, %v2741
  %v2743 = vsel %vm2480, %v2442, -inf
  %v2744 = vmax.f32 %v2742, %v2743
  %v2745 = vsel %vm2480, %v2467, -inf
  %v2746 = vmax.f32 %v2744, %v2745
  %v2747 = vsel %vm2480, %v2393, -inf
  %v2748 = vsel %vm2480, %v2418, -inf
  %v2749 = vmax.f32 %v2747, %v2748
  %v2750 = vsel %vm2480, %v2443, -inf
  %v2751 = vmax.f32 %v2749, %v2750
  %v2752 = vsel %vm2480, %v2468, -inf
  %v2753 = vmax.f32 %v2751, %v2752
  %v2754 = vsel %vm2480, %v2394, -inf
  %v2755 = vsel %vm2480, %v2419, -inf
  %v2756 = vmax.f32 %v2754, %v2755
  %v2757 = vsel %vm2480, %v2444, -inf
  %v2758 = vmax.f32 %v2756, %v2757
  %v2759 = vsel %vm2480, %v2469, -inf
  %v2760 = vmax.f32 %v2758, %v2759
  %v2761 = vsel %vm2480, %v2395, -inf
  %v2762 = vsel %vm2480, %v2420, -inf
  %v2763 = vmax.f32 %v2761, %v2762
  %v2764 = vsel %vm2480, %v2445, -inf
  %v2765 = vmax.f32 %v2763, %v2764
  %v2766 = vsel %vm2480, %v2470, -inf
  %v2767 = vmax.f32 %v2765, %v2766
  %v2768 = vsel %vm2480, %v2396, -inf
  %v2769 = vsel %vm2480, %v2421, -inf
  %v2770 = vmax.f32 %v2768, %v2769
  %v2771 = vsel %vm2480, %v2446, -inf
  %v2772 = vmax.f32 %v2770, %v2771
  %v2773 = vsel %vm2480, %v2471, -inf
  %v2774 = vmax.f32 %v2772, %v2773
  %v2775 = vsel %vm2480, %v2397, -inf
  %v2776 = vsel %vm2480, %v2422, -inf
  %v2777 = vmax.f32 %v2775, %v2776
  %v2778 = vsel %vm2480, %v2447, -inf
  %v2779 = vmax.f32 %v2777, %v2778
  %v2780 = vsel %vm2480, %v2472, -inf
  %v2781 = vmax.f32 %v2779, %v2780
  %v2782 = vsel %vm2480, %v2398, -inf
  %v2783 = vsel %vm2480, %v2423, -inf
  %v2784 = vmax.f32 %v2782, %v2783
  %v2785 = vsel %vm2480, %v2448, -inf
  %v2786 = vmax.f32 %v2784, %v2785
  %v2787 = vsel %vm2480, %v2473, -inf
  %v2788 = vmax.f32 %v2786, %v2787
  %v2789 = vsel %vm2480, %v2399, -inf
  %v2790 = vsel %vm2480, %v2424, -inf
  %v2791 = vmax.f32 %v2789, %v2790
  %v2792 = vsel %vm2480, %v2449, -inf
  %v2793 = vmax.f32 %v2791, %v2792
  %v2794 = vsel %vm2480, %v2474, -inf
  %v2795 = vmax.f32 %v2793, %v2794
  %v2796 = vsel %vm2480, %v2400, -inf
  %v2797 = vsel %vm2480, %v2425, -inf
  %v2798 = vmax.f32 %v2796, %v2797
  %v2799 = vsel %vm2480, %v2450, -inf
  %v2800 = vmax.f32 %v2798, %v2799
  %v2801 = vsel %vm2480, %v2475, -inf
  %v2802 = vmax.f32 %v2800, %v2801
  %v2803 = vsel %vm2480, %v2401, -inf
  %v2804 = vsel %vm2480, %v2426, -inf
  %v2805 = vmax.f32 %v2803, %v2804
  %v2806 = vsel %vm2480, %v2451, -inf
  %v2807 = vmax.f32 %v2805, %v2806
  %v2808 = vsel %vm2480, %v2476, -inf
  %v2809 = vmax.f32 %v2807, %v2808
  %v2810 = vsel %vm2480, %v2402, -inf
  %v2811 = vsel %vm2480, %v2427, -inf
  %v2812 = vmax.f32 %v2810, %v2811
  %v2813 = vsel %vm2480, %v2452, -inf
  %v2814 = vmax.f32 %v2812, %v2813
  %v2815 = vsel %vm2480, %v2477, -inf
  %v2816 = vmax.f32 %v2814, %v2815
  %v2817 = vsel %vm2480, %v2403, -inf
  %v2818 = vsel %vm2480, %v2428, -inf
  %v2819 = vmax.f32 %v2817, %v2818
  %v2820 = vsel %vm2480, %v2453, -inf
  %v2821 = vmax.f32 %v2819, %v2820
  %v2822 = vsel %vm2480, %v2478, -inf
  %v2823 = vmax.f32 %v2821, %v2822
  %v2824 = vsel %vm2480, %v2404, -inf
  %v2825 = vsel %vm2480, %v2429, -inf
  %v2826 = vmax.f32 %v2824, %v2825
  %v2827 = vsel %vm2480, %v2454, -inf
  %v2828 = vmax.f32 %v2826, %v2827
  %v2829 = vsel %vm2480, %v2479, -inf
  %v2830 = vmax.f32 %v2828, %v2829
  %2831 = vst.msk [vmem:[%s4] sm:$0xff] %vm2480, %v2487
  %2832 = vst.msk [vmem:[%s4 + $0x8] sm:$0xff] %vm2480, %v2494
  %2833 = vst.msk [vmem:[%s4 + $0x10] sm:$0xff] %vm2480, %v2501
  %2834 = vst.msk [vmem:[%s4 + $0x18] sm:$0xff] %vm2480, %v2508
  %2835 = vst.msk [vmem:[%s4 + $0x20] sm:$0xff] %vm2480, %v2515
  %2836 = vst.msk [vmem:[%s4 + $0x28] sm:$0xff] %vm2480, %v2522
  %2837 = vst.msk [vmem:[%s4 + $0x30] sm:$0xff] %vm2480, %v2529
  %2838 = vst.msk [vmem:[%s4 + $0x38] sm:$0xff] %vm2480, %v2536
  %2839 = vst.msk [vmem:[%s4 + $0x40] sm:$0xff] %vm2480, %v2543
  %2840 = vst.msk [vmem:[%s4 + $0x48] sm:$0xff] %vm2480, %v2550
  %2841 = vst.msk [vmem:[%s4 + $0x50] sm:$0xff] %vm2480, %v2557
  %2842 = vst.msk [vmem:[%s4 + $0x58] sm:$0xff] %vm2480, %v2564
  %2843 = vst.msk [vmem:[%s4 + $0x60] sm:$0xff] %vm2480, %v2571
  %2844 = vst.msk [vmem:[%s4 + $0x68] sm:$0xff] %vm2480, %v2578
  %2845 = vst.msk [vmem:[%s4 + $0x70] sm:$0xff] %vm2480, %v2585
  %2846 = vst.msk [vmem:[%s4 + $0x78] sm:$0xff] %vm2480, %v2592
  %2847 = vst.msk [vmem:[%s4 + $0x80] sm:$0xff] %vm2480, %v2599
  %2848 = vst.msk [vmem:[%s4 + $0x88] sm:$0xff] %vm2480, %v2606
  %2849 = vst.msk [vmem:[%s4 + $0x90] sm:$0xff] %vm2480, %v2613
  %2850 = vst.msk [vmem:[%s4 + $0x98] sm:$0xff] %vm2480, %v2620
  %2851 = vst.msk [vmem:[%s4 + $0xa0] sm:$0xff] %vm2480, %v2627
  %2852 = vst.msk [vmem:[%s4 + $0xa8] sm:$0xff] %vm2480, %v2634
  %2853 = vst.msk [vmem:[%s4 + $0xb0] sm:$0xff] %vm2480, %v2641
  %2854 = vst.msk [vmem:[%s4 + $0xb8] sm:$0xff] %vm2480, %v2648
  %2855 = vst.msk [vmem:[%s4 + $0xc0] sm:$0xff] %vm2480, %v2655
  %2856 = vst.msk [vmem:[%s4 + $0xc8] sm:$0xff] %vm2480, %v2662
  %2857 = vst.msk [vmem:[%s4 + $0xd0] sm:$0xff] %vm2480, %v2669
  %2858 = vst.msk [vmem:[%s4 + $0xd8] sm:$0xff] %vm2480, %v2676
  %2859 = vst.msk [vmem:[%s4 + $0xe0] sm:$0xff] %vm2480, %v2683
  %2860 = vst.msk [vmem:[%s4 + $0xe8] sm:$0xff] %vm2480, %v2690
  %2861 = vst.msk [vmem:[%s4 + $0xf0] sm:$0xff] %vm2480, %v2697
  %2862 = vst.msk [vmem:[%s4 + $0xf8] sm:$0xff] %vm2480, %v2704
  %2863 = vst.msk [vmem:[%s4 + $0x100] sm:$0xff] %vm2480, %v2711
  %2864 = vst.msk [vmem:[%s4 + $0x108] sm:$0xff] %vm2480, %v2718
  %2865 = vst.msk [vmem:[%s4 + $0x110] sm:$0xff] %vm2480, %v2725
  %2866 = vst.msk [vmem:[%s4 + $0x118] sm:$0xff] %vm2480, %v2732
  %2867 = vst.msk [vmem:[%s4 + $0x120] sm:$0xff] %vm2480, %v2739
  %2868 = vst.msk [vmem:[%s4 + $0x128] sm:$0xff] %vm2480, %v2746
  %2869 = vst.msk [vmem:[%s4 + $0x130] sm:$0xff] %vm2480, %v2753
  %2870 = vst.msk [vmem:[%s4 + $0x138] sm:$0xff] %vm2480, %v2760
  %2871 = vst.msk [vmem:[%s4 + $0x140] sm:$0xff] %vm2480, %v2767
  %2872 = vst.msk [vmem:[%s4 + $0x148] sm:$0xff] %vm2480, %v2774
  %2873 = vst.msk [vmem:[%s4 + $0x150] sm:$0xff] %vm2480, %v2781
  %2874 = vst.msk [vmem:[%s4 + $0x158] sm:$0xff] %vm2480, %v2788
  %2875 = vst.msk [vmem:[%s4 + $0x160] sm:$0xff] %vm2480, %v2795
  %2876 = vst.msk [vmem:[%s4 + $0x168] sm:$0xff] %vm2480, %v2802
  %2877 = vst.msk [vmem:[%s4 + $0x170] sm:$0xff] %vm2480, %v2809
  %2878 = vst.msk [vmem:[%s4 + $0x178] sm:$0xff] %vm2480, %v2816
  %2879 = vst.msk [vmem:[%s4 + $0x180] sm:$0xff] %vm2480, %v2823
  %2880 = vst.msk [vmem:[%s4 + $0x188] sm:$0xff] %vm2480, %v2830
  // Predicated region
  $region18: #{mnist_cnn_forward.4} parent=0 // pred_check
    _
  $region19: #{mnist_cnn_forward.4} parent=0 // pred_check_branch
    %2882 = sbr.rel (0) target = $region21
  $region20: #{mnist_cnn_forward.4} parent=0 // pred_region
    _
  $region21: #{mnist_cnn_forward.4} parent=0 // pred_fallthru
    _
  // Predicated region
  $region22: #{mnist_cnn_forward.4} parent=0 // pred_check
    _
  $region23: #{mnist_cnn_forward.4} parent=0 // pred_check_branch
    %2884 = sbr.rel (0) target = $region25
  $region24: #{mnist_cnn_forward.4} parent=0 // pred_region
    _
  $region25: #{mnist_cnn_forward.4} parent=0 // pred_fallthru
    _

// kernel: mnist_cnn_forward.5
$region0: #{mnist_cnn_forward.5}
  #allocation0 [shape = 'u32[]', space=smem, size = 0x4, offset = 0x4, fixed_abs, tag = 'smem constant byte address 0x4 - core index']
  #allocation1 [shape = 'u32[144,128]{1,0:T(1,128)}', space=vmem, size = 0x12000, scoped, tag = 'internal scratch']
  %s0 = inlined_call_operand.vmem [shape: bf16[2,224,288], index: 0, kind: input, shape index: {}]
  %s1 = inlined_call_operand.vmem [shape: bf16[288,64], index: 1, kind: input, shape index: {}]
  %s2 = inlined_call_operand.vmem [shape: f32[1,64], index: 2, kind: input, shape index: {}]
  %s3 = inlined_call_operand.vmem [shape: f32[1,64], index: 3, kind: input, shape index: {}]
  %s4 = inlined_call_operand.vmem [shape: f32[2,56,64], index: 4, kind: output, shape index: {}]
  %s5 = sld [smem:[#allocation0]]
  $region26: #{mnist_cnn_forward.5} parent=0
    _
  %s7 = ssub.s32 1, %s5
  %s8 = scalar_select 0, %s7, %s5
  // Predicated region
  $region2: #{mnist_cnn_forward.5} parent=0 // pred_check
    _
  $region3: #{mnist_cnn_forward.5} parent=0 // pred_check_branch
    %10 = sbr.rel (0) target = $region5
  $region4: #{mnist_cnn_forward.5} parent=0 // pred_region
    _
  $region5: #{mnist_cnn_forward.5} parent=0 // pred_fallthru
    _
  // Predicated region
  $region6: #{mnist_cnn_forward.5} parent=0 // pred_check
    _
  $region7: #{mnist_cnn_forward.5} parent=0 // pred_check_branch
    %12 = sbr.rel (0) target = $region9
  $region8: #{mnist_cnn_forward.5} parent=0 // pred_region
    _
  $region9: #{mnist_cnn_forward.5} parent=0 // pred_fallthru
    _
  // Predicated region
  $region10: #{mnist_cnn_forward.5} parent=0 // pred_check
    _
  $region11: #{mnist_cnn_forward.5} parent=0 // pred_check_branch
    %14 = sbr.rel (0) target = $region13
  $region12: #{mnist_cnn_forward.5} parent=0 // pred_region
    _
  $region13: #{mnist_cnn_forward.5} parent=0 // pred_fallthru
    _
  // Predicated region
  $region14: #{mnist_cnn_forward.5} parent=0 // pred_check
    _
  $region15: #{mnist_cnn_forward.5} parent=0 // pred_check_branch
    %16 = sbr.rel (0) target = $region17
  $region16: #{mnist_cnn_forward.5} parent=0 // pred_region
    _
  $region17: #{mnist_cnn_forward.5} parent=0 // pred_fallthru
    _
  %v18 = vld [vmem:[%s0] sm:$0xff]
  %v19 = vld [vmem:[%s0 + $0x8] sm:$0xf]
  %v20 = vld [vmem:[%s0 + $0xc] sm:$0xff]
  %v21 = vld [vmem:[%s0 + $0x14] sm:$0xf]
  %v22 = vld [vmem:[%s0 + $0x18] sm:$0xff]
  %v23 = vld [vmem:[%s0 + $0x20] sm:$0xf]
  %v24 = vld [vmem:[%s0 + $0x24] sm:$0xff]
  %v25 = vld [vmem:[%s0 + $0x2c] sm:$0xf]
  %v26 = vld [vmem:[%s0 + $0x30] sm:$0xff]
  %v27 = vld [vmem:[%s0 + $0x38] sm:$0xf]
  %v28 = vld [vmem:[%s0 + $0x3c] sm:$0xff]
  %v29 = vld [vmem:[%s0 + $0x44] sm:$0xf]
  %v30 = vld [vmem:[%s0 + $0x48] sm:$0xff]
  %v31 = vld [vmem:[%s0 + $0x50] sm:$0xf]
  %v32 = vld [vmem:[%s0 + $0x54] sm:$0xff]
  %v33 = vld [vmem:[%s0 + $0x5c] sm:$0xf]
  %v34 = vld [vmem:[%s0 + $0x60] sm:$0xff]
  %v35 = vld [vmem:[%s0 + $0x68] sm:$0xf]
  %v36 = vld [vmem:[%s0 + $0x6c] sm:$0xff]
  %v37 = vld [vmem:[%s0 + $0x74] sm:$0xf]
  %v38 = vld [vmem:[%s0 + $0x78] sm:$0xff]
  %v39 = vld [vmem:[%s0 + $0x80] sm:$0xf]
  %v40 = vld [vmem:[%s0 + $0x84] sm:$0xff]
  %v41 = vld [vmem:[%s0 + $0x8c] sm:$0xf]
  %v42 = vld [vmem:[%s0 + $0x90] sm:$0xff]
  %v43 = vld [vmem:[%s0 + $0x98] sm:$0xf]
  %v44 = vld [vmem:[%s0 + $0x9c] sm:$0xff]
  %v45 = vld [vmem:[%s0 + $0xa4] sm:$0xf]
  %v46 = vld [vmem:[%s0 + $0xa8] sm:$0xff]
  %v47 = vld [vmem:[%s0 + $0xb0] sm:$0xf]
  %v48 = vld [vmem:[%s0 + $0xb4] sm:$0xff]
  %v49 = vld [vmem:[%s0 + $0xbc] sm:$0xf]
  %v50 = vld [vmem:[%s0 + $0xc0] sm:$0xff]
  %v51 = vld [vmem:[%s0 + $0xc8] sm:$0xf]
  %v52 = vld [vmem:[%s0 + $0xcc] sm:$0xff]
  %v53 = vld [vmem:[%s0 + $0xd4] sm:$0xf]
  %v54 = vld [vmem:[%s0 + $0xd8] sm:$0xff]
  %v55 = vld [vmem:[%s0 + $0xe0] sm:$0xf]
  %v56 = vld [vmem:[%s0 + $0xe4] sm:$0xff]
  %v57 = vld [vmem:[%s0 + $0xec] sm:$0xf]
  %v58 = vld [vmem:[%s0 + $0xf0] sm:$0xff]
  %v59 = vld [vmem:[%s0 + $0xf8] sm:$0xf]
  %v60 = vld [vmem:[%s0 + $0xfc] sm:$0xff]
  %v61 = vld [vmem:[%s0 + $0x104] sm:$0xf]
  %v62 = vld [vmem:[%s0 + $0x108] sm:$0xff]
  %v63 = vld [vmem:[%s0 + $0x110] sm:$0xf]
  %v64 = vld [vmem:[%s0 + $0x114] sm:$0xff]
  %v65 = vld [vmem:[%s0 + $0x11c] sm:$0xf]
  %v66 = vld [vmem:[%s0 + $0x120] sm:$0xff]
  %v67 = vld [vmem:[%s0 + $0x128] sm:$0xf]
  %v68 = vld [vmem:[%s0 + $0x12c] sm:$0xff]
  %v69 = vld [vmem:[%s0 + $0x134] sm:$0xf]
  %v70 = vld [vmem:[%s0 + $0x138] sm:$0xff]
  %v71 = vld [vmem:[%s0 + $0x140] sm:$0xf]
  %v72 = vld [vmem:[%s0 + $0x144] sm:$0xff]
  %v73 = vld [vmem:[%s0 + $0x14c] sm:$0xf]
  %v74 = vld [vmem:[%s0 + $0x150] sm:$0xff]
  %v75 = vld [vmem:[%s0 + $0x158] sm:$0xf]
  %v76 = vld [vmem:[%s0 + $0x15c] sm:$0xff]
  %v77 = vld [vmem:[%s0 + $0x164] sm:$0xf]
  %v78 = vld [vmem:[%s0 + $0x168] sm:$0xff]
  %v79 = vld [vmem:[%s0 + $0x170] sm:$0xf]
  %v80 = vld [vmem:[%s0 + $0x174] sm:$0xff]
  %v81 = vld [vmem:[%s0 + $0x17c] sm:$0xf]
  %v82 = vld [vmem:[%s0 + $0x180] sm:$0xff]
  %v83 = vld [vmem:[%s0 + $0x188] sm:$0xf]
  %v84 = vld [vmem:[%s0 + $0x18c] sm:$0xff]
  %v85 = vld [vmem:[%s0 + $0x194] sm:$0xf]
  %v86 = vld [vmem:[%s0 + $0x198] sm:$0xff]
  %v87 = vld [vmem:[%s0 + $0x1a0] sm:$0xf]
  %v88 = vld [vmem:[%s0 + $0x1a4] sm:$0xff]
  %v89 = vld [vmem:[%s0 + $0x1ac] sm:$0xf]
  %v90 = vld [vmem:[%s0 + $0x1b0] sm:$0xff]
  %v91 = vld [vmem:[%s0 + $0x1b8] sm:$0xf]
  %v92 = vld [vmem:[%s0 + $0x1bc] sm:$0xff]
  %v93 = vld [vmem:[%s0 + $0x1c4] sm:$0xf]
  %v94 = vld [vmem:[%s0 + $0x1c8] sm:$0xff]
  %v95 = vld [vmem:[%s0 + $0x1d0] sm:$0xf]
  %v96 = vld [vmem:[%s0 + $0x1d4] sm:$0xff]
  %v97 = vld [vmem:[%s0 + $0x1dc] sm:$0xf]
  %v98 = vld [vmem:[%s0 + $0x1e0] sm:$0xff]
  %v99 = vld [vmem:[%s0 + $0x1e8] sm:$0xf]
  %v100 = vld [vmem:[%s0 + $0x1ec] sm:$0xff]
  %v101 = vld [vmem:[%s0 + $0x1f4] sm:$0xf]
  %v102 = vld [vmem:[%s0 + $0x1f8] sm:$0xff]
  %v103 = vld [vmem:[%s0 + $0x200] sm:$0xf]
  %v104 = vld [vmem:[%s0 + $0x204] sm:$0xff]
  %v105 = vld [vmem:[%s0 + $0x20c] sm:$0xf]
  %v106 = vld [vmem:[%s0 + $0x210] sm:$0xff]
  %v107 = vld [vmem:[%s0 + $0x218] sm:$0xf]
  %v108 = vld [vmem:[%s0 + $0x21c] sm:$0xff]
  %v109 = vld [vmem:[%s0 + $0x224] sm:$0xf]
  %v110 = vld [vmem:[%s0 + $0x228] sm:$0xff]
  %v111 = vld [vmem:[%s0 + $0x230] sm:$0xf]
  %v112 = vld [vmem:[%s0 + $0x234] sm:$0xff]
  %v113 = vld [vmem:[%s0 + $0x23c] sm:$0xf]
  %v114 = vld [vmem:[%s0 + $0x240] sm:$0xff]
  %v115 = vld [vmem:[%s0 + $0x248] sm:$0xf]
  %v116 = vld [vmem:[%s0 + $0x24c] sm:$0xff]
  %v117 = vld [vmem:[%s0 + $0x254] sm:$0xf]
  %v118 = vld [vmem:[%s0 + $0x258] sm:$0xff]
  %v119 = vld [vmem:[%s0 + $0x260] sm:$0xf]
  %v120 = vld [vmem:[%s0 + $0x264] sm:$0xff]
  %v121 = vld [vmem:[%s0 + $0x26c] sm:$0xf]
  %v122 = vld [vmem:[%s0 + $0x270] sm:$0xff]
  %v123 = vld [vmem:[%s0 + $0x278] sm:$0xf]
  %v124 = vld [vmem:[%s0 + $0x27c] sm:$0xff]
  %v125 = vld [vmem:[%s0 + $0x284] sm:$0xf]
  %v126 = vld [vmem:[%s0 + $0x288] sm:$0xff]
  %v127 = vld [vmem:[%s0 + $0x290] sm:$0xf]
  %v128 = vld [vmem:[%s0 + $0x294] sm:$0xff]
  %v129 = vld [vmem:[%s0 + $0x29c] sm:$0xf]
  %v130 = vld [vmem:[%s1] sm:$0xf]
  %v131 = vld [vmem:[%s1 + $0x4] sm:$0xf]
  %v132 = vld [vmem:[%s1 + $0x8] sm:$0xf]
  %v133 = vld [vmem:[%s1 + $0xc] sm:$0xf]
  %v134 = vld [vmem:[%s1 + $0x10] sm:$0xf]
  %v135 = vld [vmem:[%s1 + $0x14] sm:$0xf]
  %v136 = vld [vmem:[%s1 + $0x18] sm:$0xf]
  %v137 = vld [vmem:[%s1 + $0x1c] sm:$0xf]
  %v138 = vld [vmem:[%s1 + $0x20] sm:$0xf]
  %v139 = vld [vmem:[%s1 + $0x24] sm:$0xf]
  %v140 = vld [vmem:[%s1 + $0x28] sm:$0xf]
  %v141 = vld [vmem:[%s1 + $0x2c] sm:$0xf]
  %v142 = vld [vmem:[%s1 + $0x30] sm:$0xf]
  %v143 = vld [vmem:[%s1 + $0x34] sm:$0xf]
  %v144 = vld [vmem:[%s1 + $0x38] sm:$0xf]
  %v145 = vld [vmem:[%s1 + $0x3c] sm:$0xf]
  %v146 = vld [vmem:[%s1 + $0x40] sm:$0xf]
  %v147 = vld [vmem:[%s1 + $0x44] sm:$0xf]
  %v148 = vld [vmem:[%s1 + $0x48] sm:$0xf]
  %v149 = vld [vmem:[%s1 + $0x4c] sm:$0xf]
  %v150 = vld [vmem:[%s1 + $0x50] sm:$0xf]
  %v151 = vld [vmem:[%s1 + $0x54] sm:$0xf]
  %v152 = vld [vmem:[%s1 + $0x58] sm:$0xf]
  %v153 = vld [vmem:[%s1 + $0x5c] sm:$0xf]
  %v154 = vld [vmem:[%s1 + $0x60] sm:$0xf]
  %v155 = vld [vmem:[%s1 + $0x64] sm:$0xf]
  %v156 = vld [vmem:[%s1 + $0x68] sm:$0xf]
  %v157 = vld [vmem:[%s1 + $0x6c] sm:$0xf]
  %v158 = vld [vmem:[%s1 + $0x70] sm:$0xf]
  %v159 = vld [vmem:[%s1 + $0x74] sm:$0xf]
  %v160 = vld [vmem:[%s1 + $0x78] sm:$0xf]
  %v161 = vld [vmem:[%s1 + $0x7c] sm:$0xf]
  %v162 = vld [vmem:[%s1 + $0x80] sm:$0xf]
  %v163 = vld [vmem:[%s1 + $0x84] sm:$0xf]
  %v164 = vld [vmem:[%s1 + $0x88] sm:$0xf]
  %v165 = vld [vmem:[%s1 + $0x8c] sm:$0xf]
  %v278 = vunpack.c.l.b16 %v18
  %v279 = vunpack.c.h.b16 %v18
  %v280 = vunpack.c.l.b16 %v19
  %v281 = vunpack.c.l.b16 %v20
  %v282 = vunpack.c.h.b16 %v20
  %v283 = vunpack.c.l.b16 %v21
  %v284 = vunpack.c.l.b16 %v22
  %v285 = vunpack.c.h.b16 %v22
  %v286 = vunpack.c.l.b16 %v23
  %v287 = vunpack.c.l.b16 %v24
  %v288 = vunpack.c.h.b16 %v24
  %v289 = vunpack.c.l.b16 %v25
  %v290 = vunpack.c.l.b16 %v26
  %v291 = vunpack.c.h.b16 %v26
  %v292 = vunpack.c.l.b16 %v27
  %v293 = vunpack.c.l.b16 %v28
  %v294 = vunpack.c.h.b16 %v28
  %v295 = vunpack.c.l.b16 %v29
  %v296 = vunpack.c.l.b16 %v30
  %v297 = vunpack.c.h.b16 %v30
  %v298 = vunpack.c.l.b16 %v31
  %v299 = vunpack.c.l.b16 %v32
  %v300 = vunpack.c.h.b16 %v32
  %v301 = vunpack.c.l.b16 %v33
  %v302 = vunpack.c.l.b16 %v34
  %v303 = vunpack.c.h.b16 %v34
  %v304 = vunpack.c.l.b16 %v35
  %v305 = vunpack.c.l.b16 %v36
  %v306 = vunpack.c.h.b16 %v36
  %v307 = vunpack.c.l.b16 %v37
  %v308 = vunpack.c.l.b16 %v38
  %v309 = vunpack.c.h.b16 %v38
  %v310 = vunpack.c.l.b16 %v39
  %v311 = vunpack.c.l.b16 %v40
  %v312 = vunpack.c.h.b16 %v40
  %v313 = vunpack.c.l.b16 %v41
  %v314 = vunpack.c.l.b16 %v42
  %v315 = vunpack.c.h.b16 %v42
  %v316 = vunpack.c.l.b16 %v43
  %v317 = vunpack.c.l.b16 %v44
  %v318 = vunpack.c.h.b16 %v44
  %v319 = vunpack.c.l.b16 %v45
  %v320 = vunpack.c.l.b16 %v46
  %v321 = vunpack.c.h.b16 %v46
  %v322 = vunpack.c.l.b16 %v47
  %v323 = vunpack.c.l.b16 %v48
  %v324 = vunpack.c.h.b16 %v48
  %v325 = vunpack.c.l.b16 %v49
  %v326 = vunpack.c.l.b16 %v50
  %v327 = vunpack.c.h.b16 %v50
  %v328 = vunpack.c.l.b16 %v51
  %v329 = vunpack.c.l.b16 %v52
  %v330 = vunpack.c.h.b16 %v52
  %v331 = vunpack.c.l.b16 %v53
  %v332 = vunpack.c.l.b16 %v54
  %v333 = vunpack.c.h.b16 %v54
  %v334 = vunpack.c.l.b16 %v55
  %v335 = vunpack.c.l.b16 %v56
  %v336 = vunpack.c.h.b16 %v56
  %v337 = vunpack.c.l.b16 %v57
  %v338 = vunpack.c.l.b16 %v58
  %v339 = vunpack.c.h.b16 %v58
  %v340 = vunpack.c.l.b16 %v59
  %v341 = vunpack.c.l.b16 %v60
  %v342 = vunpack.c.h.b16 %v60
  %v343 = vunpack.c.l.b16 %v61
  %v344 = vunpack.c.l.b16 %v62
  %v345 = vunpack.c.h.b16 %v62
  %v346 = vunpack.c.l.b16 %v63
  %v347 = vunpack.c.l.b16 %v64
  %v348 = vunpack.c.h.b16 %v64
  %v349 = vunpack.c.l.b16 %v65
  %v350 = vunpack.c.l.b16 %v66
  %v351 = vunpack.c.h.b16 %v66
  %v352 = vunpack.c.l.b16 %v67
  %v353 = vunpack.c.l.b16 %v68
  %v354 = vunpack.c.h.b16 %v68
  %v355 = vunpack.c.l.b16 %v69
  %v356 = vunpack.c.l.b16 %v70
  %v357 = vunpack.c.h.b16 %v70
  %v358 = vunpack.c.l.b16 %v71
  %v359 = vunpack.c.l.b16 %v72
  %v360 = vunpack.c.h.b16 %v72
  %v361 = vunpack.c.l.b16 %v73
  %v362 = vunpack.c.l.b16 %v74
  %v363 = vunpack.c.h.b16 %v74
  %v364 = vunpack.c.l.b16 %v75
  %v365 = vunpack.c.l.b16 %v76
  %v366 = vunpack.c.h.b16 %v76
  %v367 = vunpack.c.l.b16 %v77
  %v368 = vunpack.c.l.b16 %v78
  %v369 = vunpack.c.h.b16 %v78
  %v370 = vunpack.c.l.b16 %v79
  %v371 = vunpack.c.l.b16 %v80
  %v372 = vunpack.c.h.b16 %v80
  %v373 = vunpack.c.l.b16 %v81
  %v374 = vunpack.c.l.b16 %v82
  %v375 = vunpack.c.h.b16 %v82
  %v376 = vunpack.c.l.b16 %v83
  %v377 = vunpack.c.l.b16 %v84
  %v378 = vunpack.c.h.b16 %v84
  %v379 = vunpack.c.l.b16 %v85
  %v380 = vunpack.c.l.b16 %v86
  %v381 = vunpack.c.h.b16 %v86
  %v382 = vunpack.c.l.b16 %v87
  %v383 = vunpack.c.l.b16 %v88
  %v384 = vunpack.c.h.b16 %v88
  %v385 = vunpack.c.l.b16 %v89
  %v386 = vunpack.c.l.b16 %v90
  %v387 = vunpack.c.h.b16 %v90
  %v388 = vunpack.c.l.b16 %v91
  %v389 = vunpack.c.l.b16 %v92
  %v390 = vunpack.c.h.b16 %v92
  %v391 = vunpack.c.l.b16 %v93
  %v392 = vunpack.c.l.b16 %v94
  %v393 = vunpack.c.h.b16 %v94
  %v394 = vunpack.c.l.b16 %v95
  %v395 = vunpack.c.l.b16 %v96
  %v396 = vunpack.c.h.b16 %v96
  %v397 = vunpack.c.l.b16 %v97
  %v398 = vunpack.c.l.b16 %v98
  %v399 = vunpack.c.h.b16 %v98
  %v400 = vunpack.c.l.b16 %v99
  %v401 = vunpack.c.l.b16 %v100
  %v402 = vunpack.c.h.b16 %v100
  %v403 = vunpack.c.l.b16 %v101
  %v404 = vunpack.c.l.b16 %v102
  %v405 = vunpack.c.h.b16 %v102
  %v406 = vunpack.c.l.b16 %v103
  %v407 = vunpack.c.l.b16 %v104
  %v408 = vunpack.c.h.b16 %v104
  %v409 = vunpack.c.l.b16 %v105
  %v410 = vunpack.c.l.b16 %v106
  %v411 = vunpack.c.h.b16 %v106
  %v412 = vunpack.c.l.b16 %v107
  %v413 = vunpack.c.l.b16 %v108
  %v414 = vunpack.c.h.b16 %v108
  %v415 = vunpack.c.l.b16 %v109
  %v416 = vunpack.c.l.b16 %v110
  %v417 = vunpack.c.h.b16 %v110
  %v418 = vunpack.c.l.b16 %v111
  %v419 = vunpack.c.l.b16 %v112
  %v420 = vunpack.c.h.b16 %v112
  %v421 = vunpack.c.l.b16 %v113
  %v422 = vunpack.c.l.b16 %v114
  %v423 = vunpack.c.h.b16 %v114
  %v424 = vunpack.c.l.b16 %v115
  %v425 = vunpack.c.l.b16 %v116
  %v426 = vunpack.c.h.b16 %v116
  %v427 = vunpack.c.l.b16 %v117
  %v428 = vunpack.c.l.b16 %v118
  %v429 = vunpack.c.h.b16 %v118
  %v430 = vunpack.c.l.b16 %v119
  %v431 = vunpack.c.l.b16 %v120
  %v432 = vunpack.c.h.b16 %v120
  %v433 = vunpack.c.l.b16 %v121
  %v434 = vunpack.c.l.b16 %v122
  %v435 = vunpack.c.h.b16 %v122
  %v436 = vunpack.c.l.b16 %v123
  %v437 = vunpack.c.l.b16 %v124
  %v438 = vunpack.c.h.b16 %v124
  %v439 = vunpack.c.l.b16 %v125
  %v440 = vunpack.c.l.b16 %v126
  %v441 = vunpack.c.h.b16 %v126
  %v442 = vunpack.c.l.b16 %v127
  %v443 = vunpack.c.l.b16 %v128
  %v444 = vunpack.c.h.b16 %v128
  %v445 = vunpack.c.l.b16 %v129
  %v446 = vpack.c.b16 %v281, %v278
  %v447 = vpack.c.b16 %v282, %v279
  %v448 = vpack.c.b16 %v283, %v280
  %v449 = vpack.c.b16 %v287, %v284
  %v450 = vpack.c.b16 %v288, %v285
  %v451 = vpack.c.b16 %v289, %v286
  %v452 = vpack.c.b16 %v293, %v290
  %v453 = vpack.c.b16 %v294, %v291
  %v454 = vpack.c.b16 %v295, %v292
  %v455 = vpack.c.b16 %v299, %v296
  %v456 = vpack.c.b16 %v300, %v297
  %v457 = vpack.c.b16 %v301, %v298
  %v458 = vpack.c.b16 %v305, %v302
  %v459 = vpack.c.b16 %v306, %v303
  %v460 = vpack.c.b16 %v307, %v304
  %v461 = vpack.c.b16 %v311, %v308
  %v462 = vpack.c.b16 %v312, %v309
  %v463 = vpack.c.b16 %v313, %v310
  %v464 = vpack.c.b16 %v317, %v314
  %v465 = vpack.c.b16 %v318, %v315
  %v466 = vpack.c.b16 %v319, %v316
  %v467 = vpack.c.b16 %v323, %v320
  %v468 = vpack.c.b16 %v324, %v321
  %v469 = vpack.c.b16 %v325, %v322
  %v470 = vpack.c.b16 %v329, %v326
  %v471 = vpack.c.b16 %v330, %v327
  %v472 = vpack.c.b16 %v331, %v328
  %v473 = vpack.c.b16 %v335, %v332
  %v474 = vpack.c.b16 %v336, %v333
  %v475 = vpack.c.b16 %v337, %v334
  %v476 = vpack.c.b16 %v341, %v338
  %v477 = vpack.c.b16 %v342, %v339
  %v478 = vpack.c.b16 %v343, %v340
  %v479 = vpack.c.b16 %v347, %v344
  %v480 = vpack.c.b16 %v348, %v345
  %v481 = vpack.c.b16 %v349, %v346
  %v482 = vpack.c.b16 %v353, %v350
  %v483 = vpack.c.b16 %v354, %v351
  %v484 = vpack.c.b16 %v355, %v352
  %v485 = vpack.c.b16 %v359, %v356
  %v486 = vpack.c.b16 %v360, %v357
  %v487 = vpack.c.b16 %v361, %v358
  %v488 = vpack.c.b16 %v365, %v362
  %v489 = vpack.c.b16 %v366, %v363
  %v490 = vpack.c.b16 %v367, %v364
  %v491 = vpack.c.b16 %v371, %v368
  %v492 = vpack.c.b16 %v372, %v369
  %v493 = vpack.c.b16 %v373, %v370
  %v494 = vpack.c.b16 %v377, %v374
  %v495 = vpack.c.b16 %v378, %v375
  %v496 = vpack.c.b16 %v379, %v376
  %v497 = vpack.c.b16 %v383, %v380
  %v498 = vpack.c.b16 %v384, %v381
  %v499 = vpack.c.b16 %v385, %v382
  %v500 = vpack.c.b16 %v389, %v386
  %v501 = vpack.c.b16 %v390, %v387
  %v502 = vpack.c.b16 %v391, %v388
  %v503 = vpack.c.b16 %v395, %v392
  %v504 = vpack.c.b16 %v396, %v393
  %v505 = vpack.c.b16 %v397, %v394
  %v506 = vpack.c.b16 %v401, %v398
  %v507 = vpack.c.b16 %v402, %v399
  %v508 = vpack.c.b16 %v403, %v400
  %v509 = vpack.c.b16 %v407, %v404
  %v510 = vpack.c.b16 %v408, %v405
  %v511 = vpack.c.b16 %v409, %v406
  %v512 = vpack.c.b16 %v413, %v410
  %v513 = vpack.c.b16 %v414, %v411
  %v514 = vpack.c.b16 %v415, %v412
  %v515 = vpack.c.b16 %v419, %v416
  %v516 = vpack.c.b16 %v420, %v417
  %v517 = vpack.c.b16 %v421, %v418
  %v518 = vpack.c.b16 %v425, %v422
  %v519 = vpack.c.b16 %v426, %v423
  %v520 = vpack.c.b16 %v427, %v424
  %v521 = vpack.c.b16 %v431, %v428
  %v522 = vpack.c.b16 %v432, %v429
  %v523 = vpack.c.b16 %v433, %v430
  %v524 = vpack.c.b16 %v437, %v434
  %v525 = vpack.c.b16 %v438, %v435
  %v526 = vpack.c.b16 %v439, %v436
  %v527 = vpack.c.b16 %v443, %v440
  %v528 = vpack.c.b16 %v444, %v441
  %v529 = vpack.c.b16 %v445, %v442
  %v622 = vunpack.c.l.b16 %v130
  %v623 = vunpack.c.l.b16 %v131
  %v624 = vunpack.c.l.b16 %v132
  %v625 = vunpack.c.l.b16 %v133
  %v626 = vunpack.c.l.b16 %v134
  %v627 = vunpack.c.l.b16 %v135
  %v628 = vunpack.c.l.b16 %v136
  %v629 = vunpack.c.l.b16 %v137
  %v630 = vunpack.c.l.b16 %v138
  %v631 = vunpack.c.l.b16 %v139
  %v632 = vunpack.c.l.b16 %v140
  %v633 = vunpack.c.l.b16 %v141
  %v634 = vunpack.c.l.b16 %v142
  %v635 = vunpack.c.l.b16 %v143
  %v636 = vunpack.c.l.b16 %v144
  %v637 = vunpack.c.l.b16 %v145
  %v638 = vunpack.c.l.b16 %v146
  %v639 = vunpack.c.l.b16 %v147
  %v640 = vunpack.c.l.b16 %v148
  %v641 = vunpack.c.l.b16 %v149
  %v642 = vunpack.c.l.b16 %v150
  %v643 = vunpack.c.l.b16 %v151
  %v644 = vunpack.c.l.b16 %v152
  %v645 = vunpack.c.l.b16 %v153
  %v646 = vunpack.c.l.b16 %v154
  %v647 = vunpack.c.l.b16 %v155
  %v648 = vunpack.c.l.b16 %v156
  %v649 = vunpack.c.l.b16 %v157
  %v650 = vunpack.c.l.b16 %v158
  %v651 = vunpack.c.l.b16 %v159
  %v652 = vunpack.c.l.b16 %v160
  %v653 = vunpack.c.l.b16 %v161
  %v654 = vunpack.c.l.b16 %v162
  %v655 = vunpack.c.l.b16 %v163
  %v656 = vunpack.c.l.b16 %v164
  %v657 = vunpack.c.l.b16 %v165
  %v658 = vpack.c.b16 %v623, %v622
  %v659 = vpack.c.b16 %v625, %v624
  %v660 = vpack.c.b16 %v627, %v626
  %v661 = vpack.c.b16 %v629, %v628
  %v662 = vpack.c.b16 %v631, %v630
  %v663 = vpack.c.b16 %v633, %v632
  %v664 = vpack.c.b16 %v635, %v634
  %v665 = vpack.c.b16 %v637, %v636
  %v666 = vpack.c.b16 %v639, %v638
  %v667 = vpack.c.b16 %v641, %v640
  %v668 = vpack.c.b16 %v643, %v642
  %v669 = vpack.c.b16 %v645, %v644
  %v670 = vpack.c.b16 %v647, %v646
  %v671 = vpack.c.b16 %v649, %v648
  %v672 = vpack.c.b16 %v651, %v650
  %v673 = vpack.c.b16 %v653, %v652
  %v674 = vpack.c.b16 %v655, %v654
  %v675 = vpack.c.b16 %v657, %v656
  %vm694 = vcmask 261120
  %v696 = vsel %vm694, %v448, 0
  %v699 = vsel %vm694, %v451, 0
  %v702 = vsel %vm694, %v454, 0
  %v705 = vsel %vm694, %v457, 0
  %v708 = vsel %vm694, %v460, 0
  %v711 = vsel %vm694, %v463, 0
  %v714 = vsel %vm694, %v466, 0
  %v717 = vsel %vm694, %v469, 0
  %v720 = vsel %vm694, %v472, 0
  %v723 = vsel %vm694, %v475, 0
  %v726 = vsel %vm694, %v478, 0
  %v729 = vsel %vm694, %v481, 0
  %v732 = vsel %vm694, %v484, 0
  %v735 = vsel %vm694, %v487, 0
  %v738 = vsel %vm694, %v490, 0
  %v741 = vsel %vm694, %v493, 0
  %v744 = vsel %vm694, %v496, 0
  %v747 = vsel %vm694, %v499, 0
  %v750 = vsel %vm694, %v502, 0
  %v753 = vsel %vm694, %v505, 0
  %v756 = vsel %vm694, %v508, 0
  %v759 = vsel %vm694, %v511, 0
  %v762 = vsel %vm694, %v514, 0
  %v765 = vsel %vm694, %v517, 0
  %v768 = vsel %vm694, %v520, 0
  %v771 = vsel %vm694, %v523, 0
  %v774 = vsel %vm694, %v526, 0
  %v777 = vsel %vm694, %v529, 0
  %779 = vmatprep.subr.bf16.mxu0 0
  %780 = vmatpush1.bf16.msra.mxu0 %v665
  %781 = vmatprep.subr.bf16.mxu0 0
  %782 = vmatpush1.bf16.msra.mxu0 %v664
  %783 = vmatprep.subr.bf16.mxu0 0
  %784 = vmatpush1.bf16.msra.mxu0 %v663
  %785 = vmatprep.subr.bf16.mxu0 0
  %786 = vmatpush1.bf16.msra.mxu0 %v662
  %787 = vmatprep.subr.bf16.mxu0 0
  %788 = vmatpush1.bf16.msra.mxu0 %v661
  %789 = vmatprep.subr.bf16.mxu0 0
  %790 = vmatpush1.bf16.msra.mxu0 %v660
  %791 = vmatprep.subr.bf16.mxu0 0
  %792 = vmatpush1.bf16.msra.mxu0 %v659
  %793 = vmatprep.subr.bf16.mxu0 0
  %794 = vmatpush1.bf16.msra.mxu0 %v658
  %795 = vmatprep.subr.bf16.mxu0 0
  %796 = vmatpush2.bf16.msra.mxu0 %v673
  %797 = vmatprep.subr.bf16.mxu0 0
  %798 = vmatpush2.bf16.msra.mxu0 %v672
  %799 = vmatprep.subr.bf16.mxu0 0
  %800 = vmatpush2.bf16.msra.mxu0 %v671
  %801 = vmatprep.subr.bf16.mxu0 0
  %802 = vmatpush2.bf16.msra.mxu0 %v670
  %803 = vmatprep.subr.bf16.mxu0 0
  %804 = vmatpush2.bf16.msra.mxu0 %v669
  %805 = vmatprep.subr.bf16.mxu0 0
  %806 = vmatpush2.bf16.msra.mxu0 %v668
  %807 = vmatprep.subr.bf16.mxu0 0
  %808 = vmatpush2.bf16.msra.mxu0 %v667
  %809 = vmatprep.subr.bf16.mxu0 0
  %810 = vmatpush2.bf16.msra.mxu0 %v666
  %811 = vmatprep.mubr.bf16.mxu0 %v447
  %812 = vmatmul.mubr.bf16.gmra.mxu0 %v446
  %v813 = vpop.f32.mrf.mxu0
  %v814 = vadd.f32 0.0, %v813
  %v815 = vpop.f32.mrf.mxu0
  %v816 = vpop.f32.mrf.mxu0
  %v817 = vadd.f32 0.0, %v816
  %v818 = vpop.f32.mrf.mxu0
  %819 = vmatprep.mubr.bf16.mxu0 %v450
  %820 = vmatmul.mubr.bf16.gmra.mxu0 %v449
  %v821 = vpop.f32.mrf.mxu0
  %v822 = vadd.f32 0.0, %v821
  %v823 = vpop.f32.mrf.mxu0
  %v824 = vpop.f32.mrf.mxu0
  %v825 = vadd.f32 0.0, %v824
  %v826 = vpop.f32.mrf.mxu0
  %827 = vmatprep.mubr.bf16.mxu0 %v453
  %828 = vmatmul.mubr.bf16.gmra.mxu0 %v452
  %v829 = vpop.f32.mrf.mxu0
  %v830 = vadd.f32 0.0, %v829
  %v831 = vpop.f32.mrf.mxu0
  %v832 = vpop.f32.mrf.mxu0
  %v833 = vadd.f32 0.0, %v832
  %v834 = vpop.f32.mrf.mxu0
  %835 = vmatprep.mubr.bf16.mxu0 %v456
  %836 = vmatmul.mubr.bf16.gmra.mxu0 %v455
  %v837 = vpop.f32.mrf.mxu0
  %v838 = vadd.f32 0.0, %v837
  %v839 = vpop.f32.mrf.mxu0
  %v840 = vpop.f32.mrf.mxu0
  %v841 = vadd.f32 0.0, %v840
  %v842 = vpop.f32.mrf.mxu0
  %843 = vmatprep.mubr.bf16.mxu0 %v459
  %844 = vmatmul.mubr.bf16.gmra.mxu0 %v458
  %v845 = vpop.f32.mrf.mxu0
  %v846 = vadd.f32 0.0, %v845
  %v847 = vpop.f32.mrf.mxu0
  %v848 = vpop.f32.mrf.mxu0
  %v849 = vadd.f32 0.0, %v848
  %v850 = vpop.f32.mrf.mxu0
  %851 = vmatprep.mubr.bf16.mxu0 %v462
  %852 = vmatmul.mubr.bf16.gmra.mxu0 %v461
  %v853 = vpop.f32.mrf.mxu0
  %v854 = vadd.f32 0.0, %v853
  %v855 = vpop.f32.mrf.mxu0
  %v856 = vpop.f32.mrf.mxu0
  %v857 = vadd.f32 0.0, %v856
  %v858 = vpop.f32.mrf.mxu0
  %859 = vmatprep.mubr.bf16.mxu0 %v465
  %860 = vmatmul.mubr.bf16.gmra.mxu0 %v464
  %v861 = vpop.f32.mrf.mxu0
  %v862 = vadd.f32 0.0, %v861
  %v863 = vpop.f32.mrf.mxu0
  %v864 = vpop.f32.mrf.mxu0
  %v865 = vadd.f32 0.0, %v864
  %v866 = vpop.f32.mrf.mxu0
  %867 = vmatprep.mubr.bf16.mxu0 %v468
  %868 = vmatmul.mubr.bf16.gmra.mxu0 %v467
  %v869 = vpop.f32.mrf.mxu0
  %v870 = vadd.f32 0.0, %v869
  %v871 = vpop.f32.mrf.mxu0
  %v872 = vpop.f32.mrf.mxu0
  %v873 = vadd.f32 0.0, %v872
  %v874 = vpop.f32.mrf.mxu0
  %875 = vmatprep.mubr.bf16.mxu0 %v471
  %876 = vmatmul.mubr.bf16.gmra.mxu0 %v470
  %v877 = vpop.f32.mrf.mxu0
  %v878 = vadd.f32 0.0, %v877
  %v879 = vpop.f32.mrf.mxu0
  %v880 = vpop.f32.mrf.mxu0
  %v881 = vadd.f32 0.0, %v880
  %v882 = vpop.f32.mrf.mxu0
  %883 = vmatprep.mubr.bf16.mxu0 %v474
  %884 = vmatmul.mubr.bf16.gmra.mxu0 %v473
  %v885 = vpop.f32.mrf.mxu0
  %v886 = vadd.f32 0.0, %v885
  %v887 = vpop.f32.mrf.mxu0
  %v888 = vpop.f32.mrf.mxu0
  %v889 = vadd.f32 0.0, %v888
  %v890 = vpop.f32.mrf.mxu0
  %891 = vmatprep.mubr.bf16.mxu0 %v477
  %892 = vmatmul.mubr.bf16.gmra.mxu0 %v476
  %v893 = vpop.f32.mrf.mxu0
  %v894 = vadd.f32 0.0, %v893
  %v895 = vpop.f32.mrf.mxu0
  %v896 = vpop.f32.mrf.mxu0
  %v897 = vadd.f32 0.0, %v896
  %v898 = vpop.f32.mrf.mxu0
  %899 = vmatprep.mubr.bf16.mxu0 %v480
  %900 = vmatmul.mubr.bf16.gmra.mxu0 %v479
  %v901 = vpop.f32.mrf.mxu0
  %v902 = vadd.f32 0.0, %v901
  %v903 = vpop.f32.mrf.mxu0
  %v904 = vpop.f32.mrf.mxu0
  %v905 = vadd.f32 0.0, %v904
  %v906 = vpop.f32.mrf.mxu0
  %907 = vmatprep.mubr.bf16.mxu0 %v483
  %908 = vmatmul.mubr.bf16.gmra.mxu0 %v482
  %v909 = vpop.f32.mrf.mxu0
  %v910 = vadd.f32 0.0, %v909
  %v911 = vpop.f32.mrf.mxu0
  %v912 = vpop.f32.mrf.mxu0
  %v913 = vadd.f32 0.0, %v912
  %v914 = vpop.f32.mrf.mxu0
  %915 = vmatprep.mubr.bf16.mxu0 %v486
  %916 = vmatmul.mubr.bf16.gmra.mxu0 %v485
  %v917 = vpop.f32.mrf.mxu0
  %v918 = vadd.f32 0.0, %v917
  %v919 = vpop.f32.mrf.mxu0
  %v920 = vpop.f32.mrf.mxu0
  %v921 = vadd.f32 0.0, %v920
  %v922 = vpop.f32.mrf.mxu0
  %923 = vmatprep.mubr.bf16.mxu0 %v489
  %924 = vmatmul.mubr.bf16.gmra.mxu0 %v488
  %v925 = vpop.f32.mrf.mxu0
  %v926 = vadd.f32 0.0, %v925
  %v927 = vpop.f32.mrf.mxu0
  %v928 = vpop.f32.mrf.mxu0
  %v929 = vadd.f32 0.0, %v928
  %v930 = vpop.f32.mrf.mxu0
  %931 = vmatprep.mubr.bf16.mxu0 %v492
  %932 = vmatmul.mubr.bf16.gmra.mxu0 %v491
  %v933 = vpop.f32.mrf.mxu0
  %v934 = vadd.f32 0.0, %v933
  %v935 = vpop.f32.mrf.mxu0
  %v936 = vpop.f32.mrf.mxu0
  %v937 = vadd.f32 0.0, %v936
  %v938 = vpop.f32.mrf.mxu0
  %939 = vmatprep.mubr.bf16.mxu0 %v495
  %940 = vmatmul.mubr.bf16.gmra.mxu0 %v494
  %v941 = vpop.f32.mrf.mxu0
  %v942 = vadd.f32 0.0, %v941
  %v943 = vpop.f32.mrf.mxu0
  %v944 = vpop.f32.mrf.mxu0
  %v945 = vadd.f32 0.0, %v944
  %v946 = vpop.f32.mrf.mxu0
  %947 = vmatprep.mubr.bf16.mxu0 %v498
  %948 = vmatmul.mubr.bf16.gmra.mxu0 %v497
  %v949 = vpop.f32.mrf.mxu0
  %v950 = vadd.f32 0.0, %v949
  %v951 = vpop.f32.mrf.mxu0
  %v952 = vpop.f32.mrf.mxu0
  %v953 = vadd.f32 0.0, %v952
  %v954 = vpop.f32.mrf.mxu0
  %955 = vmatprep.mubr.bf16.mxu0 %v501
  %956 = vmatmul.mubr.bf16.gmra.mxu0 %v500
  %v957 = vpop.f32.mrf.mxu0
  %v958 = vadd.f32 0.0, %v957
  %v959 = vpop.f32.mrf.mxu0
  %v960 = vpop.f32.mrf.mxu0
  %v961 = vadd.f32 0.0, %v960
  %v962 = vpop.f32.mrf.mxu0
  %963 = vmatprep.mubr.bf16.mxu0 %v504
  %964 = vmatmul.mubr.bf16.gmra.mxu0 %v503
  %v965 = vpop.f32.mrf.mxu0
  %v966 = vadd.f32 0.0, %v965
  %v967 = vpop.f32.mrf.mxu0
  %v968 = vpop.f32.mrf.mxu0
  %v969 = vadd.f32 0.0, %v968
  %v970 = vpop.f32.mrf.mxu0
  %971 = vmatprep.mubr.bf16.mxu0 %v507
  %972 = vmatmul.mubr.bf16.gmra.mxu0 %v506
  %v973 = vpop.f32.mrf.mxu0
  %v974 = vadd.f32 0.0, %v973
  %v975 = vpop.f32.mrf.mxu0
  %v976 = vpop.f32.mrf.mxu0
  %v977 = vadd.f32 0.0, %v976
  %v978 = vpop.f32.mrf.mxu0
  %979 = vmatprep.mubr.bf16.mxu0 %v510
  %980 = vmatmul.mubr.bf16.gmra.mxu0 %v509
  %v981 = vpop.f32.mrf.mxu0
  %v982 = vadd.f32 0.0, %v981
  %v983 = vpop.f32.mrf.mxu0
  %v984 = vpop.f32.mrf.mxu0
  %v985 = vadd.f32 0.0, %v984
  %v986 = vpop.f32.mrf.mxu0
  %987 = vmatprep.mubr.bf16.mxu0 %v513
  %988 = vmatmul.mubr.bf16.gmra.mxu0 %v512
  %v989 = vpop.f32.mrf.mxu0
  %v990 = vadd.f32 0.0, %v989
  %v991 = vpop.f32.mrf.mxu0
  %v992 = vpop.f32.mrf.mxu0
  %v993 = vadd.f32 0.0, %v992
  %v994 = vpop.f32.mrf.mxu0
  %995 = vmatprep.mubr.bf16.mxu0 %v516
  %996 = vmatmul.mubr.bf16.gmra.mxu0 %v515
  %v997 = vpop.f32.mrf.mxu0
  %v998 = vadd.f32 0.0, %v997
  %v999 = vpop.f32.mrf.mxu0
  %v1000 = vpop.f32.mrf.mxu0
  %v1001 = vadd.f32 0.0, %v1000
  %v1002 = vpop.f32.mrf.mxu0
  %1003 = vmatprep.mubr.bf16.mxu0 %v519
  %1004 = vmatmul.mubr.bf16.gmra.mxu0 %v518
  %v1005 = vpop.f32.mrf.mxu0
  %v1006 = vadd.f32 0.0, %v1005
  %v1007 = vpop.f32.mrf.mxu0
  %v1008 = vpop.f32.mrf.mxu0
  %v1009 = vadd.f32 0.0, %v1008
  %v1010 = vpop.f32.mrf.mxu0
  %1011 = vmatprep.mubr.bf16.mxu0 %v522
  %1012 = vmatmul.mubr.bf16.gmra.mxu0 %v521
  %v1013 = vpop.f32.mrf.mxu0
  %v1014 = vadd.f32 0.0, %v1013
  %v1015 = vpop.f32.mrf.mxu0
  %v1016 = vpop.f32.mrf.mxu0
  %v1017 = vadd.f32 0.0, %v1016
  %v1018 = vpop.f32.mrf.mxu0
  %1019 = vmatprep.mubr.bf16.mxu0 %v525
  %1020 = vmatmul.mubr.bf16.gmra.mxu0 %v524
  %v1021 = vpop.f32.mrf.mxu0
  %v1022 = vadd.f32 0.0, %v1021
  %v1023 = vpop.f32.mrf.mxu0
  %v1024 = vpop.f32.mrf.mxu0
  %v1025 = vadd.f32 0.0, %v1024
  %v1026 = vpop.f32.mrf.mxu0
  %1027 = vmatprep.mubr.bf16.mxu0 %v528
  %1028 = vmatmul.mubr.bf16.gmra.mxu0 %v527
  %v1029 = vpop.f32.mrf.mxu0
  %v1030 = vadd.f32 0.0, %v1029
  %v1031 = vpop.f32.mrf.mxu0
  %v1032 = vpop.f32.mrf.mxu0
  %v1033 = vadd.f32 0.0, %v1032
  %v1034 = vpop.f32.mrf.mxu0
  %1035 = vdwg.mxu0
  %1036 = vmatprep.subr.bf16.mxu0 0
  %1037 = vmatpush1.bf16.msra.mxu0 0
  %1038 = vmatprep.subr.bf16.mxu0 0
  %1039 = vmatpush1.bf16.msra.mxu0 0
  %1040 = vmatprep.subr.bf16.mxu0 0
  %1041 = vmatpush1.bf16.msra.mxu0 0
  %1042 = vmatprep.subr.bf16.mxu0 0
  %1043 = vmatpush1.bf16.msra.mxu0 0
  %1044 = vmatprep.subr.bf16.mxu0 0
  %1045 = vmatpush1.bf16.msra.mxu0 0
  %1046 = vmatprep.subr.bf16.mxu0 0
  %1047 = vmatpush1.bf16.msra.mxu0 0
  %1048 = vmatprep.subr.bf16.mxu0 0
  %1049 = vmatpush1.bf16.msra.mxu0 %v675
  %1050 = vmatprep.subr.bf16.mxu0 0
  %1051 = vmatpush1.bf16.msra.mxu0 %v674
  %1052 = vmatprep.subr.bf16.mxu0 0
  %1053 = vmatpush2.bf16.msra.mxu0 0
  %1054 = vmatprep.subr.bf16.mxu0 0
  %1055 = vmatpush2.bf16.msra.mxu0 0
  %1056 = vmatprep.subr.bf16.mxu0 0
  %1057 = vmatpush2.bf16.msra.mxu0 0
  %1058 = vmatprep.subr.bf16.mxu0 0
  %1059 = vmatpush2.bf16.msra.mxu0 0
  %1060 = vmatprep.subr.bf16.mxu0 0
  %1061 = vmatpush2.bf16.msra.mxu0 0
  %1062 = vmatprep.subr.bf16.mxu0 0
  %1063 = vmatpush2.bf16.msra.mxu0 0
  %1064 = vmatprep.subr.bf16.mxu0 0
  %1065 = vmatpush2.bf16.msra.mxu0 0
  %1066 = vmatprep.subr.bf16.mxu0 0
  %1067 = vmatpush2.bf16.msra.mxu0 0
  %1068 = vmatprep.mubr.bf16.mxu0 0
  %1069 = vmatmul.mubr.bf16.gmra.mxu0 %v696
  %v1070 = vpop.f32.mrf.mxu0
  %v1071 = vadd.f32 %v814, %v1070
  %v1072 = vpop.f32.mrf.mxu0
  %v1073 = vpop.f32.mrf.mxu0
  %v1074 = vadd.f32 %v817, %v1073
  %v1075 = vpop.f32.mrf.mxu0
  %1076 = vmatprep.mubr.bf16.mxu0 0
  %1077 = vmatmul.mubr.bf16.gmra.mxu0 %v699
  %v1078 = vpop.f32.mrf.mxu0
  %v1079 = vadd.f32 %v822, %v1078
  %v1080 = vpop.f32.mrf.mxu0
  %v1081 = vpop.f32.mrf.mxu0
  %v1082 = vadd.f32 %v825, %v1081
  %v1083 = vpop.f32.mrf.mxu0
  %1084 = vmatprep.mubr.bf16.mxu0 0
  %1085 = vmatmul.mubr.bf16.gmra.mxu0 %v702
  %v1086 = vpop.f32.mrf.mxu0
  %v1087 = vadd.f32 %v830, %v1086
  %v1088 = vpop.f32.mrf.mxu0
  %v1089 = vpop.f32.mrf.mxu0
  %v1090 = vadd.f32 %v833, %v1089
  %v1091 = vpop.f32.mrf.mxu0
  %1092 = vmatprep.mubr.bf16.mxu0 0
  %1093 = vmatmul.mubr.bf16.gmra.mxu0 %v705
  %v1094 = vpop.f32.mrf.mxu0
  %v1095 = vadd.f32 %v838, %v1094
  %v1096 = vpop.f32.mrf.mxu0
  %v1097 = vpop.f32.mrf.mxu0
  %v1098 = vadd.f32 %v841, %v1097
  %v1099 = vpop.f32.mrf.mxu0
  %1100 = vmatprep.mubr.bf16.mxu0 0
  %1101 = vmatmul.mubr.bf16.gmra.mxu0 %v708
  %v1102 = vpop.f32.mrf.mxu0
  %v1103 = vadd.f32 %v846, %v1102
  %v1104 = vpop.f32.mrf.mxu0
  %v1105 = vpop.f32.mrf.mxu0
  %v1106 = vadd.f32 %v849, %v1105
  %v1107 = vpop.f32.mrf.mxu0
  %1108 = vmatprep.mubr.bf16.mxu0 0
  %1109 = vmatmul.mubr.bf16.gmra.mxu0 %v711
  %v1110 = vpop.f32.mrf.mxu0
  %v1111 = vadd.f32 %v854, %v1110
  %v1112 = vpop.f32.mrf.mxu0
  %v1113 = vpop.f32.mrf.mxu0
  %v1114 = vadd.f32 %v857, %v1113
  %v1115 = vpop.f32.mrf.mxu0
  %1116 = vmatprep.mubr.bf16.mxu0 0
  %1117 = vmatmul.mubr.bf16.gmra.mxu0 %v714
  %v1118 = vpop.f32.mrf.mxu0
  %v1119 = vadd.f32 %v862, %v1118
  %v1120 = vpop.f32.mrf.mxu0
  %v1121 = vpop.f32.mrf.mxu0
  %v1122 = vadd.f32 %v865, %v1121
  %v1123 = vpop.f32.mrf.mxu0
  %1124 = vmatprep.mubr.bf16.mxu0 0
  %1125 = vmatmul.mubr.bf16.gmra.mxu0 %v717
  %v1126 = vpop.f32.mrf.mxu0
  %v1127 = vadd.f32 %v870, %v1126
  %v1128 = vpop.f32.mrf.mxu0
  %v1129 = vpop.f32.mrf.mxu0
  %v1130 = vadd.f32 %v873, %v1129
  %v1131 = vpop.f32.mrf.mxu0
  %1132 = vmatprep.mubr.bf16.mxu0 0
  %1133 = vmatmul.mubr.bf16.gmra.mxu0 %v720
  %v1134 = vpop.f32.mrf.mxu0
  %v1135 = vadd.f32 %v878, %v1134
  %v1136 = vpop.f32.mrf.mxu0
  %v1137 = vpop.f32.mrf.mxu0
  %v1138 = vadd.f32 %v881, %v1137
  %v1139 = vpop.f32.mrf.mxu0
  %1140 = vmatprep.mubr.bf16.mxu0 0
  %1141 = vmatmul.mubr.bf16.gmra.mxu0 %v723
  %v1142 = vpop.f32.mrf.mxu0
  %v1143 = vadd.f32 %v886, %v1142
  %v1144 = vpop.f32.mrf.mxu0
  %v1145 = vpop.f32.mrf.mxu0
  %v1146 = vadd.f32 %v889, %v1145
  %v1147 = vpop.f32.mrf.mxu0
  %1148 = vmatprep.mubr.bf16.mxu0 0
  %1149 = vmatmul.mubr.bf16.gmra.mxu0 %v726
  %v1150 = vpop.f32.mrf.mxu0
  %v1151 = vadd.f32 %v894, %v1150
  %v1152 = vpop.f32.mrf.mxu0
  %v1153 = vpop.f32.mrf.mxu0
  %v1154 = vadd.f32 %v897, %v1153
  %v1155 = vpop.f32.mrf.mxu0
  %1156 = vmatprep.mubr.bf16.mxu0 0
  %1157 = vmatmul.mubr.bf16.gmra.mxu0 %v729
  %v1158 = vpop.f32.mrf.mxu0
  %v1159 = vadd.f32 %v902, %v1158
  %v1160 = vpop.f32.mrf.mxu0
  %v1161 = vpop.f32.mrf.mxu0
  %v1162 = vadd.f32 %v905, %v1161
  %v1163 = vpop.f32.mrf.mxu0
  %1164 = vmatprep.mubr.bf16.mxu0 0
  %1165 = vmatmul.mubr.bf16.gmra.mxu0 %v732
  %v1166 = vpop.f32.mrf.mxu0
  %v1167 = vadd.f32 %v910, %v1166
  %v1168 = vpop.f32.mrf.mxu0
  %v1169 = vpop.f32.mrf.mxu0
  %v1170 = vadd.f32 %v913, %v1169
  %v1171 = vpop.f32.mrf.mxu0
  %1172 = vmatprep.mubr.bf16.mxu0 0
  %1173 = vmatmul.mubr.bf16.gmra.mxu0 %v735
  %v1174 = vpop.f32.mrf.mxu0
  %v1175 = vadd.f32 %v918, %v1174
  %v1176 = vpop.f32.mrf.mxu0
  %v1177 = vpop.f32.mrf.mxu0
  %v1178 = vadd.f32 %v921, %v1177
  %v1179 = vpop.f32.mrf.mxu0
  %1180 = vmatprep.mubr.bf16.mxu0 0
  %1181 = vmatmul.mubr.bf16.gmra.mxu0 %v738
  %v1182 = vpop.f32.mrf.mxu0
  %v1183 = vadd.f32 %v926, %v1182
  %v1184 = vpop.f32.mrf.mxu0
  %v1185 = vpop.f32.mrf.mxu0
  %v1186 = vadd.f32 %v929, %v1185
  %v1187 = vpop.f32.mrf.mxu0
  %1188 = vmatprep.mubr.bf16.mxu0 0
  %1189 = vmatmul.mubr.bf16.gmra.mxu0 %v741
  %v1190 = vpop.f32.mrf.mxu0
  %v1191 = vadd.f32 %v934, %v1190
  %v1192 = vpop.f32.mrf.mxu0
  %v1193 = vpop.f32.mrf.mxu0
  %v1194 = vadd.f32 %v937, %v1193
  %v1195 = vpop.f32.mrf.mxu0
  %1196 = vmatprep.mubr.bf16.mxu0 0
  %1197 = vmatmul.mubr.bf16.gmra.mxu0 %v744
  %v1198 = vpop.f32.mrf.mxu0
  %v1199 = vadd.f32 %v942, %v1198
  %v1200 = vpop.f32.mrf.mxu0
  %v1201 = vpop.f32.mrf.mxu0
  %v1202 = vadd.f32 %v945, %v1201
  %v1203 = vpop.f32.mrf.mxu0
  %1204 = vmatprep.mubr.bf16.mxu0 0
  %1205 = vmatmul.mubr.bf16.gmra.mxu0 %v747
  %v1206 = vpop.f32.mrf.mxu0
  %v1207 = vadd.f32 %v950, %v1206
  %v1208 = vpop.f32.mrf.mxu0
  %v1209 = vpop.f32.mrf.mxu0
  %v1210 = vadd.f32 %v953, %v1209
  %v1211 = vpop.f32.mrf.mxu0
  %1212 = vmatprep.mubr.bf16.mxu0 0
  %1213 = vmatmul.mubr.bf16.gmra.mxu0 %v750
  %v1214 = vpop.f32.mrf.mxu0
  %v1215 = vadd.f32 %v958, %v1214
  %v1216 = vpop.f32.mrf.mxu0
  %v1217 = vpop.f32.mrf.mxu0
  %v1218 = vadd.f32 %v961, %v1217
  %v1219 = vpop.f32.mrf.mxu0
  %1220 = vmatprep.mubr.bf16.mxu0 0
  %1221 = vmatmul.mubr.bf16.gmra.mxu0 %v753
  %v1222 = vpop.f32.mrf.mxu0
  %v1223 = vadd.f32 %v966, %v1222
  %v1224 = vpop.f32.mrf.mxu0
  %v1225 = vpop.f32.mrf.mxu0
  %v1226 = vadd.f32 %v969, %v1225
  %v1227 = vpop.f32.mrf.mxu0
  %1228 = vmatprep.mubr.bf16.mxu0 0
  %1229 = vmatmul.mubr.bf16.gmra.mxu0 %v756
  %v1230 = vpop.f32.mrf.mxu0
  %v1231 = vadd.f32 %v974, %v1230
  %v1232 = vpop.f32.mrf.mxu0
  %v1233 = vpop.f32.mrf.mxu0
  %v1234 = vadd.f32 %v977, %v1233
  %v1235 = vpop.f32.mrf.mxu0
  %1236 = vmatprep.mubr.bf16.mxu0 0
  %1237 = vmatmul.mubr.bf16.gmra.mxu0 %v759
  %v1238 = vpop.f32.mrf.mxu0
  %v1239 = vadd.f32 %v982, %v1238
  %v1240 = vpop.f32.mrf.mxu0
  %v1241 = vpop.f32.mrf.mxu0
  %v1242 = vadd.f32 %v985, %v1241
  %v1243 = vpop.f32.mrf.mxu0
  %1244 = vmatprep.mubr.bf16.mxu0 0
  %1245 = vmatmul.mubr.bf16.gmra.mxu0 %v762
  %v1246 = vpop.f32.mrf.mxu0
  %v1247 = vadd.f32 %v990, %v1246
  %v1248 = vpop.f32.mrf.mxu0
  %v1249 = vpop.f32.mrf.mxu0
  %v1250 = vadd.f32 %v993, %v1249
  %v1251 = vpop.f32.mrf.mxu0
  %1252 = vmatprep.mubr.bf16.mxu0 0
  %1253 = vmatmul.mubr.bf16.gmra.mxu0 %v765
  %v1254 = vpop.f32.mrf.mxu0
  %v1255 = vadd.f32 %v998, %v1254
  %v1256 = vpop.f32.mrf.mxu0
  %v1257 = vpop.f32.mrf.mxu0
  %v1258 = vadd.f32 %v1001, %v1257
  %v1259 = vpop.f32.mrf.mxu0
  %1260 = vmatprep.mubr.bf16.mxu0 0
  %1261 = vmatmul.mubr.bf16.gmra.mxu0 %v768
  %v1262 = vpop.f32.mrf.mxu0
  %v1263 = vadd.f32 %v1006, %v1262
  %v1264 = vpop.f32.mrf.mxu0
  %v1265 = vpop.f32.mrf.mxu0
  %v1266 = vadd.f32 %v1009, %v1265
  %v1267 = vpop.f32.mrf.mxu0
  %1268 = vmatprep.mubr.bf16.mxu0 0
  %1269 = vmatmul.mubr.bf16.gmra.mxu0 %v771
  %v1270 = vpop.f32.mrf.mxu0
  %v1271 = vadd.f32 %v1014, %v1270
  %v1272 = vpop.f32.mrf.mxu0
  %v1273 = vpop.f32.mrf.mxu0
  %v1274 = vadd.f32 %v1017, %v1273
  %v1275 = vpop.f32.mrf.mxu0
  %1276 = vmatprep.mubr.bf16.mxu0 0
  %1277 = vmatmul.mubr.bf16.gmra.mxu0 %v774
  %v1278 = vpop.f32.mrf.mxu0
  %v1279 = vadd.f32 %v1022, %v1278
  %v1280 = vpop.f32.mrf.mxu0
  %v1281 = vpop.f32.mrf.mxu0
  %v1282 = vadd.f32 %v1025, %v1281
  %v1283 = vpop.f32.mrf.mxu0
  %1284 = vmatprep.mubr.bf16.mxu0 0
  %1285 = vmatmul.mubr.bf16.gmra.mxu0 %v777
  %v1286 = vpop.f32.mrf.mxu0
  %v1287 = vadd.f32 %v1030, %v1286
  %v1288 = vpop.f32.mrf.mxu0
  %v1289 = vpop.f32.mrf.mxu0
  %v1290 = vadd.f32 %v1033, %v1289
  %v1291 = vpop.f32.mrf.mxu0
  %1292 = vdwg.mxu0
  %v1293 = vld [vmem:[%s2] sm:$0x1]
  %v1295 = vlaneseq
  %v1296 = vshrl.u32 %v1295, 7
  %v1297 = vsub.s32 0, %v1296
  %v1298 = vrot.slane %v1293, %v1297
  %v1300 = vmul.f32 %v1071, %v1298
  %v1301 = vmul.f32 %v1074, %v1298
  %v1302 = vmul.f32 %v1079, %v1298
  %v1303 = vmul.f32 %v1082, %v1298
  %v1304 = vmul.f32 %v1087, %v1298
  %v1305 = vmul.f32 %v1090, %v1298
  %v1306 = vmul.f32 %v1095, %v1298
  %v1307 = vmul.f32 %v1098, %v1298
  %v1308 = vmul.f32 %v1103, %v1298
  %v1309 = vmul.f32 %v1106, %v1298
  %v1310 = vmul.f32 %v1111, %v1298
  %v1311 = vmul.f32 %v1114, %v1298
  %v1312 = vmul.f32 %v1119, %v1298
  %v1313 = vmul.f32 %v1122, %v1298
  %v1314 = vmul.f32 %v1127, %v1298
  %v1315 = vmul.f32 %v1130, %v1298
  %v1316 = vmul.f32 %v1135, %v1298
  %v1317 = vmul.f32 %v1138, %v1298
  %v1318 = vmul.f32 %v1143, %v1298
  %v1319 = vmul.f32 %v1146, %v1298
  %v1320 = vmul.f32 %v1151, %v1298
  %v1321 = vmul.f32 %v1154, %v1298
  %v1322 = vmul.f32 %v1159, %v1298
  %v1323 = vmul.f32 %v1162, %v1298
  %v1324 = vmul.f32 %v1167, %v1298
  %v1325 = vmul.f32 %v1170, %v1298
  %v1326 = vmul.f32 %v1175, %v1298
  %v1327 = vmul.f32 %v1178, %v1298
  %v1328 = vmul.f32 %v1183, %v1298
  %v1329 = vmul.f32 %v1186, %v1298
  %v1330 = vmul.f32 %v1191, %v1298
  %v1331 = vmul.f32 %v1194, %v1298
  %v1332 = vmul.f32 %v1199, %v1298
  %v1333 = vmul.f32 %v1202, %v1298
  %v1334 = vmul.f32 %v1207, %v1298
  %v1335 = vmul.f32 %v1210, %v1298
  %v1336 = vmul.f32 %v1215, %v1298
  %v1337 = vmul.f32 %v1218, %v1298
  %v1338 = vmul.f32 %v1223, %v1298
  %v1339 = vmul.f32 %v1226, %v1298
  %v1340 = vmul.f32 %v1231, %v1298
  %v1341 = vmul.f32 %v1234, %v1298
  %v1342 = vmul.f32 %v1239, %v1298
  %v1343 = vmul.f32 %v1242, %v1298
  %v1344 = vmul.f32 %v1247, %v1298
  %v1345 = vmul.f32 %v1250, %v1298
  %v1346 = vmul.f32 %v1255, %v1298
  %v1347 = vmul.f32 %v1258, %v1298
  %v1348 = vmul.f32 %v1263, %v1298
  %v1349 = vmul.f32 %v1266, %v1298
  %v1350 = vmul.f32 %v1271, %v1298
  %v1351 = vmul.f32 %v1274, %v1298
  %v1352 = vmul.f32 %v1279, %v1298
  %v1353 = vmul.f32 %v1282, %v1298
  %v1354 = vmul.f32 %v1287, %v1298
  %v1355 = vmul.f32 %v1290, %v1298
  %v1356 = vld [vmem:[%s3] sm:$0x1]
  %v1358 = vlaneseq
  %v1359 = vshrl.u32 %v1358, 7
  %v1360 = vsub.s32 0, %v1359
  %v1361 = vrot.slane %v1356, %v1360
  %v1363 = vadd.f32 %v1300, %v1361
  %v1364 = vadd.f32 %v1301, %v1361
  %v1365 = vadd.f32 %v1302, %v1361
  %v1366 = vadd.f32 %v1303, %v1361
  %v1367 = vadd.f32 %v1304, %v1361
  %v1368 = vadd.f32 %v1305, %v1361
  %v1369 = vadd.f32 %v1306, %v1361
  %v1370 = vadd.f32 %v1307, %v1361
  %v1371 = vadd.f32 %v1308, %v1361
  %v1372 = vadd.f32 %v1309, %v1361
  %v1373 = vadd.f32 %v1310, %v1361
  %v1374 = vadd.f32 %v1311, %v1361
  %v1375 = vadd.f32 %v1312, %v1361
  %v1376 = vadd.f32 %v1313, %v1361
  %v1377 = vadd.f32 %v1314, %v1361
  %v1378 = vadd.f32 %v1315, %v1361
  %v1379 = vadd.f32 %v1316, %v1361
  %v1380 = vadd.f32 %v1317, %v1361
  %v1381 = vadd.f32 %v1318, %v1361
  %v1382 = vadd.f32 %v1319, %v1361
  %v1383 = vadd.f32 %v1320, %v1361
  %v1384 = vadd.f32 %v1321, %v1361
  %v1385 = vadd.f32 %v1322, %v1361
  %v1386 = vadd.f32 %v1323, %v1361
  %v1387 = vadd.f32 %v1324, %v1361
  %v1388 = vadd.f32 %v1325, %v1361
  %v1389 = vadd.f32 %v1326, %v1361
  %v1390 = vadd.f32 %v1327, %v1361
  %v1391 = vadd.f32 %v1328, %v1361
  %v1392 = vadd.f32 %v1329, %v1361
  %v1393 = vadd.f32 %v1330, %v1361
  %v1394 = vadd.f32 %v1331, %v1361
  %v1395 = vadd.f32 %v1332, %v1361
  %v1396 = vadd.f32 %v1333, %v1361
  %v1397 = vadd.f32 %v1334, %v1361
  %v1398 = vadd.f32 %v1335, %v1361
  %v1399 = vadd.f32 %v1336, %v1361
  %v1400 = vadd.f32 %v1337, %v1361
  %v1401 = vadd.f32 %v1338, %v1361
  %v1402 = vadd.f32 %v1339, %v1361
  %v1403 = vadd.f32 %v1340, %v1361
  %v1404 = vadd.f32 %v1341, %v1361
  %v1405 = vadd.f32 %v1342, %v1361
  %v1406 = vadd.f32 %v1343, %v1361
  %v1407 = vadd.f32 %v1344, %v1361
  %v1408 = vadd.f32 %v1345, %v1361
  %v1409 = vadd.f32 %v1346, %v1361
  %v1410 = vadd.f32 %v1347, %v1361
  %v1411 = vadd.f32 %v1348, %v1361
  %v1412 = vadd.f32 %v1349, %v1361
  %v1413 = vadd.f32 %v1350, %v1361
  %v1414 = vadd.f32 %v1351, %v1361
  %v1415 = vadd.f32 %v1352, %v1361
  %v1416 = vadd.f32 %v1353, %v1361
  %v1417 = vadd.f32 %v1354, %v1361
  %v1418 = vadd.f32 %v1355, %v1361
  %v1419 = vmax.f32 %v1363, 0.0
  %v1420 = vmax.f32 %v1364, 0.0
  %v1421 = vmax.f32 %v1365, 0.0
  %v1422 = vmax.f32 %v1366, 0.0
  %v1423 = vmax.f32 %v1367, 0.0
  %v1424 = vmax.f32 %v1368, 0.0
  %v1425 = vmax.f32 %v1369, 0.0
  %v1426 = vmax.f32 %v1370, 0.0
  %v1427 = vmax.f32 %v1371, 0.0
  %v1428 = vmax.f32 %v1372, 0.0
  %v1429 = vmax.f32 %v1373, 0.0
  %v1430 = vmax.f32 %v1374, 0.0
  %v1431 = vmax.f32 %v1375, 0.0
  %v1432 = vmax.f32 %v1376, 0.0
  %v1433 = vmax.f32 %v1377, 0.0
  %v1434 = vmax.f32 %v1378, 0.0
  %v1435 = vmax.f32 %v1379, 0.0
  %v1436 = vmax.f32 %v1380, 0.0
  %v1437 = vmax.f32 %v1381, 0.0
  %v1438 = vmax.f32 %v1382, 0.0
  %v1439 = vmax.f32 %v1383, 0.0
  %v1440 = vmax.f32 %v1384, 0.0
  %v1441 = vmax.f32 %v1385, 0.0
  %v1442 = vmax.f32 %v1386, 0.0
  %v1443 = vmax.f32 %v1387, 0.0
  %v1444 = vmax.f32 %v1388, 0.0
  %v1445 = vmax.f32 %v1389, 0.0
  %v1446 = vmax.f32 %v1390, 0.0
  %v1447 = vmax.f32 %v1391, 0.0
  %v1448 = vmax.f32 %v1392, 0.0
  %v1449 = vmax.f32 %v1393, 0.0
  %v1450 = vmax.f32 %v1394, 0.0
  %v1451 = vmax.f32 %v1395, 0.0
  %v1452 = vmax.f32 %v1396, 0.0
  %v1453 = vmax.f32 %v1397, 0.0
  %v1454 = vmax.f32 %v1398, 0.0
  %v1455 = vmax.f32 %v1399, 0.0
  %v1456 = vmax.f32 %v1400, 0.0
  %v1457 = vmax.f32 %v1401, 0.0
  %v1458 = vmax.f32 %v1402, 0.0
  %v1459 = vmax.f32 %v1403, 0.0
  %v1460 = vmax.f32 %v1404, 0.0
  %v1461 = vmax.f32 %v1405, 0.0
  %v1462 = vmax.f32 %v1406, 0.0
  %v1463 = vmax.f32 %v1407, 0.0
  %v1464 = vmax.f32 %v1408, 0.0
  %v1465 = vmax.f32 %v1409, 0.0
  %v1466 = vmax.f32 %v1410, 0.0
  %v1467 = vmax.f32 %v1411, 0.0
  %v1468 = vmax.f32 %v1412, 0.0
  %v1469 = vmax.f32 %v1413, 0.0
  %v1470 = vmax.f32 %v1414, 0.0
  %v1471 = vmax.f32 %v1415, 0.0
  %v1472 = vmax.f32 %v1416, 0.0
  %v1473 = vmax.f32 %v1417, 0.0
  %v1474 = vmax.f32 %v1418, 0.0
  %vm1475 = vcmask 523264
  %v1476 = vsel %vm1475, %v1419, -inf
  %v1477 = vsel %vm1475, %v1426, -inf
  %v1478 = vmax.f32 %v1476, %v1477
  %v1479 = vsel %vm1475, %v1433, -inf
  %v1480 = vmax.f32 %v1478, %v1479
  %v1481 = vsel %vm1475, %v1440, -inf
  %v1482 = vmax.f32 %v1480, %v1481
  %v1483 = vsel %vm1475, %v1420, -inf
  %v1484 = vsel %vm1475, %v1427, -inf
  %v1485 = vmax.f32 %v1483, %v1484
  %v1486 = vsel %vm1475, %v1434, -inf
  %v1487 = vmax.f32 %v1485, %v1486
  %v1488 = vsel %vm1475, %v1441, -inf
  %v1489 = vmax.f32 %v1487, %v1488
  %v1490 = vsel %vm1475, %v1421, -inf
  %v1491 = vsel %vm1475, %v1428, -inf
  %v1492 = vmax.f32 %v1490, %v1491
  %v1493 = vsel %vm1475, %v1435, -inf
  %v1494 = vmax.f32 %v1492, %v1493
  %v1495 = vsel %vm1475, %v1442, -inf
  %v1496 = vmax.f32 %v1494, %v1495
  %v1497 = vsel %vm1475, %v1422, -inf
  %v1498 = vsel %vm1475, %v1429, -inf
  %v1499 = vmax.f32 %v1497, %v1498
  %v1500 = vsel %vm1475, %v1436, -inf
  %v1501 = vmax.f32 %v1499, %v1500
  %v1502 = vsel %vm1475, %v1443, -inf
  %v1503 = vmax.f32 %v1501, %v1502
  %v1504 = vsel %vm1475, %v1423, -inf
  %v1505 = vsel %vm1475, %v1430, -inf
  %v1506 = vmax.f32 %v1504, %v1505
  %v1507 = vsel %vm1475, %v1437, -inf
  %v1508 = vmax.f32 %v1506, %v1507
  %v1509 = vsel %vm1475, %v1444, -inf
  %v1510 = vmax.f32 %v1508, %v1509
  %v1511 = vsel %vm1475, %v1424, -inf
  %v1512 = vsel %vm1475, %v1431, -inf
  %v1513 = vmax.f32 %v1511, %v1512
  %v1514 = vsel %vm1475, %v1438, -inf
  %v1515 = vmax.f32 %v1513, %v1514
  %v1516 = vsel %vm1475, %v1445, -inf
  %v1517 = vmax.f32 %v1515, %v1516
  %v1518 = vsel %vm1475, %v1425, -inf
  %v1519 = vsel %vm1475, %v1432, -inf
  %v1520 = vmax.f32 %v1518, %v1519
  %v1521 = vsel %vm1475, %v1439, -inf
  %v1522 = vmax.f32 %v1520, %v1521
  %v1523 = vsel %vm1475, %v1446, -inf
  %v1524 = vmax.f32 %v1522, %v1523
  %v1525 = vsel %vm1475, %v1447, -inf
  %v1526 = vsel %vm1475, %v1454, -inf
  %v1527 = vmax.f32 %v1525, %v1526
  %v1528 = vsel %vm1475, %v1461, -inf
  %v1529 = vmax.f32 %v1527, %v1528
  %v1530 = vsel %vm1475, %v1468, -inf
  %v1531 = vmax.f32 %v1529, %v1530
  %v1532 = vsel %vm1475, %v1448, -inf
  %v1533 = vsel %vm1475, %v1455, -inf
  %v1534 = vmax.f32 %v1532, %v1533
  %v1535 = vsel %vm1475, %v1462, -inf
  %v1536 = vmax.f32 %v1534, %v1535
  %v1537 = vsel %vm1475, %v1469, -inf
  %v1538 = vmax.f32 %v1536, %v1537
  %v1539 = vsel %vm1475, %v1449, -inf
  %v1540 = vsel %vm1475, %v1456, -inf
  %v1541 = vmax.f32 %v1539, %v1540
  %v1542 = vsel %vm1475, %v1463, -inf
  %v1543 = vmax.f32 %v1541, %v1542
  %v1544 = vsel %vm1475, %v1470, -inf
  %v1545 = vmax.f32 %v1543, %v1544
  %v1546 = vsel %vm1475, %v1450, -inf
  %v1547 = vsel %vm1475, %v1457, -inf
  %v1548 = vmax.f32 %v1546, %v1547
  %v1549 = vsel %vm1475, %v1464, -inf
  %v1550 = vmax.f32 %v1548, %v1549
  %v1551 = vsel %vm1475, %v1471, -inf
  %v1552 = vmax.f32 %v1550, %v1551
  %v1553 = vsel %vm1475, %v1451, -inf
  %v1554 = vsel %vm1475, %v1458, -inf
  %v1555 = vmax.f32 %v1553, %v1554
  %v1556 = vsel %vm1475, %v1465, -inf
  %v1557 = vmax.f32 %v1555, %v1556
  %v1558 = vsel %vm1475, %v1472, -inf
  %v1559 = vmax.f32 %v1557, %v1558
  %v1560 = vsel %vm1475, %v1452, -inf
  %v1561 = vsel %vm1475, %v1459, -inf
  %v1562 = vmax.f32 %v1560, %v1561
  %v1563 = vsel %vm1475, %v1466, -inf
  %v1564 = vmax.f32 %v1562, %v1563
  %v1565 = vsel %vm1475, %v1473, -inf
  %v1566 = vmax.f32 %v1564, %v1565
  %v1567 = vsel %vm1475, %v1453, -inf
  %v1568 = vsel %vm1475, %v1460, -inf
  %v1569 = vmax.f32 %v1567, %v1568
  %v1570 = vsel %vm1475, %v1467, -inf
  %v1571 = vmax.f32 %v1569, %v1570
  %v1572 = vsel %vm1475, %v1474, -inf
  %v1573 = vmax.f32 %v1571, %v1572
  %1574 = vst.msk [vmem:[%s4] sm:$0xff] %vm1475, %v1482
  %1575 = vst.msk [vmem:[%s4 + $0x8] sm:$0xff] %vm1475, %v1489
  %1576 = vst.msk [vmem:[%s4 + $0x10] sm:$0xff] %vm1475, %v1496
  %1577 = vst.msk [vmem:[%s4 + $0x18] sm:$0xff] %vm1475, %v1503
  %1578 = vst.msk [vmem:[%s4 + $0x20] sm:$0xff] %vm1475, %v1510
  %1579 = vst.msk [vmem:[%s4 + $0x28] sm:$0xff] %vm1475, %v1517
  %1580 = vst.msk [vmem:[%s4 + $0x30] sm:$0xff] %vm1475, %v1524
  %1581 = vst.msk [vmem:[%s4 + $0x38] sm:$0xff] %vm1475, %v1531
  %1582 = vst.msk [vmem:[%s4 + $0x40] sm:$0xff] %vm1475, %v1538
  %1583 = vst.msk [vmem:[%s4 + $0x48] sm:$0xff] %vm1475, %v1545
  %1584 = vst.msk [vmem:[%s4 + $0x50] sm:$0xff] %vm1475, %v1552
  %1585 = vst.msk [vmem:[%s4 + $0x58] sm:$0xff] %vm1475, %v1559
  %1586 = vst.msk [vmem:[%s4 + $0x60] sm:$0xff] %vm1475, %v1566
  %1587 = vst.msk [vmem:[%s4 + $0x68] sm:$0xff] %vm1475, %v1573
  // Predicated region
  $region18: #{mnist_cnn_forward.5} parent=0 // pred_check
    _
  $region19: #{mnist_cnn_forward.5} parent=0 // pred_check_branch
    %1589 = sbr.rel (0) target = $region21
  $region20: #{mnist_cnn_forward.5} parent=0 // pred_region
    _
  $region21: #{mnist_cnn_forward.5} parent=0 // pred_fallthru
    _
  // Predicated region
  $region22: #{mnist_cnn_forward.5} parent=0 // pred_check
    _
  $region23: #{mnist_cnn_forward.5} parent=0 // pred_check_branch
    %1591 = sbr.rel (0) target = $region25
  $region24: #{mnist_cnn_forward.5} parent=0 // pred_region
    _
  $region25: #{mnist_cnn_forward.5} parent=0 // pred_fallthru
    _

// kernel: mnist_cnn_forward.6
$region0: #{mnist_cnn_forward.6}
  #allocation0 [shape = 'u32[]', space=smem, size = 0x4, offset = 0x4, fixed_abs, tag = 'smem constant byte address 0x4 - core index']
  #allocation1 [shape = 'u32[144,128]{1,0:T(1,128)}', space=vmem, size = 0x12000, scoped, tag = 'internal scratch']
  %s0 = inlined_call_operand.vmem [shape: bf16[2,64,576], index: 0, kind: input, shape index: {}]
  %s1 = inlined_call_operand.vmem [shape: bf16[576,128], index: 1, kind: input, shape index: {}]
  %s2 = inlined_call_operand.vmem [shape: f32[1,128], index: 2, kind: input, shape index: {}]
  %s3 = inlined_call_operand.vmem [shape: f32[1,128], index: 3, kind: input, shape index: {}]
  %s4 = inlined_call_operand.vmem [shape: f32[2,16,128], index: 4, kind: output, shape index: {}]
  %s5 = sld [smem:[#allocation0]]
  $region26: #{mnist_cnn_forward.6} parent=0
    _
  %s7 = ssub.s32 1, %s5
  %s8 = scalar_select 0, %s7, %s5
  // Predicated region
  $region2: #{mnist_cnn_forward.6} parent=0 // pred_check
    _
  $region3: #{mnist_cnn_forward.6} parent=0 // pred_check_branch
    %10 = sbr.rel (0) target = $region5
  $region4: #{mnist_cnn_forward.6} parent=0 // pred_region
    _
  $region5: #{mnist_cnn_forward.6} parent=0 // pred_fallthru
    _
  // Predicated region
  $region6: #{mnist_cnn_forward.6} parent=0 // pred_check
    _
  $region7: #{mnist_cnn_forward.6} parent=0 // pred_check_branch
    %12 = sbr.rel (0) target = $region9
  $region8: #{mnist_cnn_forward.6} parent=0 // pred_region
    _
  $region9: #{mnist_cnn_forward.6} parent=0 // pred_fallthru
    _
  // Predicated region
  $region10: #{mnist_cnn_forward.6} parent=0 // pred_check
    _
  $region11: #{mnist_cnn_forward.6} parent=0 // pred_check_branch
    %14 = sbr.rel (0) target = $region13
  $region12: #{mnist_cnn_forward.6} parent=0 // pred_region
    _
  $region13: #{mnist_cnn_forward.6} parent=0 // pred_fallthru
    _
  // Predicated region
  $region14: #{mnist_cnn_forward.6} parent=0 // pred_check
    _
  $region15: #{mnist_cnn_forward.6} parent=0 // pred_check_branch
    %16 = sbr.rel (0) target = $region17
  $region16: #{mnist_cnn_forward.6} parent=0 // pred_region
    _
  $region17: #{mnist_cnn_forward.6} parent=0 // pred_fallthru
    _
  %v18 = vld [vmem:[%s0] sm:$0xff]
  %v19 = vld [vmem:[%s0 + $0x8] sm:$0xff]
  %v20 = vld [vmem:[%s0 + $0x10] sm:$0xf]
  %v21 = vld [vmem:[%s0 + $0x14] sm:$0xff]
  %v22 = vld [vmem:[%s0 + $0x1c] sm:$0xff]
  %v23 = vld [vmem:[%s0 + $0x24] sm:$0xf]
  %v24 = vld [vmem:[%s0 + $0x28] sm:$0xff]
  %v25 = vld [vmem:[%s0 + $0x30] sm:$0xff]
  %v26 = vld [vmem:[%s0 + $0x38] sm:$0xf]
  %v27 = vld [vmem:[%s0 + $0x3c] sm:$0xff]
  %v28 = vld [vmem:[%s0 + $0x44] sm:$0xff]
  %v29 = vld [vmem:[%s0 + $0x4c] sm:$0xf]
  %v30 = vld [vmem:[%s0 + $0x50] sm:$0xff]
  %v31 = vld [vmem:[%s0 + $0x58] sm:$0xff]
  %v32 = vld [vmem:[%s0 + $0x60] sm:$0xf]
  %v33 = vld [vmem:[%s0 + $0x64] sm:$0xff]
  %v34 = vld [vmem:[%s0 + $0x6c] sm:$0xff]
  %v35 = vld [vmem:[%s0 + $0x74] sm:$0xf]
  %v36 = vld [vmem:[%s0 + $0x78] sm:$0xff]
  %v37 = vld [vmem:[%s0 + $0x80] sm:$0xff]
  %v38 = vld [vmem:[%s0 + $0x88] sm:$0xf]
  %v39 = vld [vmem:[%s0 + $0x8c] sm:$0xff]
  %v40 = vld [vmem:[%s0 + $0x94] sm:$0xff]
  %v41 = vld [vmem:[%s0 + $0x9c] sm:$0xf]
  %v42 = vld [vmem:[%s0 + $0xa0] sm:$0xff]
  %v43 = vld [vmem:[%s0 + $0xa8] sm:$0xff]
  %v44 = vld [vmem:[%s0 + $0xb0] sm:$0xf]
  %v45 = vld [vmem:[%s0 + $0xb4] sm:$0xff]
  %v46 = vld [vmem:[%s0 + $0xbc] sm:$0xff]
  %v47 = vld [vmem:[%s0 + $0xc4] sm:$0xf]
  %v48 = vld [vmem:[%s0 + $0xc8] sm:$0xff]
  %v49 = vld [vmem:[%s0 + $0xd0] sm:$0xff]
  %v50 = vld [vmem:[%s0 + $0xd8] sm:$0xf]
  %v51 = vld [vmem:[%s0 + $0xdc] sm:$0xff]
  %v52 = vld [vmem:[%s0 + $0xe4] sm:$0xff]
  %v53 = vld [vmem:[%s0 + $0xec] sm:$0xf]
  %v54 = vld [vmem:[%s0 + $0xf0] sm:$0xff]
  %v55 = vld [vmem:[%s0 + $0xf8] sm:$0xff]
  %v56 = vld [vmem:[%s0 + $0x100] sm:$0xf]
  %v57 = vld [vmem:[%s0 + $0x104] sm:$0xff]
  %v58 = vld [vmem:[%s0 + $0x10c] sm:$0xff]
  %v59 = vld [vmem:[%s0 + $0x114] sm:$0xf]
  %v60 = vld [vmem:[%s0 + $0x118] sm:$0xff]
  %v61 = vld [vmem:[%s0 + $0x120] sm:$0xff]
  %v62 = vld [vmem:[%s0 + $0x128] sm:$0xf]
  %v63 = vld [vmem:[%s0 + $0x12c] sm:$0xff]
  %v64 = vld [vmem:[%s0 + $0x134] sm:$0xff]
  %v65 = vld [vmem:[%s0 + $0x13c] sm:$0xf]
  %v66 = vld [vmem:[%s1] sm:$0xf]
  %v67 = vld [vmem:[%s1 + $0x4] sm:$0xf]
  %v68 = vld [vmem:[%s1 + $0x8] sm:$0xf]
  %v69 = vld [vmem:[%s1 + $0xc] sm:$0xf]
  %v70 = vld [vmem:[%s1 + $0x10] sm:$0xf]
  %v71 = vld [vmem:[%s1 + $0x14] sm:$0xf]
  %v72 = vld [vmem:[%s1 + $0x18] sm:$0xf]
  %v73 = vld [vmem:[%s1 + $0x1c] sm:$0xf]
  %v74 = vld [vmem:[%s1 + $0x20] sm:$0xf]
  %v75 = vld [vmem:[%s1 + $0x24] sm:$0xf]
  %v76 = vld [vmem:[%s1 + $0x28] sm:$0xf]
  %v77 = vld [vmem:[%s1 + $0x2c] sm:$0xf]
  %v78 = vld [vmem:[%s1 + $0x30] sm:$0xf]
  %v79 = vld [vmem:[%s1 + $0x34] sm:$0xf]
  %v80 = vld [vmem:[%s1 + $0x38] sm:$0xf]
  %v81 = vld [vmem:[%s1 + $0x3c] sm:$0xf]
  %v82 = vld [vmem:[%s1 + $0x40] sm:$0xf]
  %v83 = vld [vmem:[%s1 + $0x44] sm:$0xf]
  %v84 = vld [vmem:[%s1 + $0x48] sm:$0xf]
  %v85 = vld [vmem:[%s1 + $0x4c] sm:$0xf]
  %v86 = vld [vmem:[%s1 + $0x50] sm:$0xf]
  %v87 = vld [vmem:[%s1 + $0x54] sm:$0xf]
  %v88 = vld [vmem:[%s1 + $0x58] sm:$0xf]
  %v89 = vld [vmem:[%s1 + $0x5c] sm:$0xf]
  %v90 = vld [vmem:[%s1 + $0x60] sm:$0xf]
  %v91 = vld [vmem:[%s1 + $0x64] sm:$0xf]
  %v92 = vld [vmem:[%s1 + $0x68] sm:$0xf]
  %v93 = vld [vmem:[%s1 + $0x6c] sm:$0xf]
  %v94 = vld [vmem:[%s1 + $0x70] sm:$0xf]
  %v95 = vld [vmem:[%s1 + $0x74] sm:$0xf]
  %v96 = vld [vmem:[%s1 + $0x78] sm:$0xf]
  %v97 = vld [vmem:[%s1 + $0x7c] sm:$0xf]
  %v98 = vld [vmem:[%s1 + $0x80] sm:$0xf]
  %v99 = vld [vmem:[%s1 + $0x84] sm:$0xf]
  %v100 = vld [vmem:[%s1 + $0x88] sm:$0xf]
  %v101 = vld [vmem:[%s1 + $0x8c] sm:$0xf]
  %v102 = vld [vmem:[%s1 + $0x90] sm:$0xf]
  %v103 = vld [vmem:[%s1 + $0x94] sm:$0xf]
  %v104 = vld [vmem:[%s1 + $0x98] sm:$0xf]
  %v105 = vld [vmem:[%s1 + $0x9c] sm:$0xf]
  %v106 = vld [vmem:[%s1 + $0xa0] sm:$0xf]
  %v107 = vld [vmem:[%s1 + $0xa4] sm:$0xf]
  %v108 = vld [vmem:[%s1 + $0xa8] sm:$0xf]
  %v109 = vld [vmem:[%s1 + $0xac] sm:$0xf]
  %v110 = vld [vmem:[%s1 + $0xb0] sm:$0xf]
  %v111 = vld [vmem:[%s1 + $0xb4] sm:$0xf]
  %v112 = vld [vmem:[%s1 + $0xb8] sm:$0xf]
  %v113 = vld [vmem:[%s1 + $0xbc] sm:$0xf]
  %v114 = vld [vmem:[%s1 + $0xc0] sm:$0xf]
  %v115 = vld [vmem:[%s1 + $0xc4] sm:$0xf]
  %v116 = vld [vmem:[%s1 + $0xc8] sm:$0xf]
  %v117 = vld [vmem:[%s1 + $0xcc] sm:$0xf]
  %v118 = vld [vmem:[%s1 + $0xd0] sm:$0xf]
  %v119 = vld [vmem:[%s1 + $0xd4] sm:$0xf]
  %v120 = vld [vmem:[%s1 + $0xd8] sm:$0xf]
  %v121 = vld [vmem:[%s1 + $0xdc] sm:$0xf]
  %v122 = vld [vmem:[%s1 + $0xe0] sm:$0xf]
  %v123 = vld [vmem:[%s1 + $0xe4] sm:$0xf]
  %v124 = vld [vmem:[%s1 + $0xe8] sm:$0xf]
  %v125 = vld [vmem:[%s1 + $0xec] sm:$0xf]
  %v126 = vld [vmem:[%s1 + $0xf0] sm:$0xf]
  %v127 = vld [vmem:[%s1 + $0xf4] sm:$0xf]
  %v128 = vld [vmem:[%s1 + $0xf8] sm:$0xf]
  %v129 = vld [vmem:[%s1 + $0xfc] sm:$0xf]
  %v130 = vld [vmem:[%s1 + $0x100] sm:$0xf]
  %v131 = vld [vmem:[%s1 + $0x104] sm:$0xf]
  %v132 = vld [vmem:[%s1 + $0x108] sm:$0xf]
  %v133 = vld [vmem:[%s1 + $0x10c] sm:$0xf]
  %v134 = vld [vmem:[%s1 + $0x110] sm:$0xf]
  %v135 = vld [vmem:[%s1 + $0x114] sm:$0xf]
  %v136 = vld [vmem:[%s1 + $0x118] sm:$0xf]
  %v137 = vld [vmem:[%s1 + $0x11c] sm:$0xf]
  %v186 = vunpack.c.l.b16 %v18
  %v187 = vunpack.c.h.b16 %v18
  %v188 = vunpack.c.l.b16 %v19
  %v189 = vunpack.c.h.b16 %v19
  %v190 = vunpack.c.l.b16 %v20
  %v191 = vunpack.c.l.b16 %v21
  %v192 = vunpack.c.h.b16 %v21
  %v193 = vunpack.c.l.b16 %v22
  %v194 = vunpack.c.h.b16 %v22
  %v195 = vunpack.c.l.b16 %v23
  %v196 = vunpack.c.l.b16 %v24
  %v197 = vunpack.c.h.b16 %v24
  %v198 = vunpack.c.l.b16 %v25
  %v199 = vunpack.c.h.b16 %v25
  %v200 = vunpack.c.l.b16 %v26
  %v201 = vunpack.c.l.b16 %v27
  %v202 = vunpack.c.h.b16 %v27
  %v203 = vunpack.c.l.b16 %v28
  %v204 = vunpack.c.h.b16 %v28
  %v205 = vunpack.c.l.b16 %v29
  %v206 = vunpack.c.l.b16 %v30
  %v207 = vunpack.c.h.b16 %v30
  %v208 = vunpack.c.l.b16 %v31
  %v209 = vunpack.c.h.b16 %v31
  %v210 = vunpack.c.l.b16 %v32
  %v211 = vunpack.c.l.b16 %v33
  %v212 = vunpack.c.h.b16 %v33
  %v213 = vunpack.c.l.b16 %v34
  %v214 = vunpack.c.h.b16 %v34
  %v215 = vunpack.c.l.b16 %v35
  %v216 = vunpack.c.l.b16 %v36
  %v217 = vunpack.c.h.b16 %v36
  %v218 = vunpack.c.l.b16 %v37
  %v219 = vunpack.c.h.b16 %v37
  %v220 = vunpack.c.l.b16 %v38
  %v221 = vunpack.c.l.b16 %v39
  %v222 = vunpack.c.h.b16 %v39
  %v223 = vunpack.c.l.b16 %v40
  %v224 = vunpack.c.h.b16 %v40
  %v225 = vunpack.c.l.b16 %v41
  %v226 = vunpack.c.l.b16 %v42
  %v227 = vunpack.c.h.b16 %v42
  %v228 = vunpack.c.l.b16 %v43
  %v229 = vunpack.c.h.b16 %v43
  %v230 = vunpack.c.l.b16 %v44
  %v231 = vunpack.c.l.b16 %v45
  %v232 = vunpack.c.h.b16 %v45
  %v233 = vunpack.c.l.b16 %v46
  %v234 = vunpack.c.h.b16 %v46
  %v235 = vunpack.c.l.b16 %v47
  %v236 = vunpack.c.l.b16 %v48
  %v237 = vunpack.c.h.b16 %v48
  %v238 = vunpack.c.l.b16 %v49
  %v239 = vunpack.c.h.b16 %v49
  %v240 = vunpack.c.l.b16 %v50
  %v241 = vunpack.c.l.b16 %v51
  %v242 = vunpack.c.h.b16 %v51
  %v243 = vunpack.c.l.b16 %v52
  %v244 = vunpack.c.h.b16 %v52
  %v245 = vunpack.c.l.b16 %v53
  %v246 = vunpack.c.l.b16 %v54
  %v247 = vunpack.c.h.b16 %v54
  %v248 = vunpack.c.l.b16 %v55
  %v249 = vunpack.c.h.b16 %v55
  %v250 = vunpack.c.l.b16 %v56
  %v251 = vunpack.c.l.b16 %v57
  %v252 = vunpack.c.h.b16 %v57
  %v253 = vunpack.c.l.b16 %v58
  %v254 = vunpack.c.h.b16 %v58
  %v255 = vunpack.c.l.b16 %v59
  %v256 = vunpack.c.l.b16 %v60
  %v257 = vunpack.c.h.b16 %v60
  %v258 = vunpack.c.l.b16 %v61
  %v259 = vunpack.c.h.b16 %v61
  %v260 = vunpack.c.l.b16 %v62
  %v261 = vunpack.c.l.b16 %v63
  %v262 = vunpack.c.h.b16 %v63
  %v263 = vunpack.c.l.b16 %v64
  %v264 = vunpack.c.h.b16 %v64
  %v265 = vunpack.c.l.b16 %v65
  %v266 = vpack.c.b16 %v191, %v186
  %v267 = vpack.c.b16 %v192, %v187
  %v268 = vpack.c.b16 %v193, %v188
  %v269 = vpack.c.b16 %v194, %v189
  %v270 = vpack.c.b16 %v195, %v190
  %v271 = vpack.c.b16 %v201, %v196
  %v272 = vpack.c.b16 %v202, %v197
  %v273 = vpack.c.b16 %v203, %v198
  %v274 = vpack.c.b16 %v204, %v199
  %v275 = vpack.c.b16 %v205, %v200
  %v276 = vpack.c.b16 %v211, %v206
  %v277 = vpack.c.b16 %v212, %v207
  %v278 = vpack.c.b16 %v213, %v208
  %v279 = vpack.c.b16 %v214, %v209
  %v280 = vpack.c.b16 %v215, %v210
  %v281 = vpack.c.b16 %v221, %v216
  %v282 = vpack.c.b16 %v222, %v217
  %v283 = vpack.c.b16 %v223, %v218
  %v284 = vpack.c.b16 %v224, %v219
  %v285 = vpack.c.b16 %v225, %v220
  %v286 = vpack.c.b16 %v231, %v226
  %v287 = vpack.c.b16 %v232, %v227
  %v288 = vpack.c.b16 %v233, %v228
  %v289 = vpack.c.b16 %v234, %v229
  %v290 = vpack.c.b16 %v235, %v230
  %v291 = vpack.c.b16 %v241, %v236
  %v292 = vpack.c.b16 %v242, %v237
  %v293 = vpack.c.b16 %v243, %v238
  %v294 = vpack.c.b16 %v244, %v239
  %v295 = vpack.c.b16 %v245, %v240
  %v296 = vpack.c.b16 %v251, %v246
  %v297 = vpack.c.b16 %v252, %v247
  %v298 = vpack.c.b16 %v253, %v248
  %v299 = vpack.c.b16 %v254, %v249
  %v300 = vpack.c.b16 %v255, %v250
  %v301 = vpack.c.b16 %v261, %v256
  %v302 = vpack.c.b16 %v262, %v257
  %v303 = vpack.c.b16 %v263, %v258
  %v304 = vpack.c.b16 %v264, %v259
  %v305 = vpack.c.b16 %v265, %v260
  %v410 = vunpack.c.l.b16 %v66
  %v411 = vunpack.c.l.b16 %v67
  %v412 = vunpack.c.l.b16 %v68
  %v413 = vunpack.c.l.b16 %v69
  %v414 = vunpack.c.l.b16 %v70
  %v415 = vunpack.c.l.b16 %v71
  %v416 = vunpack.c.l.b16 %v72
  %v417 = vunpack.c.l.b16 %v73
  %v418 = vunpack.c.l.b16 %v74
  %v419 = vunpack.c.l.b16 %v75
  %v420 = vunpack.c.l.b16 %v76
  %v421 = vunpack.c.l.b16 %v77
  %v422 = vunpack.c.l.b16 %v78
  %v423 = vunpack.c.l.b16 %v79
  %v424 = vunpack.c.l.b16 %v80
  %v425 = vunpack.c.l.b16 %v81
  %v426 = vunpack.c.l.b16 %v82
  %v427 = vunpack.c.l.b16 %v83
  %v428 = vunpack.c.l.b16 %v84
  %v429 = vunpack.c.l.b16 %v85
  %v430 = vunpack.c.l.b16 %v86
  %v431 = vunpack.c.l.b16 %v87
  %v432 = vunpack.c.l.b16 %v88
  %v433 = vunpack.c.l.b16 %v89
  %v434 = vunpack.c.l.b16 %v90
  %v435 = vunpack.c.l.b16 %v91
  %v436 = vunpack.c.l.b16 %v92
  %v437 = vunpack.c.l.b16 %v93
  %v438 = vunpack.c.l.b16 %v94
  %v439 = vunpack.c.l.b16 %v95
  %v440 = vunpack.c.l.b16 %v96
  %v441 = vunpack.c.l.b16 %v97
  %v442 = vunpack.c.l.b16 %v98
  %v443 = vunpack.c.l.b16 %v99
  %v444 = vunpack.c.l.b16 %v100
  %v445 = vunpack.c.l.b16 %v101
  %v446 = vunpack.c.l.b16 %v102
  %v447 = vunpack.c.l.b16 %v103
  %v448 = vunpack.c.l.b16 %v104
  %v449 = vunpack.c.l.b16 %v105
  %v450 = vunpack.c.l.b16 %v106
  %v451 = vunpack.c.l.b16 %v107
  %v452 = vunpack.c.l.b16 %v108
  %v453 = vunpack.c.l.b16 %v109
  %v454 = vunpack.c.l.b16 %v110
  %v455 = vunpack.c.l.b16 %v111
  %v456 = vunpack.c.l.b16 %v112
  %v457 = vunpack.c.l.b16 %v113
  %v458 = vunpack.c.l.b16 %v114
  %v459 = vunpack.c.l.b16 %v115
  %v460 = vunpack.c.l.b16 %v116
  %v461 = vunpack.c.l.b16 %v117
  %v462 = vunpack.c.l.b16 %v118
  %v463 = vunpack.c.l.b16 %v119
  %v464 = vunpack.c.l.b16 %v120
  %v465 = vunpack.c.l.b16 %v121
  %v466 = vunpack.c.l.b16 %v122
  %v467 = vunpack.c.l.b16 %v123
  %v468 = vunpack.c.l.b16 %v124
  %v469 = vunpack.c.l.b16 %v125
  %v470 = vunpack.c.l.b16 %v126
  %v471 = vunpack.c.l.b16 %v127
  %v472 = vunpack.c.l.b16 %v128
  %v473 = vunpack.c.l.b16 %v129
  %v474 = vunpack.c.l.b16 %v130
  %v475 = vunpack.c.l.b16 %v131
  %v476 = vunpack.c.l.b16 %v132
  %v477 = vunpack.c.l.b16 %v133
  %v478 = vunpack.c.l.b16 %v134
  %v479 = vunpack.c.l.b16 %v135
  %v480 = vunpack.c.l.b16 %v136
  %v481 = vunpack.c.l.b16 %v137
  %v482 = vpack.c.b16 %v411, %v410
  %v483 = vpack.c.b16 %v413, %v412
  %v484 = vpack.c.b16 %v415, %v414
  %v485 = vpack.c.b16 %v417, %v416
  %v486 = vpack.c.b16 %v419, %v418
  %v487 = vpack.c.b16 %v421, %v420
  %v488 = vpack.c.b16 %v423, %v422
  %v489 = vpack.c.b16 %v425, %v424
  %v490 = vpack.c.b16 %v427, %v426
  %v491 = vpack.c.b16 %v429, %v428
  %v492 = vpack.c.b16 %v431, %v430
  %v493 = vpack.c.b16 %v433, %v432
  %v494 = vpack.c.b16 %v435, %v434
  %v495 = vpack.c.b16 %v437, %v436
  %v496 = vpack.c.b16 %v439, %v438
  %v497 = vpack.c.b16 %v441, %v440
  %v498 = vpack.c.b16 %v443, %v442
  %v499 = vpack.c.b16 %v445, %v444
  %v500 = vpack.c.b16 %v447, %v446
  %v501 = vpack.c.b16 %v449, %v448
  %v502 = vpack.c.b16 %v451, %v450
  %v503 = vpack.c.b16 %v453, %v452
  %v504 = vpack.c.b16 %v455, %v454
  %v505 = vpack.c.b16 %v457, %v456
  %v506 = vpack.c.b16 %v459, %v458
  %v507 = vpack.c.b16 %v461, %v460
  %v508 = vpack.c.b16 %v463, %v462
  %v509 = vpack.c.b16 %v465, %v464
  %v510 = vpack.c.b16 %v467, %v466
  %v511 = vpack.c.b16 %v469, %v468
  %v512 = vpack.c.b16 %v471, %v470
  %v513 = vpack.c.b16 %v473, %v472
  %v514 = vpack.c.b16 %v475, %v474
  %v515 = vpack.c.b16 %v477, %v476
  %v516 = vpack.c.b16 %v479, %v478
  %v517 = vpack.c.b16 %v481, %v480
  %vm554 = vcmask 523264
  %v556 = vsel %vm554, %v270, 0
  %v559 = vsel %vm554, %v275, 0
  %v562 = vsel %vm554, %v280, 0
  %v565 = vsel %vm554, %v285, 0
  %v568 = vsel %vm554, %v290, 0
  %v571 = vsel %vm554, %v295, 0
  %v574 = vsel %vm554, %v300, 0
  %v577 = vsel %vm554, %v305, 0
  %579 = vmatprep.subr.bf16.mxu0 0
  %580 = vmatpush1.bf16.msra.mxu0 %v489
  %581 = vmatprep.subr.bf16.mxu0 0
  %582 = vmatpush1.bf16.msra.mxu0 %v488
  %583 = vmatprep.subr.bf16.mxu0 0
  %584 = vmatpush1.bf16.msra.mxu0 %v487
  %585 = vmatprep.subr.bf16.mxu0 0
  %586 = vmatpush1.bf16.msra.mxu0 %v486
  %587 = vmatprep.subr.bf16.mxu0 0
  %588 = vmatpush1.bf16.msra.mxu0 %v485
  %589 = vmatprep.subr.bf16.mxu0 0
  %590 = vmatpush1.bf16.msra.mxu0 %v484
  %591 = vmatprep.subr.bf16.mxu0 0
  %592 = vmatpush1.bf16.msra.mxu0 %v483
  %593 = vmatprep.subr.bf16.mxu0 0
  %594 = vmatpush1.bf16.msra.mxu0 %v482
  %595 = vmatprep.subr.bf16.mxu0 0
  %596 = vmatpush2.bf16.msra.mxu0 %v497
  %597 = vmatprep.subr.bf16.mxu0 0
  %598 = vmatpush2.bf16.msra.mxu0 %v496
  %599 = vmatprep.subr.bf16.mxu0 0
  %600 = vmatpush2.bf16.msra.mxu0 %v495
  %601 = vmatprep.subr.bf16.mxu0 0
  %602 = vmatpush2.bf16.msra.mxu0 %v494
  %603 = vmatprep.subr.bf16.mxu0 0
  %604 = vmatpush2.bf16.msra.mxu0 %v493
  %605 = vmatprep.subr.bf16.mxu0 0
  %606 = vmatpush2.bf16.msra.mxu0 %v492
  %607 = vmatprep.subr.bf16.mxu0 0
  %608 = vmatpush2.bf16.msra.mxu0 %v491
  %609 = vmatprep.subr.bf16.mxu0 0
  %610 = vmatpush2.bf16.msra.mxu0 %v490
  %611 = vmatprep.mubr.bf16.mxu0 %v267
  %612 = vmatmul.mubr.bf16.gmra.mxu0 %v266
  %v613 = vpop.f32.mrf.mxu0
  %v614 = vadd.f32 0.0, %v613
  %v615 = vpop.f32.mrf.mxu0
  %v616 = vpop.f32.mrf.mxu0
  %v617 = vadd.f32 0.0, %v616
  %v618 = vpop.f32.mrf.mxu0
  %619 = vmatprep.mubr.bf16.mxu0 %v272
  %620 = vmatmul.mubr.bf16.gmra.mxu0 %v271
  %v621 = vpop.f32.mrf.mxu0
  %v622 = vadd.f32 0.0, %v621
  %v623 = vpop.f32.mrf.mxu0
  %v624 = vpop.f32.mrf.mxu0
  %v625 = vadd.f32 0.0, %v624
  %v626 = vpop.f32.mrf.mxu0
  %627 = vmatprep.mubr.bf16.mxu0 %v277
  %628 = vmatmul.mubr.bf16.gmra.mxu0 %v276
  %v629 = vpop.f32.mrf.mxu0
  %v630 = vadd.f32 0.0, %v629
  %v631 = vpop.f32.mrf.mxu0
  %v632 = vpop.f32.mrf.mxu0
  %v633 = vadd.f32 0.0, %v632
  %v634 = vpop.f32.mrf.mxu0
  %635 = vmatprep.mubr.bf16.mxu0 %v282
  %636 = vmatmul.mubr.bf16.gmra.mxu0 %v281
  %v637 = vpop.f32.mrf.mxu0
  %v638 = vadd.f32 0.0, %v637
  %v639 = vpop.f32.mrf.mxu0
  %v640 = vpop.f32.mrf.mxu0
  %v641 = vadd.f32 0.0, %v640
  %v642 = vpop.f32.mrf.mxu0
  %643 = vmatprep.mubr.bf16.mxu0 %v287
  %644 = vmatmul.mubr.bf16.gmra.mxu0 %v286
  %v645 = vpop.f32.mrf.mxu0
  %v646 = vadd.f32 0.0, %v645
  %v647 = vpop.f32.mrf.mxu0
  %v648 = vpop.f32.mrf.mxu0
  %v649 = vadd.f32 0.0, %v648
  %v650 = vpop.f32.mrf.mxu0
  %651 = vmatprep.mubr.bf16.mxu0 %v292
  %652 = vmatmul.mubr.bf16.gmra.mxu0 %v291
  %v653 = vpop.f32.mrf.mxu0
  %v654 = vadd.f32 0.0, %v653
  %v655 = vpop.f32.mrf.mxu0
  %v656 = vpop.f32.mrf.mxu0
  %v657 = vadd.f32 0.0, %v656
  %v658 = vpop.f32.mrf.mxu0
  %659 = vmatprep.mubr.bf16.mxu0 %v297
  %660 = vmatmul.mubr.bf16.gmra.mxu0 %v296
  %v661 = vpop.f32.mrf.mxu0
  %v662 = vadd.f32 0.0, %v661
  %v663 = vpop.f32.mrf.mxu0
  %v664 = vpop.f32.mrf.mxu0
  %v665 = vadd.f32 0.0, %v664
  %v666 = vpop.f32.mrf.mxu0
  %667 = vmatprep.mubr.bf16.mxu0 %v302
  %668 = vmatmul.mubr.bf16.gmra.mxu0 %v301
  %v669 = vpop.f32.mrf.mxu0
  %v670 = vadd.f32 0.0, %v669
  %v671 = vpop.f32.mrf.mxu0
  %v672 = vpop.f32.mrf.mxu0
  %v673 = vadd.f32 0.0, %v672
  %v674 = vpop.f32.mrf.mxu0
  %675 = vdwg.mxu0
  %676 = vmatprep.subr.bf16.mxu0 0
  %677 = vmatpush1.bf16.msra.mxu0 %v505
  %678 = vmatprep.subr.bf16.mxu0 0
  %679 = vmatpush1.bf16.msra.mxu0 %v504
  %680 = vmatprep.subr.bf16.mxu0 0
  %681 = vmatpush1.bf16.msra.mxu0 %v503
  %682 = vmatprep.subr.bf16.mxu0 0
  %683 = vmatpush1.bf16.msra.mxu0 %v502
  %684 = vmatprep.subr.bf16.mxu0 0
  %685 = vmatpush1.bf16.msra.mxu0 %v501
  %686 = vmatprep.subr.bf16.mxu0 0
  %687 = vmatpush1.bf16.msra.mxu0 %v500
  %688 = vmatprep.subr.bf16.mxu0 0
  %689 = vmatpush1.bf16.msra.mxu0 %v499
  %690 = vmatprep.subr.bf16.mxu0 0
  %691 = vmatpush1.bf16.msra.mxu0 %v498
  %692 = vmatprep.subr.bf16.mxu0 0
  %693 = vmatpush2.bf16.msra.mxu0 %v513
  %694 = vmatprep.subr.bf16.mxu0 0
  %695 = vmatpush2.bf16.msra.mxu0 %v512
  %696 = vmatprep.subr.bf16.mxu0 0
  %697 = vmatpush2.bf16.msra.mxu0 %v511
  %698 = vmatprep.subr.bf16.mxu0 0
  %699 = vmatpush2.bf16.msra.mxu0 %v510
  %700 = vmatprep.subr.bf16.mxu0 0
  %701 = vmatpush2.bf16.msra.mxu0 %v509
  %702 = vmatprep.subr.bf16.mxu0 0
  %703 = vmatpush2.bf16.msra.mxu0 %v508
  %704 = vmatprep.subr.bf16.mxu0 0
  %705 = vmatpush2.bf16.msra.mxu0 %v507
  %706 = vmatprep.subr.bf16.mxu0 0
  %707 = vmatpush2.bf16.msra.mxu0 %v506
  %708 = vmatprep.mubr.bf16.mxu0 %v269
  %709 = vmatmul.mubr.bf16.gmra.mxu0 %v268
  %v710 = vpop.f32.mrf.mxu0
  %v711 = vadd.f32 %v614, %v710
  %v712 = vpop.f32.mrf.mxu0
  %v713 = vpop.f32.mrf.mxu0
  %v714 = vadd.f32 %v617, %v713
  %v715 = vpop.f32.mrf.mxu0
  %716 = vmatprep.mubr.bf16.mxu0 %v274
  %717 = vmatmul.mubr.bf16.gmra.mxu0 %v273
  %v718 = vpop.f32.mrf.mxu0
  %v719 = vadd.f32 %v622, %v718
  %v720 = vpop.f32.mrf.mxu0
  %v721 = vpop.f32.mrf.mxu0
  %v722 = vadd.f32 %v625, %v721
  %v723 = vpop.f32.mrf.mxu0
  %724 = vmatprep.mubr.bf16.mxu0 %v279
  %725 = vmatmul.mubr.bf16.gmra.mxu0 %v278
  %v726 = vpop.f32.mrf.mxu0
  %v727 = vadd.f32 %v630, %v726
  %v728 = vpop.f32.mrf.mxu0
  %v729 = vpop.f32.mrf.mxu0
  %v730 = vadd.f32 %v633, %v729
  %v731 = vpop.f32.mrf.mxu0
  %732 = vmatprep.mubr.bf16.mxu0 %v284
  %733 = vmatmul.mubr.bf16.gmra.mxu0 %v283
  %v734 = vpop.f32.mrf.mxu0
  %v735 = vadd.f32 %v638, %v734
  %v736 = vpop.f32.mrf.mxu0
  %v737 = vpop.f32.mrf.mxu0
  %v738 = vadd.f32 %v641, %v737
  %v739 = vpop.f32.mrf.mxu0
  %740 = vmatprep.mubr.bf16.mxu0 %v289
  %741 = vmatmul.mubr.bf16.gmra.mxu0 %v288
  %v742 = vpop.f32.mrf.mxu0
  %v743 = vadd.f32 %v646, %v742
  %v744 = vpop.f32.mrf.mxu0
  %v745 = vpop.f32.mrf.mxu0
  %v746 = vadd.f32 %v649, %v745
  %v747 = vpop.f32.mrf.mxu0
  %748 = vmatprep.mubr.bf16.mxu0 %v294
  %749 = vmatmul.mubr.bf16.gmra.mxu0 %v293
  %v750 = vpop.f32.mrf.mxu0
  %v751 = vadd.f32 %v654, %v750
  %v752 = vpop.f32.mrf.mxu0
  %v753 = vpop.f32.mrf.mxu0
  %v754 = vadd.f32 %v657, %v753
  %v755 = vpop.f32.mrf.mxu0
  %756 = vmatprep.mubr.bf16.mxu0 %v299
  %757 = vmatmul.mubr.bf16.gmra.mxu0 %v298
  %v758 = vpop.f32.mrf.mxu0
  %v759 = vadd.f32 %v662, %v758
  %v760 = vpop.f32.mrf.mxu0
  %v761 = vpop.f32.mrf.mxu0
  %v762 = vadd.f32 %v665, %v761
  %v763 = vpop.f32.mrf.mxu0
  %764 = vmatprep.mubr.bf16.mxu0 %v304
  %765 = vmatmul.mubr.bf16.gmra.mxu0 %v303
  %v766 = vpop.f32.mrf.mxu0
  %v767 = vadd.f32 %v670, %v766
  %v768 = vpop.f32.mrf.mxu0
  %v769 = vpop.f32.mrf.mxu0
  %v770 = vadd.f32 %v673, %v769
  %v771 = vpop.f32.mrf.mxu0
  %772 = vdwg.mxu0
  %773 = vmatprep.subr.bf16.mxu0 0
  %774 = vmatpush1.bf16.msra.mxu0 0
  %775 = vmatprep.subr.bf16.mxu0 0
  %776 = vmatpush1.bf16.msra.mxu0 0
  %777 = vmatprep.subr.bf16.mxu0 0
  %778 = vmatpush1.bf16.msra.mxu0 0
  %779 = vmatprep.subr.bf16.mxu0 0
  %780 = vmatpush1.bf16.msra.mxu0 0
  %781 = vmatprep.subr.bf16.mxu0 0
  %782 = vmatpush1.bf16.msra.mxu0 %v517
  %783 = vmatprep.subr.bf16.mxu0 0
  %784 = vmatpush1.bf16.msra.mxu0 %v516
  %785 = vmatprep.subr.bf16.mxu0 0
  %786 = vmatpush1.bf16.msra.mxu0 %v515
  %787 = vmatprep.subr.bf16.mxu0 0
  %788 = vmatpush1.bf16.msra.mxu0 %v514
  %789 = vmatprep.subr.bf16.mxu0 0
  %790 = vmatpush2.bf16.msra.mxu0 0
  %791 = vmatprep.subr.bf16.mxu0 0
  %792 = vmatpush2.bf16.msra.mxu0 0
  %793 = vmatprep.subr.bf16.mxu0 0
  %794 = vmatpush2.bf16.msra.mxu0 0
  %795 = vmatprep.subr.bf16.mxu0 0
  %796 = vmatpush2.bf16.msra.mxu0 0
  %797 = vmatprep.subr.bf16.mxu0 0
  %798 = vmatpush2.bf16.msra.mxu0 0
  %799 = vmatprep.subr.bf16.mxu0 0
  %800 = vmatpush2.bf16.msra.mxu0 0
  %801 = vmatprep.subr.bf16.mxu0 0
  %802 = vmatpush2.bf16.msra.mxu0 0
  %803 = vmatprep.subr.bf16.mxu0 0
  %804 = vmatpush2.bf16.msra.mxu0 0
  %805 = vmatprep.mubr.bf16.mxu0 0
  %806 = vmatmul.mubr.bf16.gmra.mxu0 %v556
  %v807 = vpop.f32.mrf.mxu0
  %v808 = vadd.f32 %v711, %v807
  %v809 = vpop.f32.mrf.mxu0
  %v810 = vpop.f32.mrf.mxu0
  %v811 = vadd.f32 %v714, %v810
  %v812 = vpop.f32.mrf.mxu0
  %813 = vmatprep.mubr.bf16.mxu0 0
  %814 = vmatmul.mubr.bf16.gmra.mxu0 %v559
  %v815 = vpop.f32.mrf.mxu0
  %v816 = vadd.f32 %v719, %v815
  %v817 = vpop.f32.mrf.mxu0
  %v818 = vpop.f32.mrf.mxu0
  %v819 = vadd.f32 %v722, %v818
  %v820 = vpop.f32.mrf.mxu0
  %821 = vmatprep.mubr.bf16.mxu0 0
  %822 = vmatmul.mubr.bf16.gmra.mxu0 %v562
  %v823 = vpop.f32.mrf.mxu0
  %v824 = vadd.f32 %v727, %v823
  %v825 = vpop.f32.mrf.mxu0
  %v826 = vpop.f32.mrf.mxu0
  %v827 = vadd.f32 %v730, %v826
  %v828 = vpop.f32.mrf.mxu0
  %829 = vmatprep.mubr.bf16.mxu0 0
  %830 = vmatmul.mubr.bf16.gmra.mxu0 %v565
  %v831 = vpop.f32.mrf.mxu0
  %v832 = vadd.f32 %v735, %v831
  %v833 = vpop.f32.mrf.mxu0
  %v834 = vpop.f32.mrf.mxu0
  %v835 = vadd.f32 %v738, %v834
  %v836 = vpop.f32.mrf.mxu0
  %837 = vmatprep.mubr.bf16.mxu0 0
  %838 = vmatmul.mubr.bf16.gmra.mxu0 %v568
  %v839 = vpop.f32.mrf.mxu0
  %v840 = vadd.f32 %v743, %v839
  %v841 = vpop.f32.mrf.mxu0
  %v842 = vpop.f32.mrf.mxu0
  %v843 = vadd.f32 %v746, %v842
  %v844 = vpop.f32.mrf.mxu0
  %845 = vmatprep.mubr.bf16.mxu0 0
  %846 = vmatmul.mubr.bf16.gmra.mxu0 %v571
  %v847 = vpop.f32.mrf.mxu0
  %v848 = vadd.f32 %v751, %v847
  %v849 = vpop.f32.mrf.mxu0
  %v850 = vpop.f32.mrf.mxu0
  %v851 = vadd.f32 %v754, %v850
  %v852 = vpop.f32.mrf.mxu0
  %853 = vmatprep.mubr.bf16.mxu0 0
  %854 = vmatmul.mubr.bf16.gmra.mxu0 %v574
  %v855 = vpop.f32.mrf.mxu0
  %v856 = vadd.f32 %v759, %v855
  %v857 = vpop.f32.mrf.mxu0
  %v858 = vpop.f32.mrf.mxu0
  %v859 = vadd.f32 %v762, %v858
  %v860 = vpop.f32.mrf.mxu0
  %861 = vmatprep.mubr.bf16.mxu0 0
  %862 = vmatmul.mubr.bf16.gmra.mxu0 %v577
  %v863 = vpop.f32.mrf.mxu0
  %v864 = vadd.f32 %v767, %v863
  %v865 = vpop.f32.mrf.mxu0
  %v866 = vpop.f32.mrf.mxu0
  %v867 = vadd.f32 %v770, %v866
  %v868 = vpop.f32.mrf.mxu0
  %869 = vdwg.mxu0
  %v870 = vld [vmem:[%s2] sm:$0x1]
  %v872 = vlaneseq
  %v873 = vshrl.u32 %v872, 7
  %v874 = vsub.s32 0, %v873
  %v875 = vrot.slane %v870, %v874
  %v877 = vmul.f32 %v808, %v875
  %v878 = vmul.f32 %v811, %v875
  %v879 = vmul.f32 %v816, %v875
  %v880 = vmul.f32 %v819, %v875
  %v881 = vmul.f32 %v824, %v875
  %v882 = vmul.f32 %v827, %v875
  %v883 = vmul.f32 %v832, %v875
  %v884 = vmul.f32 %v835, %v875
  %v885 = vmul.f32 %v840, %v875
  %v886 = vmul.f32 %v843, %v875
  %v887 = vmul.f32 %v848, %v875
  %v888 = vmul.f32 %v851, %v875
  %v889 = vmul.f32 %v856, %v875
  %v890 = vmul.f32 %v859, %v875
  %v891 = vmul.f32 %v864, %v875
  %v892 = vmul.f32 %v867, %v875
  %v893 = vld [vmem:[%s3] sm:$0x1]
  %v895 = vlaneseq
  %v896 = vshrl.u32 %v895, 7
  %v897 = vsub.s32 0, %v896
  %v898 = vrot.slane %v893, %v897
  %v900 = vadd.f32 %v877, %v898
  %v901 = vadd.f32 %v878, %v898
  %v902 = vadd.f32 %v879, %v898
  %v903 = vadd.f32 %v880, %v898
  %v904 = vadd.f32 %v881, %v898
  %v905 = vadd.f32 %v882, %v898
  %v906 = vadd.f32 %v883, %v898
  %v907 = vadd.f32 %v884, %v898
  %v908 = vadd.f32 %v885, %v898
  %v909 = vadd.f32 %v886, %v898
  %v910 = vadd.f32 %v887, %v898
  %v911 = vadd.f32 %v888, %v898
  %v912 = vadd.f32 %v889, %v898
  %v913 = vadd.f32 %v890, %v898
  %v914 = vadd.f32 %v891, %v898
  %v915 = vadd.f32 %v892, %v898
  %v916 = vmax.f32 %v900, 0.0
  %v917 = vmax.f32 %v901, 0.0
  %v918 = vmax.f32 %v902, 0.0
  %v919 = vmax.f32 %v903, 0.0
  %v920 = vmax.f32 %v904, 0.0
  %v921 = vmax.f32 %v905, 0.0
  %v922 = vmax.f32 %v906, 0.0
  %v923 = vmax.f32 %v907, 0.0
  %v924 = vmax.f32 %v908, 0.0
  %v925 = vmax.f32 %v909, 0.0
  %v926 = vmax.f32 %v910, 0.0
  %v927 = vmax.f32 %v911, 0.0
  %v928 = vmax.f32 %v912, 0.0
  %v929 = vmax.f32 %v913, 0.0
  %v930 = vmax.f32 %v914, 0.0
  %v931 = vmax.f32 %v915, 0.0
  %v932 = vmax.f32 %v916, %v918
  %v933 = vmax.f32 %v932, %v920
  %v934 = vmax.f32 %v933, %v922
  %v935 = vmax.f32 %v917, %v919
  %v936 = vmax.f32 %v935, %v921
  %v937 = vmax.f32 %v936, %v923
  %v938 = vmax.f32 %v924, %v926
  %v939 = vmax.f32 %v938, %v928
  %v940 = vmax.f32 %v939, %v930
  %v941 = vmax.f32 %v925, %v927
  %v942 = vmax.f32 %v941, %v929
  %v943 = vmax.f32 %v942, %v931
  %944 = vst [vmem:[%s4] sm:$0xff] %v934
  %945 = vst [vmem:[%s4 + $0x8] sm:$0xff] %v937
  %946 = vst [vmem:[%s4 + $0x10] sm:$0xff] %v940
  %947 = vst [vmem:[%s4 + $0x18] sm:$0xff] %v943
  // Predicated region
  $region18: #{mnist_cnn_forward.6} parent=0 // pred_check
    _
  $region19: #{mnist_cnn_forward.6} parent=0 // pred_check_branch
    %949 = sbr.rel (0) target = $region21
  $region20: #{mnist_cnn_forward.6} parent=0 // pred_region
    _
  $region21: #{mnist_cnn_forward.6} parent=0 // pred_fallthru
    _
  // Predicated region
  $region22: #{mnist_cnn_forward.6} parent=0 // pred_check
    _
  $region23: #{mnist_cnn_forward.6} parent=0 // pred_check_branch
    %951 = sbr.rel (0) target = $region25
  $region24: #{mnist_cnn_forward.6} parent=0 // pred_region
    _
  $region25: #{mnist_cnn_forward.6} parent=0 // pred_fallthru
    _

// kernel: mnist_cnn_forward.7
$region0: #{mnist_cnn_forward.7}
  #allocation0 [shape = 'u32[]', space=smem, size = 0x4, offset = 0x4, fixed_abs, tag = 'smem constant byte address 0x4 - core index']
  #allocation1 [shape = 'u32[144,128]{1,0:T(1,128)}', space=vmem, size = 0x12000, scoped, tag = 'internal scratch']
  %s0 = inlined_call_operand.vmem [shape: f32[2,1152], index: 0, kind: input, shape index: {}]
  %s1 = inlined_call_operand.vmem [shape: f32[1152,256], index: 1, kind: input, shape index: {}]
  %s2 = inlined_call_operand.vmem [shape: f32[1,256], index: 2, kind: input, shape index: {}]
  %s3 = inlined_call_operand.vmem [shape: f32[256,128], index: 3, kind: input, shape index: {}]
  %s4 = inlined_call_operand.vmem [shape: f32[1,128], index: 4, kind: input, shape index: {}]
  %s5 = inlined_call_operand.vmem [shape: f32[128,10], index: 5, kind: input, shape index: {}]
  %s6 = inlined_call_operand.vmem [shape: f32[1,10], index: 6, kind: input, shape index: {}]
  %s7 = inlined_call_operand.hbm [shape: f32[2,10], index: 7, kind: output, shape index: {}]
  %s8 = sld [smem:[#allocation0]]
  $region38: #{mnist_cnn_forward.7} parent=0
    _
  %s10 = ssub.s32 1, %s8
  %s11 = scalar_select 0, %s10, %s8
  $region1: #{mnist_cnn_forward.7} parent=0
    #allocation2 [shape = 'u8[1024]{0}', space=vmem, size = 0x400, scoped, tag = 'output window, operand 0, single buffered']
    #allocation3 [shape = 's32[1]{0}', space=sflag, size = 0x4, scoped, tag = 'scoped memory for mnist_cnn_forward.7']
    %12 = vsyncpa [#allocation3], 0
    // Predicated region
    $region2: #{mnist_cnn_forward.7} parent=1 // pred_check
      _
    $region3: #{mnist_cnn_forward.7} parent=1 // pred_check_branch
      %14 = sbr.rel (0) target = $region5
    $region4: #{mnist_cnn_forward.7} parent=1 // pred_region
      _
    $region5: #{mnist_cnn_forward.7} parent=1 // pred_fallthru
      _
    // Predicated region
    $region6: #{mnist_cnn_forward.7} parent=1 // pred_check
      _
    $region7: #{mnist_cnn_forward.7} parent=1 // pred_check_branch
      %16 = sbr.rel (0) target = $region9
    $region8: #{mnist_cnn_forward.7} parent=1 // pred_region
      _
    $region9: #{mnist_cnn_forward.7} parent=1 // pred_fallthru
      _
    // Predicated region
    $region10: #{mnist_cnn_forward.7} parent=1 // pred_check
      _
    $region11: #{mnist_cnn_forward.7} parent=1 // pred_check_branch
      %18 = sbr.rel (0) target = $region13
    $region12: #{mnist_cnn_forward.7} parent=1 // pred_region
      _
    $region13: #{mnist_cnn_forward.7} parent=1 // pred_fallthru
      _
    // Predicated region
    $region14: #{mnist_cnn_forward.7} parent=1 // pred_check
      _
    $region15: #{mnist_cnn_forward.7} parent=1 // pred_check_branch
      %20 = sbr.rel (0) target = $region17
    $region16: #{mnist_cnn_forward.7} parent=1 // pred_region
      _
    $region17: #{mnist_cnn_forward.7} parent=1 // pred_fallthru
      _
    // Predicated region
    $region18: #{mnist_cnn_forward.7} parent=1 // pred_check
      _
    $region19: #{mnist_cnn_forward.7} parent=1 // pred_check_branch
      %22 = sbr.rel (0) target = $region21
    $region20: #{mnist_cnn_forward.7} parent=1 // pred_region
      _
    $region21: #{mnist_cnn_forward.7} parent=1 // pred_fallthru
      _
    // Predicated region
    $region22: #{mnist_cnn_forward.7} parent=1 // pred_check
      _
    $region23: #{mnist_cnn_forward.7} parent=1 // pred_check_branch
      %24 = sbr.rel (0) target = $region25
    $region24: #{mnist_cnn_forward.7} parent=1 // pred_region
      _
    $region25: #{mnist_cnn_forward.7} parent=1 // pred_fallthru
      _
    // Predicated region
    $region26: #{mnist_cnn_forward.7} parent=1 // pred_check
      _
    $region27: #{mnist_cnn_forward.7} parent=1 // pred_check_branch
      %26 = sbr.rel (0) target = $region29
    $region28: #{mnist_cnn_forward.7} parent=1 // pred_region
      _
    $region29: #{mnist_cnn_forward.7} parent=1 // pred_fallthru
      _
    %v27 = vld [vmem:[%s0] sm:$0xff]
    %v28 = vld [vmem:[%s0 + $0x8] sm:$0xff]
    %v29 = vld [vmem:[%s0 + $0x10] sm:$0x3]
    %v30 = vld [vmem:[%s1] sm:$0xff]
    %v31 = vld [vmem:[%s1 + $0x8] sm:$0xff]
    %v32 = vld [vmem:[%s1 + $0x10] sm:$0xff]
    %v33 = vld [vmem:[%s1 + $0x18] sm:$0xff]
    %v34 = vld [vmem:[%s1 + $0x20] sm:$0xff]
    %v35 = vld [vmem:[%s1 + $0x28] sm:$0xff]
    %v36 = vld [vmem:[%s1 + $0x30] sm:$0xff]
    %v37 = vld [vmem:[%s1 + $0x38] sm:$0xff]
    %v38 = vld [vmem:[%s1 + $0x40] sm:$0xff]
    %v39 = vld [vmem:[%s1 + $0x48] sm:$0xff]
    %v40 = vld [vmem:[%s1 + $0x50] sm:$0xff]
    %v41 = vld [vmem:[%s1 + $0x58] sm:$0xff]
    %v42 = vld [vmem:[%s1 + $0x60] sm:$0xff]
    %v43 = vld [vmem:[%s1 + $0x68] sm:$0xff]
    %v44 = vld [vmem:[%s1 + $0x70] sm:$0xff]
    %v45 = vld [vmem:[%s1 + $0x78] sm:$0xff]
    %v46 = vld [vmem:[%s1 + $0x80] sm:$0xff]
    %v47 = vld [vmem:[%s1 + $0x88] sm:$0xff]
    %v48 = vld [vmem:[%s1 + $0x90] sm:$0xff]
    %v49 = vld [vmem:[%s1 + $0x98] sm:$0xff]
    %v50 = vld [vmem:[%s1 + $0xa0] sm:$0xff]
    %v51 = vld [vmem:[%s1 + $0xa8] sm:$0xff]
    %v52 = vld [vmem:[%s1 + $0xb0] sm:$0xff]
    %v53 = vld [vmem:[%s1 + $0xb8] sm:$0xff]
    %v54 = vld [vmem:[%s1 + $0xc0] sm:$0xff]
    %v55 = vld [vmem:[%s1 + $0xc8] sm:$0xff]
    %v56 = vld [vmem:[%s1 + $0xd0] sm:$0xff]
    %v57 = vld [vmem:[%s1 + $0xd8] sm:$0xff]
    %v58 = vld [vmem:[%s1 + $0xe0] sm:$0xff]
    %v59 = vld [vmem:[%s1 + $0xe8] sm:$0xff]
    %v60 = vld [vmem:[%s1 + $0xf0] sm:$0xff]
    %v61 = vld [vmem:[%s1 + $0xf8] sm:$0xff]
    %v62 = vld [vmem:[%s1 + $0x100] sm:$0xff]
    %v63 = vld [vmem:[%s1 + $0x108] sm:$0xff]
    %v64 = vld [vmem:[%s1 + $0x110] sm:$0xff]
    %v65 = vld [vmem:[%s1 + $0x118] sm:$0xff]
    %v66 = vld [vmem:[%s1 + $0x120] sm:$0xff]
    %v67 = vld [vmem:[%s1 + $0x128] sm:$0xff]
    %v68 = vld [vmem:[%s1 + $0x130] sm:$0xff]
    %v69 = vld [vmem:[%s1 + $0x138] sm:$0xff]
    %v70 = vld [vmem:[%s1 + $0x140] sm:$0xff]
    %v71 = vld [vmem:[%s1 + $0x148] sm:$0xff]
    %v72 = vld [vmem:[%s1 + $0x150] sm:$0xff]
    %v73 = vld [vmem:[%s1 + $0x158] sm:$0xff]
    %v74 = vld [vmem:[%s1 + $0x160] sm:$0xff]
    %v75 = vld [vmem:[%s1 + $0x168] sm:$0xff]
    %v76 = vld [vmem:[%s1 + $0x170] sm:$0xff]
    %v77 = vld [vmem:[%s1 + $0x178] sm:$0xff]
    %v78 = vld [vmem:[%s1 + $0x180] sm:$0xff]
    %v79 = vld [vmem:[%s1 + $0x188] sm:$0xff]
    %v80 = vld [vmem:[%s1 + $0x190] sm:$0xff]
    %v81 = vld [vmem:[%s1 + $0x198] sm:$0xff]
    %v82 = vld [vmem:[%s1 + $0x1a0] sm:$0xff]
    %v83 = vld [vmem:[%s1 + $0x1a8] sm:$0xff]
    %v84 = vld [vmem:[%s1 + $0x1b0] sm:$0xff]
    %v85 = vld [vmem:[%s1 + $0x1b8] sm:$0xff]
    %v86 = vld [vmem:[%s1 + $0x1c0] sm:$0xff]
    %v87 = vld [vmem:[%s1 + $0x1c8] sm:$0xff]
    %v88 = vld [vmem:[%s1 + $0x1d0] sm:$0xff]
    %v89 = vld [vmem:[%s1 + $0x1d8] sm:$0xff]
    %v90 = vld [vmem:[%s1 + $0x1e0] sm:$0xff]
    %v91 = vld [vmem:[%s1 + $0x1e8] sm:$0xff]
    %v92 = vld [vmem:[%s1 + $0x1f0] sm:$0xff]
    %v93 = vld [vmem:[%s1 + $0x1f8] sm:$0xff]
    %v94 = vld [vmem:[%s1 + $0x200] sm:$0xff]
    %v95 = vld [vmem:[%s1 + $0x208] sm:$0xff]
    %v96 = vld [vmem:[%s1 + $0x210] sm:$0xff]
    %v97 = vld [vmem:[%s1 + $0x218] sm:$0xff]
    %v98 = vld [vmem:[%s1 + $0x220] sm:$0xff]
    %v99 = vld [vmem:[%s1 + $0x228] sm:$0xff]
    %v100 = vld [vmem:[%s1 + $0x230] sm:$0xff]
    %v101 = vld [vmem:[%s1 + $0x238] sm:$0xff]
    %v102 = vld [vmem:[%s1 + $0x240] sm:$0xff]
    %v103 = vld [vmem:[%s1 + $0x248] sm:$0xff]
    %v104 = vld [vmem:[%s1 + $0x250] sm:$0xff]
    %v105 = vld [vmem:[%s1 + $0x258] sm:$0xff]
    %v106 = vld [vmem:[%s1 + $0x260] sm:$0xff]
    %v107 = vld [vmem:[%s1 + $0x268] sm:$0xff]
    %v108 = vld [vmem:[%s1 + $0x270] sm:$0xff]
    %v109 = vld [vmem:[%s1 + $0x278] sm:$0xff]
    %v110 = vld [vmem:[%s1 + $0x280] sm:$0xff]
    %v111 = vld [vmem:[%s1 + $0x288] sm:$0xff]
    %v112 = vld [vmem:[%s1 + $0x290] sm:$0xff]
    %v113 = vld [vmem:[%s1 + $0x298] sm:$0xff]
    %v114 = vld [vmem:[%s1 + $0x2a0] sm:$0xff]
    %v115 = vld [vmem:[%s1 + $0x2a8] sm:$0xff]
    %v116 = vld [vmem:[%s1 + $0x2b0] sm:$0xff]
    %v117 = vld [vmem:[%s1 + $0x2b8] sm:$0xff]
    %v118 = vld [vmem:[%s1 + $0x2c0] sm:$0xff]
    %v119 = vld [vmem:[%s1 + $0x2c8] sm:$0xff]
    %v120 = vld [vmem:[%s1 + $0x2d0] sm:$0xff]
    %v121 = vld [vmem:[%s1 + $0x2d8] sm:$0xff]
    %v122 = vld [vmem:[%s1 + $0x2e0] sm:$0xff]
    %v123 = vld [vmem:[%s1 + $0x2e8] sm:$0xff]
    %v124 = vld [vmem:[%s1 + $0x2f0] sm:$0xff]
    %v125 = vld [vmem:[%s1 + $0x2f8] sm:$0xff]
    %v126 = vld [vmem:[%s1 + $0x300] sm:$0xff]
    %v127 = vld [vmem:[%s1 + $0x308] sm:$0xff]
    %v128 = vld [vmem:[%s1 + $0x310] sm:$0xff]
    %v129 = vld [vmem:[%s1 + $0x318] sm:$0xff]
    %v130 = vld [vmem:[%s1 + $0x320] sm:$0xff]
    %v131 = vld [vmem:[%s1 + $0x328] sm:$0xff]
    %v132 = vld [vmem:[%s1 + $0x330] sm:$0xff]
    %v133 = vld [vmem:[%s1 + $0x338] sm:$0xff]
    %v134 = vld [vmem:[%s1 + $0x340] sm:$0xff]
    %v135 = vld [vmem:[%s1 + $0x348] sm:$0xff]
    %v136 = vld [vmem:[%s1 + $0x350] sm:$0xff]
    %v137 = vld [vmem:[%s1 + $0x358] sm:$0xff]
    %v138 = vld [vmem:[%s1 + $0x360] sm:$0xff]
    %v139 = vld [vmem:[%s1 + $0x368] sm:$0xff]
    %v140 = vld [vmem:[%s1 + $0x370] sm:$0xff]
    %v141 = vld [vmem:[%s1 + $0x378] sm:$0xff]
    %v142 = vld [vmem:[%s1 + $0x380] sm:$0xff]
    %v143 = vld [vmem:[%s1 + $0x388] sm:$0xff]
    %v144 = vld [vmem:[%s1 + $0x390] sm:$0xff]
    %v145 = vld [vmem:[%s1 + $0x398] sm:$0xff]
    %v146 = vld [vmem:[%s1 + $0x3a0] sm:$0xff]
    %v147 = vld [vmem:[%s1 + $0x3a8] sm:$0xff]
    %v148 = vld [vmem:[%s1 + $0x3b0] sm:$0xff]
    %v149 = vld [vmem:[%s1 + $0x3b8] sm:$0xff]
    %v150 = vld [vmem:[%s1 + $0x3c0] sm:$0xff]
    %v151 = vld [vmem:[%s1 + $0x3c8] sm:$0xff]
    %v152 = vld [vmem:[%s1 + $0x3d0] sm:$0xff]
    %v153 = vld [vmem:[%s1 + $0x3d8] sm:$0xff]
    %v154 = vld [vmem:[%s1 + $0x3e0] sm:$0xff]
    %v155 = vld [vmem:[%s1 + $0x3e8] sm:$0xff]
    %v156 = vld [vmem:[%s1 + $0x3f0] sm:$0xff]
    %v157 = vld [vmem:[%s1 + $0x3f8] sm:$0xff]
    %v158 = vld [vmem:[%s1 + $0x400] sm:$0xff]
    %v159 = vld [vmem:[%s1 + $0x408] sm:$0xff]
    %v160 = vld [vmem:[%s1 + $0x410] sm:$0xff]
    %v161 = vld [vmem:[%s1 + $0x418] sm:$0xff]
    %v162 = vld [vmem:[%s1 + $0x420] sm:$0xff]
    %v163 = vld [vmem:[%s1 + $0x428] sm:$0xff]
    %v164 = vld [vmem:[%s1 + $0x430] sm:$0xff]
    %v165 = vld [vmem:[%s1 + $0x438] sm:$0xff]
    %v166 = vld [vmem:[%s1 + $0x440] sm:$0xff]
    %v167 = vld [vmem:[%s1 + $0x448] sm:$0xff]
    %v168 = vld [vmem:[%s1 + $0x450] sm:$0xff]
    %v169 = vld [vmem:[%s1 + $0x458] sm:$0xff]
    %v170 = vld [vmem:[%s1 + $0x460] sm:$0xff]
    %v171 = vld [vmem:[%s1 + $0x468] sm:$0xff]
    %v172 = vld [vmem:[%s1 + $0x470] sm:$0xff]
    %v173 = vld [vmem:[%s1 + $0x478] sm:$0xff]
    %v174 = vld [vmem:[%s1 + $0x480] sm:$0xff]
    %v175 = vld [vmem:[%s1 + $0x488] sm:$0xff]
    %v176 = vld [vmem:[%s1 + $0x490] sm:$0xff]
    %v177 = vld [vmem:[%s1 + $0x498] sm:$0xff]
    %v178 = vld [vmem:[%s1 + $0x4a0] sm:$0xff]
    %v179 = vld [vmem:[%s1 + $0x4a8] sm:$0xff]
    %v180 = vld [vmem:[%s1 + $0x4b0] sm:$0xff]
    %v181 = vld [vmem:[%s1 + $0x4b8] sm:$0xff]
    %v182 = vld [vmem:[%s1 + $0x4c0] sm:$0xff]
    %v183 = vld [vmem:[%s1 + $0x4c8] sm:$0xff]
    %v184 = vld [vmem:[%s1 + $0x4d0] sm:$0xff]
    %v185 = vld [vmem:[%s1 + $0x4d8] sm:$0xff]
    %v186 = vld [vmem:[%s1 + $0x4e0] sm:$0xff]
    %v187 = vld [vmem:[%s1 + $0x4e8] sm:$0xff]
    %v188 = vld [vmem:[%s1 + $0x4f0] sm:$0xff]
    %v189 = vld [vmem:[%s1 + $0x4f8] sm:$0xff]
    %v190 = vld [vmem:[%s1 + $0x500] sm:$0xff]
    %v191 = vld [vmem:[%s1 + $0x508] sm:$0xff]
    %v192 = vld [vmem:[%s1 + $0x510] sm:$0xff]
    %v193 = vld [vmem:[%s1 + $0x518] sm:$0xff]
    %v194 = vld [vmem:[%s1 + $0x520] sm:$0xff]
    %v195 = vld [vmem:[%s1 + $0x528] sm:$0xff]
    %v196 = vld [vmem:[%s1 + $0x530] sm:$0xff]
    %v197 = vld [vmem:[%s1 + $0x538] sm:$0xff]
    %v198 = vld [vmem:[%s1 + $0x540] sm:$0xff]
    %v199 = vld [vmem:[%s1 + $0x548] sm:$0xff]
    %v200 = vld [vmem:[%s1 + $0x550] sm:$0xff]
    %v201 = vld [vmem:[%s1 + $0x558] sm:$0xff]
    %v202 = vld [vmem:[%s1 + $0x560] sm:$0xff]
    %v203 = vld [vmem:[%s1 + $0x568] sm:$0xff]
    %v204 = vld [vmem:[%s1 + $0x570] sm:$0xff]
    %v205 = vld [vmem:[%s1 + $0x578] sm:$0xff]
    %v206 = vld [vmem:[%s1 + $0x580] sm:$0xff]
    %v207 = vld [vmem:[%s1 + $0x588] sm:$0xff]
    %v208 = vld [vmem:[%s1 + $0x590] sm:$0xff]
    %v209 = vld [vmem:[%s1 + $0x598] sm:$0xff]
    %v210 = vld [vmem:[%s1 + $0x5a0] sm:$0xff]
    %v211 = vld [vmem:[%s1 + $0x5a8] sm:$0xff]
    %v212 = vld [vmem:[%s1 + $0x5b0] sm:$0xff]
    %v213 = vld [vmem:[%s1 + $0x5b8] sm:$0xff]
    %v214 = vld [vmem:[%s1 + $0x5c0] sm:$0xff]
    %v215 = vld [vmem:[%s1 + $0x5c8] sm:$0xff]
    %v216 = vld [vmem:[%s1 + $0x5d0] sm:$0xff]
    %v217 = vld [vmem:[%s1 + $0x5d8] sm:$0xff]
    %v218 = vld [vmem:[%s1 + $0x5e0] sm:$0xff]
    %v219 = vld [vmem:[%s1 + $0x5e8] sm:$0xff]
    %v220 = vld [vmem:[%s1 + $0x5f0] sm:$0xff]
    %v221 = vld [vmem:[%s1 + $0x5f8] sm:$0xff]
    %v222 = vld [vmem:[%s1 + $0x600] sm:$0xff]
    %v223 = vld [vmem:[%s1 + $0x608] sm:$0xff]
    %v224 = vld [vmem:[%s1 + $0x610] sm:$0xff]
    %v225 = vld [vmem:[%s1 + $0x618] sm:$0xff]
    %v226 = vld [vmem:[%s1 + $0x620] sm:$0xff]
    %v227 = vld [vmem:[%s1 + $0x628] sm:$0xff]
    %v228 = vld [vmem:[%s1 + $0x630] sm:$0xff]
    %v229 = vld [vmem:[%s1 + $0x638] sm:$0xff]
    %v230 = vld [vmem:[%s1 + $0x640] sm:$0xff]
    %v231 = vld [vmem:[%s1 + $0x648] sm:$0xff]
    %v232 = vld [vmem:[%s1 + $0x650] sm:$0xff]
    %v233 = vld [vmem:[%s1 + $0x658] sm:$0xff]
    %v234 = vld [vmem:[%s1 + $0x660] sm:$0xff]
    %v235 = vld [vmem:[%s1 + $0x668] sm:$0xff]
    %v236 = vld [vmem:[%s1 + $0x670] sm:$0xff]
    %v237 = vld [vmem:[%s1 + $0x678] sm:$0xff]
    %v238 = vld [vmem:[%s1 + $0x680] sm:$0xff]
    %v239 = vld [vmem:[%s1 + $0x688] sm:$0xff]
    %v240 = vld [vmem:[%s1 + $0x690] sm:$0xff]
    %v241 = vld [vmem:[%s1 + $0x698] sm:$0xff]
    %v242 = vld [vmem:[%s1 + $0x6a0] sm:$0xff]
    %v243 = vld [vmem:[%s1 + $0x6a8] sm:$0xff]
    %v244 = vld [vmem:[%s1 + $0x6b0] sm:$0xff]
    %v245 = vld [vmem:[%s1 + $0x6b8] sm:$0xff]
    %v246 = vld [vmem:[%s1 + $0x6c0] sm:$0xff]
    %v247 = vld [vmem:[%s1 + $0x6c8] sm:$0xff]
    %v248 = vld [vmem:[%s1 + $0x6d0] sm:$0xff]
    %v249 = vld [vmem:[%s1 + $0x6d8] sm:$0xff]
    %v250 = vld [vmem:[%s1 + $0x6e0] sm:$0xff]
    %v251 = vld [vmem:[%s1 + $0x6e8] sm:$0xff]
    %v252 = vld [vmem:[%s1 + $0x6f0] sm:$0xff]
    %v253 = vld [vmem:[%s1 + $0x6f8] sm:$0xff]
    %v254 = vld [vmem:[%s1 + $0x700] sm:$0xff]
    %v255 = vld [vmem:[%s1 + $0x708] sm:$0xff]
    %v256 = vld [vmem:[%s1 + $0x710] sm:$0xff]
    %v257 = vld [vmem:[%s1 + $0x718] sm:$0xff]
    %v258 = vld [vmem:[%s1 + $0x720] sm:$0xff]
    %v259 = vld [vmem:[%s1 + $0x728] sm:$0xff]
    %v260 = vld [vmem:[%s1 + $0x730] sm:$0xff]
    %v261 = vld [vmem:[%s1 + $0x738] sm:$0xff]
    %v262 = vld [vmem:[%s1 + $0x740] sm:$0xff]
    %v263 = vld [vmem:[%s1 + $0x748] sm:$0xff]
    %v264 = vld [vmem:[%s1 + $0x750] sm:$0xff]
    %v265 = vld [vmem:[%s1 + $0x758] sm:$0xff]
    %v266 = vld [vmem:[%s1 + $0x760] sm:$0xff]
    %v267 = vld [vmem:[%s1 + $0x768] sm:$0xff]
    %v268 = vld [vmem:[%s1 + $0x770] sm:$0xff]
    %v269 = vld [vmem:[%s1 + $0x778] sm:$0xff]
    %v270 = vld [vmem:[%s1 + $0x780] sm:$0xff]
    %v271 = vld [vmem:[%s1 + $0x788] sm:$0xff]
    %v272 = vld [vmem:[%s1 + $0x790] sm:$0xff]
    %v273 = vld [vmem:[%s1 + $0x798] sm:$0xff]
    %v274 = vld [vmem:[%s1 + $0x7a0] sm:$0xff]
    %v275 = vld [vmem:[%s1 + $0x7a8] sm:$0xff]
    %v276 = vld [vmem:[%s1 + $0x7b0] sm:$0xff]
    %v277 = vld [vmem:[%s1 + $0x7b8] sm:$0xff]
    %v278 = vld [vmem:[%s1 + $0x7c0] sm:$0xff]
    %v279 = vld [vmem:[%s1 + $0x7c8] sm:$0xff]
    %v280 = vld [vmem:[%s1 + $0x7d0] sm:$0xff]
    %v281 = vld [vmem:[%s1 + $0x7d8] sm:$0xff]
    %v282 = vld [vmem:[%s1 + $0x7e0] sm:$0xff]
    %v283 = vld [vmem:[%s1 + $0x7e8] sm:$0xff]
    %v284 = vld [vmem:[%s1 + $0x7f0] sm:$0xff]
    %v285 = vld [vmem:[%s1 + $0x7f8] sm:$0xff]
    %v286 = vld [vmem:[%s1 + $0x800] sm:$0xff]
    %v287 = vld [vmem:[%s1 + $0x808] sm:$0xff]
    %v288 = vld [vmem:[%s1 + $0x810] sm:$0xff]
    %v289 = vld [vmem:[%s1 + $0x818] sm:$0xff]
    %v290 = vld [vmem:[%s1 + $0x820] sm:$0xff]
    %v291 = vld [vmem:[%s1 + $0x828] sm:$0xff]
    %v292 = vld [vmem:[%s1 + $0x830] sm:$0xff]
    %v293 = vld [vmem:[%s1 + $0x838] sm:$0xff]
    %v294 = vld [vmem:[%s1 + $0x840] sm:$0xff]
    %v295 = vld [vmem:[%s1 + $0x848] sm:$0xff]
    %v296 = vld [vmem:[%s1 + $0x850] sm:$0xff]
    %v297 = vld [vmem:[%s1 + $0x858] sm:$0xff]
    %v298 = vld [vmem:[%s1 + $0x860] sm:$0xff]
    %v299 = vld [vmem:[%s1 + $0x868] sm:$0xff]
    %v300 = vld [vmem:[%s1 + $0x870] sm:$0xff]
    %v301 = vld [vmem:[%s1 + $0x878] sm:$0xff]
    %v302 = vld [vmem:[%s1 + $0x880] sm:$0xff]
    %v303 = vld [vmem:[%s1 + $0x888] sm:$0xff]
    %v304 = vld [vmem:[%s1 + $0x890] sm:$0xff]
    %v305 = vld [vmem:[%s1 + $0x898] sm:$0xff]
    %v306 = vld [vmem:[%s1 + $0x8a0] sm:$0xff]
    %v307 = vld [vmem:[%s1 + $0x8a8] sm:$0xff]
    %v308 = vld [vmem:[%s1 + $0x8b0] sm:$0xff]
    %v309 = vld [vmem:[%s1 + $0x8b8] sm:$0xff]
    %v310 = vld [vmem:[%s1 + $0x8c0] sm:$0xff]
    %v311 = vld [vmem:[%s1 + $0x8c8] sm:$0xff]
    %v312 = vld [vmem:[%s1 + $0x8d0] sm:$0xff]
    %v313 = vld [vmem:[%s1 + $0x8d8] sm:$0xff]
    %v314 = vld [vmem:[%s1 + $0x8e0] sm:$0xff]
    %v315 = vld [vmem:[%s1 + $0x8e8] sm:$0xff]
    %v316 = vld [vmem:[%s1 + $0x8f0] sm:$0xff]
    %v317 = vld [vmem:[%s1 + $0x8f8] sm:$0xff]
    %v318 = vld [vmem:[%s2] sm:$0x3]
    %v320 = vlaneseq
    %v321 = vshrl.u32 %v320, 7
    %v322 = vsub.s32 0, %v321
    %v323 = vrot.slane %v318, %v322
    %v324 = vlaneseq
    %v325 = vshrl.u32 %v324, 7
    %v326 = vsub.s32 1, %v325
    %v327 = vrot.slane %v318, %v326
    %v333 = vcombine.high %v27, %v27
    %v335 = vunpack.c.l.s4 1983009808
    %v336 = vunpack.c.0.s8 %v335
    %v337 = vlaneseq
    %v338 = vshrl.u32 %v337, 7
    %v339 = vsub.s32 %v336, %v338
    %v340 = vrot.slane %v27, %v339
    %v342 = vunpack.c.l.s4 1983009808
    %v343 = vunpack.c.0.s8 %v342
    %v344 = vlaneseq
    %v345 = vshrl.u32 %v344, 7
    %v346 = vsub.s32 %v343, %v345
    %v347 = vrot.slane %v333, %v346
    %v348 = vcombine.high %v340, %v340
    %v349 = vcombine.high %v347, %v347
    %v350 = vcombine.high %v28, %v28
    %v352 = vunpack.c.l.s4 1983009808
    %v353 = vunpack.c.0.s8 %v352
    %v354 = vlaneseq
    %v355 = vshrl.u32 %v354, 7
    %v356 = vsub.s32 %v353, %v355
    %v357 = vrot.slane %v28, %v356
    %v359 = vunpack.c.l.s4 1983009808
    %v360 = vunpack.c.0.s8 %v359
    %v361 = vlaneseq
    %v362 = vshrl.u32 %v361, 7
    %v363 = vsub.s32 %v360, %v362
    %v364 = vrot.slane %v350, %v363
    %v365 = vcombine.high %v357, %v357
    %v366 = vcombine.high %v364, %v364
    %v368 = vunpack.c.l.s4 1983009808
    %v369 = vunpack.c.0.s8 %v368
    %v370 = vlaneseq
    %v371 = vshrl.u32 %v370, 7
    %v372 = vsub.s32 %v369, %v371
    %v373 = vrot.slane %v29, %v372
    %383 = vmatprep.subr.mxu0 %v61
    %384 = vmatpush1.msra.mxu0 %v60
    %385 = vmatprep.subr.mxu0 %v59
    %386 = vmatpush1.msra.mxu0 %v58
    %387 = vmatprep.subr.mxu0 %v57
    %388 = vmatpush1.msra.mxu0 %v56
    %389 = vmatprep.subr.mxu0 %v55
    %390 = vmatpush1.msra.mxu0 %v54
    %391 = vmatprep.subr.mxu0 %v53
    %392 = vmatpush1.msra.mxu0 %v52
    %393 = vmatprep.subr.mxu0 %v51
    %394 = vmatpush1.msra.mxu0 %v50
    %395 = vmatprep.subr.mxu0 %v49
    %396 = vmatpush1.msra.mxu0 %v48
    %397 = vmatprep.subr.mxu0 %v47
    %398 = vmatpush1.msra.mxu0 %v46
    %399 = vmatprep.subr.mxu0 %v45
    %400 = vmatpush1.msra.mxu0 %v44
    %401 = vmatprep.subr.mxu0 %v43
    %402 = vmatpush1.msra.mxu0 %v42
    %403 = vmatprep.subr.mxu0 %v41
    %404 = vmatpush1.msra.mxu0 %v40
    %405 = vmatprep.subr.mxu0 %v39
    %406 = vmatpush1.msra.mxu0 %v38
    %407 = vmatprep.subr.mxu0 %v37
    %408 = vmatpush1.msra.mxu0 %v36
    %409 = vmatprep.subr.mxu0 %v35
    %410 = vmatpush1.msra.mxu0 %v34
    %411 = vmatprep.subr.mxu0 %v33
    %412 = vmatpush1.msra.mxu0 %v32
    %413 = vmatprep.subr.mxu0 %v31
    %414 = vmatpush1.msra.mxu0 %v30
    %415 = vmatprep.subr.mxu0 %v93
    %416 = vmatpush2.msra.mxu0 %v92
    %417 = vmatprep.subr.mxu0 %v91
    %418 = vmatpush2.msra.mxu0 %v90
    %419 = vmatprep.subr.mxu0 %v89
    %420 = vmatpush2.msra.mxu0 %v88
    %421 = vmatprep.subr.mxu0 %v87
    %422 = vmatpush2.msra.mxu0 %v86
    %423 = vmatprep.subr.mxu0 %v85
    %424 = vmatpush2.msra.mxu0 %v84
    %425 = vmatprep.subr.mxu0 %v83
    %426 = vmatpush2.msra.mxu0 %v82
    %427 = vmatprep.subr.mxu0 %v81
    %428 = vmatpush2.msra.mxu0 %v80
    %429 = vmatprep.subr.mxu0 %v79
    %430 = vmatpush2.msra.mxu0 %v78
    %431 = vmatprep.subr.mxu0 %v77
    %432 = vmatpush2.msra.mxu0 %v76
    %433 = vmatprep.subr.mxu0 %v75
    %434 = vmatpush2.msra.mxu0 %v74
    %435 = vmatprep.subr.mxu0 %v73
    %436 = vmatpush2.msra.mxu0 %v72
    %437 = vmatprep.subr.mxu0 %v71
    %438 = vmatpush2.msra.mxu0 %v70
    %439 = vmatprep.subr.mxu0 %v69
    %440 = vmatpush2.msra.mxu0 %v68
    %441 = vmatprep.subr.mxu0 %v67
    %442 = vmatpush2.msra.mxu0 %v66
    %443 = vmatprep.subr.mxu0 %v65
    %444 = vmatpush2.msra.mxu0 %v64
    %445 = vmatprep.subr.mxu0 %v63
    %446 = vmatpush2.msra.mxu0 %v62
    %447 = vmatprep.mubr.f32.mxu0 %v348
    %448 = vmatmul.mubr.f32.gmra.mxu0 %v340
    %v449 = vpop.f32.mrf.mxu0
    %v450 = vadd.f32 %v323, %v449
    %v451 = vpop.f32.mrf.mxu0
    %v452 = vadd.f32 %v327, %v451
    %453 = vdwg.mxu0
    %454 = vmatprep.subr.mxu0 %v125
    %455 = vmatpush1.msra.mxu0 %v124
    %456 = vmatprep.subr.mxu0 %v123
    %457 = vmatpush1.msra.mxu0 %v122
    %458 = vmatprep.subr.mxu0 %v121
    %459 = vmatpush1.msra.mxu0 %v120
    %460 = vmatprep.subr.mxu0 %v119
    %461 = vmatpush1.msra.mxu0 %v118
    %462 = vmatprep.subr.mxu0 %v117
    %463 = vmatpush1.msra.mxu0 %v116
    %464 = vmatprep.subr.mxu0 %v115
    %465 = vmatpush1.msra.mxu0 %v114
    %466 = vmatprep.subr.mxu0 %v113
    %467 = vmatpush1.msra.mxu0 %v112
    %468 = vmatprep.subr.mxu0 %v111
    %469 = vmatpush1.msra.mxu0 %v110
    %470 = vmatprep.subr.mxu0 %v109
    %471 = vmatpush1.msra.mxu0 %v108
    %472 = vmatprep.subr.mxu0 %v107
    %473 = vmatpush1.msra.mxu0 %v106
    %474 = vmatprep.subr.mxu0 %v105
    %475 = vmatpush1.msra.mxu0 %v104
    %476 = vmatprep.subr.mxu0 %v103
    %477 = vmatpush1.msra.mxu0 %v102
    %478 = vmatprep.subr.mxu0 %v101
    %479 = vmatpush1.msra.mxu0 %v100
    %480 = vmatprep.subr.mxu0 %v99
    %481 = vmatpush1.msra.mxu0 %v98
    %482 = vmatprep.subr.mxu0 %v97
    %483 = vmatpush1.msra.mxu0 %v96
    %484 = vmatprep.subr.mxu0 %v95
    %485 = vmatpush1.msra.mxu0 %v94
    %486 = vmatprep.subr.mxu0 %v157
    %487 = vmatpush2.msra.mxu0 %v156
    %488 = vmatprep.subr.mxu0 %v155
    %489 = vmatpush2.msra.mxu0 %v154
    %490 = vmatprep.subr.mxu0 %v153
    %491 = vmatpush2.msra.mxu0 %v152
    %492 = vmatprep.subr.mxu0 %v151
    %493 = vmatpush2.msra.mxu0 %v150
    %494 = vmatprep.subr.mxu0 %v149
    %495 = vmatpush2.msra.mxu0 %v148
    %496 = vmatprep.subr.mxu0 %v147
    %497 = vmatpush2.msra.mxu0 %v146
    %498 = vmatprep.subr.mxu0 %v145
    %499 = vmatpush2.msra.mxu0 %v144
    %500 = vmatprep.subr.mxu0 %v143
    %501 = vmatpush2.msra.mxu0 %v142
    %502 = vmatprep.subr.mxu0 %v141
    %503 = vmatpush2.msra.mxu0 %v140
    %504 = vmatprep.subr.mxu0 %v139
    %505 = vmatpush2.msra.mxu0 %v138
    %506 = vmatprep.subr.mxu0 %v137
    %507 = vmatpush2.msra.mxu0 %v136
    %508 = vmatprep.subr.mxu0 %v135
    %509 = vmatpush2.msra.mxu0 %v134
    %510 = vmatprep.subr.mxu0 %v133
    %511 = vmatpush2.msra.mxu0 %v132
    %512 = vmatprep.subr.mxu0 %v131
    %513 = vmatpush2.msra.mxu0 %v130
    %514 = vmatprep.subr.mxu0 %v129
    %515 = vmatpush2.msra.mxu0 %v128
    %516 = vmatprep.subr.mxu0 %v127
    %517 = vmatpush2.msra.mxu0 %v126
    %518 = vmatprep.mubr.f32.mxu0 %v349
    %519 = vmatmul.mubr.f32.gmra.mxu0 %v347
    %v520 = vpop.f32.mrf.mxu0
    %v521 = vadd.f32 %v450, %v520
    %v522 = vpop.f32.mrf.mxu0
    %v523 = vadd.f32 %v452, %v522
    %524 = vdwg.mxu0
    %525 = vmatprep.subr.mxu0 %v189
    %526 = vmatpush1.msra.mxu0 %v188
    %527 = vmatprep.subr.mxu0 %v187
    %528 = vmatpush1.msra.mxu0 %v186
    %529 = vmatprep.subr.mxu0 %v185
    %530 = vmatpush1.msra.mxu0 %v184
    %531 = vmatprep.subr.mxu0 %v183
    %532 = vmatpush1.msra.mxu0 %v182
    %533 = vmatprep.subr.mxu0 %v181
    %534 = vmatpush1.msra.mxu0 %v180
    %535 = vmatprep.subr.mxu0 %v179
    %536 = vmatpush1.msra.mxu0 %v178
    %537 = vmatprep.subr.mxu0 %v177
    %538 = vmatpush1.msra.mxu0 %v176
    %539 = vmatprep.subr.mxu0 %v175
    %540 = vmatpush1.msra.mxu0 %v174
    %541 = vmatprep.subr.mxu0 %v173
    %542 = vmatpush1.msra.mxu0 %v172
    %543 = vmatprep.subr.mxu0 %v171
    %544 = vmatpush1.msra.mxu0 %v170
    %545 = vmatprep.subr.mxu0 %v169
    %546 = vmatpush1.msra.mxu0 %v168
    %547 = vmatprep.subr.mxu0 %v167
    %548 = vmatpush1.msra.mxu0 %v166
    %549 = vmatprep.subr.mxu0 %v165
    %550 = vmatpush1.msra.mxu0 %v164
    %551 = vmatprep.subr.mxu0 %v163
    %552 = vmatpush1.msra.mxu0 %v162
    %553 = vmatprep.subr.mxu0 %v161
    %554 = vmatpush1.msra.mxu0 %v160
    %555 = vmatprep.subr.mxu0 %v159
    %556 = vmatpush1.msra.mxu0 %v158
    %557 = vmatprep.subr.mxu0 %v221
    %558 = vmatpush2.msra.mxu0 %v220
    %559 = vmatprep.subr.mxu0 %v219
    %560 = vmatpush2.msra.mxu0 %v218
    %561 = vmatprep.subr.mxu0 %v217
    %562 = vmatpush2.msra.mxu0 %v216
    %563 = vmatprep.subr.mxu0 %v215
    %564 = vmatpush2.msra.mxu0 %v214
    %565 = vmatprep.subr.mxu0 %v213
    %566 = vmatpush2.msra.mxu0 %v212
    %567 = vmatprep.subr.mxu0 %v211
    %568 = vmatpush2.msra.mxu0 %v210
    %569 = vmatprep.subr.mxu0 %v209
    %570 = vmatpush2.msra.mxu0 %v208
    %571 = vmatprep.subr.mxu0 %v207
    %572 = vmatpush2.msra.mxu0 %v206
    %573 = vmatprep.subr.mxu0 %v205
    %574 = vmatpush2.msra.mxu0 %v204
    %575 = vmatprep.subr.mxu0 %v203
    %576 = vmatpush2.msra.mxu0 %v202
    %577 = vmatprep.subr.mxu0 %v201
    %578 = vmatpush2.msra.mxu0 %v200
    %579 = vmatprep.subr.mxu0 %v199
    %580 = vmatpush2.msra.mxu0 %v198
    %581 = vmatprep.subr.mxu0 %v197
    %582 = vmatpush2.msra.mxu0 %v196
    %583 = vmatprep.subr.mxu0 %v195
    %584 = vmatpush2.msra.mxu0 %v194
    %585 = vmatprep.subr.mxu0 %v193
    %586 = vmatpush2.msra.mxu0 %v192
    %587 = vmatprep.subr.mxu0 %v191
    %588 = vmatpush2.msra.mxu0 %v190
    %589 = vmatprep.mubr.f32.mxu0 %v365
    %590 = vmatmul.mubr.f32.gmra.mxu0 %v357
    %v591 = vpop.f32.mrf.mxu0
    %v592 = vadd.f32 %v521, %v591
    %v593 = vpop.f32.mrf.mxu0
    %v594 = vadd.f32 %v523, %v593
    %595 = vdwg.mxu0
    %596 = vmatprep.subr.mxu0 %v253
    %597 = vmatpush1.msra.mxu0 %v252
    %598 = vmatprep.subr.mxu0 %v251
    %599 = vmatpush1.msra.mxu0 %v250
    %600 = vmatprep.subr.mxu0 %v249
    %601 = vmatpush1.msra.mxu0 %v248
    %602 = vmatprep.subr.mxu0 %v247
    %603 = vmatpush1.msra.mxu0 %v246
    %604 = vmatprep.subr.mxu0 %v245
    %605 = vmatpush1.msra.mxu0 %v244
    %606 = vmatprep.subr.mxu0 %v243
    %607 = vmatpush1.msra.mxu0 %v242
    %608 = vmatprep.subr.mxu0 %v241
    %609 = vmatpush1.msra.mxu0 %v240
    %610 = vmatprep.subr.mxu0 %v239
    %611 = vmatpush1.msra.mxu0 %v238
    %612 = vmatprep.subr.mxu0 %v237
    %613 = vmatpush1.msra.mxu0 %v236
    %614 = vmatprep.subr.mxu0 %v235
    %615 = vmatpush1.msra.mxu0 %v234
    %616 = vmatprep.subr.mxu0 %v233
    %617 = vmatpush1.msra.mxu0 %v232
    %618 = vmatprep.subr.mxu0 %v231
    %619 = vmatpush1.msra.mxu0 %v230
    %620 = vmatprep.subr.mxu0 %v229
    %621 = vmatpush1.msra.mxu0 %v228
    %622 = vmatprep.subr.mxu0 %v227
    %623 = vmatpush1.msra.mxu0 %v226
    %624 = vmatprep.subr.mxu0 %v225
    %625 = vmatpush1.msra.mxu0 %v224
    %626 = vmatprep.subr.mxu0 %v223
    %627 = vmatpush1.msra.mxu0 %v222
    %628 = vmatprep.subr.mxu0 %v285
    %629 = vmatpush2.msra.mxu0 %v284
    %630 = vmatprep.subr.mxu0 %v283
    %631 = vmatpush2.msra.mxu0 %v282
    %632 = vmatprep.subr.mxu0 %v281
    %633 = vmatpush2.msra.mxu0 %v280
    %634 = vmatprep.subr.mxu0 %v279
    %635 = vmatpush2.msra.mxu0 %v278
    %636 = vmatprep.subr.mxu0 %v277
    %637 = vmatpush2.msra.mxu0 %v276
    %638 = vmatprep.subr.mxu0 %v275
    %639 = vmatpush2.msra.mxu0 %v274
    %640 = vmatprep.subr.mxu0 %v273
    %641 = vmatpush2.msra.mxu0 %v272
    %642 = vmatprep.subr.mxu0 %v271
    %643 = vmatpush2.msra.mxu0 %v270
    %644 = vmatprep.subr.mxu0 %v269
    %645 = vmatpush2.msra.mxu0 %v268
    %646 = vmatprep.subr.mxu0 %v267
    %647 = vmatpush2.msra.mxu0 %v266
    %648 = vmatprep.subr.mxu0 %v265
    %649 = vmatpush2.msra.mxu0 %v264
    %650 = vmatprep.subr.mxu0 %v263
    %651 = vmatpush2.msra.mxu0 %v262
    %652 = vmatprep.subr.mxu0 %v261
    %653 = vmatpush2.msra.mxu0 %v260
    %654 = vmatprep.subr.mxu0 %v259
    %655 = vmatpush2.msra.mxu0 %v258
    %656 = vmatprep.subr.mxu0 %v257
    %657 = vmatpush2.msra.mxu0 %v256
    %658 = vmatprep.subr.mxu0 %v255
    %659 = vmatpush2.msra.mxu0 %v254
    %660 = vmatprep.mubr.f32.mxu0 %v366
    %661 = vmatmul.mubr.f32.gmra.mxu0 %v364
    %v662 = vpop.f32.mrf.mxu0
    %v663 = vadd.f32 %v592, %v662
    %v664 = vpop.f32.mrf.mxu0
    %v665 = vadd.f32 %v594, %v664
    %666 = vdwg.mxu0
    %667 = vmatprep.subr.mxu0 %v317
    %668 = vmatpush1.msra.mxu0 %v316
    %669 = vmatprep.subr.mxu0 %v315
    %670 = vmatpush1.msra.mxu0 %v314
    %671 = vmatprep.subr.mxu0 %v313
    %672 = vmatpush1.msra.mxu0 %v312
    %673 = vmatprep.subr.mxu0 %v311
    %674 = vmatpush1.msra.mxu0 %v310
    %675 = vmatprep.subr.mxu0 %v309
    %676 = vmatpush1.msra.mxu0 %v308
    %677 = vmatprep.subr.mxu0 %v307
    %678 = vmatpush1.msra.mxu0 %v306
    %679 = vmatprep.subr.mxu0 %v305
    %680 = vmatpush1.msra.mxu0 %v304
    %681 = vmatprep.subr.mxu0 %v303
    %682 = vmatpush1.msra.mxu0 %v302
    %683 = vmatprep.subr.mxu0 %v301
    %684 = vmatpush1.msra.mxu0 %v300
    %685 = vmatprep.subr.mxu0 %v299
    %686 = vmatpush1.msra.mxu0 %v298
    %687 = vmatprep.subr.mxu0 %v297
    %688 = vmatpush1.msra.mxu0 %v296
    %689 = vmatprep.subr.mxu0 %v295
    %690 = vmatpush1.msra.mxu0 %v294
    %691 = vmatprep.subr.mxu0 %v293
    %692 = vmatpush1.msra.mxu0 %v292
    %693 = vmatprep.subr.mxu0 %v291
    %694 = vmatpush1.msra.mxu0 %v290
    %695 = vmatprep.subr.mxu0 %v289
    %696 = vmatpush1.msra.mxu0 %v288
    %697 = vmatprep.subr.mxu0 %v287
    %698 = vmatpush1.msra.mxu0 %v286
    %699 = vmatprep.subr.mxu0 0.0
    %700 = vmatpush2.msra.mxu0 0.0
    %701 = vmatprep.subr.mxu0 0.0
    %702 = vmatpush2.msra.mxu0 0.0
    %703 = vmatprep.subr.mxu0 0.0
    %704 = vmatpush2.msra.mxu0 0.0
    %705 = vmatprep.subr.mxu0 0.0
    %706 = vmatpush2.msra.mxu0 0.0
    %707 = vmatprep.subr.mxu0 0.0
    %708 = vmatpush2.msra.mxu0 0.0
    %709 = vmatprep.subr.mxu0 0.0
    %710 = vmatpush2.msra.mxu0 0.0
    %711 = vmatprep.subr.mxu0 0.0
    %712 = vmatpush2.msra.mxu0 0.0
    %713 = vmatprep.subr.mxu0 0.0
    %714 = vmatpush2.msra.mxu0 0.0
    %715 = vmatprep.subr.mxu0 0.0
    %716 = vmatpush2.msra.mxu0 0.0
    %717 = vmatprep.subr.mxu0 0.0
    %718 = vmatpush2.msra.mxu0 0.0
    %719 = vmatprep.subr.mxu0 0.0
    %720 = vmatpush2.msra.mxu0 0.0
    %721 = vmatprep.subr.mxu0 0.0
    %722 = vmatpush2.msra.mxu0 0.0
    %723 = vmatprep.subr.mxu0 0.0
    %724 = vmatpush2.msra.mxu0 0.0
    %725 = vmatprep.subr.mxu0 0.0
    %726 = vmatpush2.msra.mxu0 0.0
    %727 = vmatprep.subr.mxu0 0.0
    %728 = vmatpush2.msra.mxu0 0.0
    %729 = vmatprep.subr.mxu0 0.0
    %730 = vmatpush2.msra.mxu0 0.0
    %731 = vmatprep.mubr.f32.mxu0 0.0
    %732 = vmatmul.mubr.f32.gmra.mxu0 %v373
    %v733 = vpop.f32.mrf.mxu0
    %v734 = vadd.f32 %v663, %v733
    %v735 = vpop.f32.mrf.mxu0
    %v736 = vadd.f32 %v665, %v735
    %737 = vdwg.mxu0
    %v738 = vld [vmem:[%s3] sm:$0xff]
    %v739 = vld [vmem:[%s3 + $0x8] sm:$0xff]
    %v740 = vld [vmem:[%s3 + $0x10] sm:$0xff]
    %v741 = vld [vmem:[%s3 + $0x18] sm:$0xff]
    %v742 = vld [vmem:[%s3 + $0x20] sm:$0xff]
    %v743 = vld [vmem:[%s3 + $0x28] sm:$0xff]
    %v744 = vld [vmem:[%s3 + $0x30] sm:$0xff]
    %v745 = vld [vmem:[%s3 + $0x38] sm:$0xff]
    %v746 = vld [vmem:[%s3 + $0x40] sm:$0xff]
    %v747 = vld [vmem:[%s3 + $0x48] sm:$0xff]
    %v748 = vld [vmem:[%s3 + $0x50] sm:$0xff]
    %v749 = vld [vmem:[%s3 + $0x58] sm:$0xff]
    %v750 = vld [vmem:[%s3 + $0x60] sm:$0xff]
    %v751 = vld [vmem:[%s3 + $0x68] sm:$0xff]
    %v752 = vld [vmem:[%s3 + $0x70] sm:$0xff]
    %v753 = vld [vmem:[%s3 + $0x78] sm:$0xff]
    %v754 = vld [vmem:[%s3 + $0x80] sm:$0xff]
    %v755 = vld [vmem:[%s3 + $0x88] sm:$0xff]
    %v756 = vld [vmem:[%s3 + $0x90] sm:$0xff]
    %v757 = vld [vmem:[%s3 + $0x98] sm:$0xff]
    %v758 = vld [vmem:[%s3 + $0xa0] sm:$0xff]
    %v759 = vld [vmem:[%s3 + $0xa8] sm:$0xff]
    %v760 = vld [vmem:[%s3 + $0xb0] sm:$0xff]
    %v761 = vld [vmem:[%s3 + $0xb8] sm:$0xff]
    %v762 = vld [vmem:[%s3 + $0xc0] sm:$0xff]
    %v763 = vld [vmem:[%s3 + $0xc8] sm:$0xff]
    %v764 = vld [vmem:[%s3 + $0xd0] sm:$0xff]
    %v765 = vld [vmem:[%s3 + $0xd8] sm:$0xff]
    %v766 = vld [vmem:[%s3 + $0xe0] sm:$0xff]
    %v767 = vld [vmem:[%s3 + $0xe8] sm:$0xff]
    %v768 = vld [vmem:[%s3 + $0xf0] sm:$0xff]
    %v769 = vld [vmem:[%s3 + $0xf8] sm:$0xff]
    %v770 = vld [vmem:[%s4] sm:$0x1]
    %v772 = vlaneseq
    %v773 = vshrl.u32 %v772, 7
    %v774 = vsub.s32 0, %v773
    %v775 = vrot.slane %v770, %v774
    %777 = vmatprep.subr.mxu0 0.0
    %778 = vmatpush1.msra.mxu0 %v753
    %779 = vmatprep.subr.mxu0 0.0
    %780 = vmatpush1.msra.mxu0 %v752
    %781 = vmatprep.subr.mxu0 0.0
    %782 = vmatpush1.msra.mxu0 %v751
    %783 = vmatprep.subr.mxu0 0.0
    %784 = vmatpush1.msra.mxu0 %v750
    %785 = vmatprep.subr.mxu0 0.0
    %786 = vmatpush1.msra.mxu0 %v749
    %787 = vmatprep.subr.mxu0 0.0
    %788 = vmatpush1.msra.mxu0 %v748
    %789 = vmatprep.subr.mxu0 0.0
    %790 = vmatpush1.msra.mxu0 %v747
    %791 = vmatprep.subr.mxu0 0.0
    %792 = vmatpush1.msra.mxu0 %v746
    %793 = vmatprep.subr.mxu0 0.0
    %794 = vmatpush1.msra.mxu0 %v745
    %795 = vmatprep.subr.mxu0 0.0
    %796 = vmatpush1.msra.mxu0 %v744
    %797 = vmatprep.subr.mxu0 0.0
    %798 = vmatpush1.msra.mxu0 %v743
    %799 = vmatprep.subr.mxu0 0.0
    %800 = vmatpush1.msra.mxu0 %v742
    %801 = vmatprep.subr.mxu0 0.0
    %802 = vmatpush1.msra.mxu0 %v741
    %803 = vmatprep.subr.mxu0 0.0
    %804 = vmatpush1.msra.mxu0 %v740
    %805 = vmatprep.subr.mxu0 0.0
    %806 = vmatpush1.msra.mxu0 %v739
    %807 = vmatprep.subr.mxu0 0.0
    %808 = vmatpush1.msra.mxu0 %v738
    %809 = vmatprep.subr.mxu0 0.0
    %810 = vmatpush2.msra.mxu0 %v769
    %811 = vmatprep.subr.mxu0 0.0
    %812 = vmatpush2.msra.mxu0 %v768
    %813 = vmatprep.subr.mxu0 0.0
    %814 = vmatpush2.msra.mxu0 %v767
    %815 = vmatprep.subr.mxu0 0.0
    %816 = vmatpush2.msra.mxu0 %v766
    %817 = vmatprep.subr.mxu0 0.0
    %818 = vmatpush2.msra.mxu0 %v765
    %819 = vmatprep.subr.mxu0 0.0
    %820 = vmatpush2.msra.mxu0 %v764
    %821 = vmatprep.subr.mxu0 0.0
    %822 = vmatpush2.msra.mxu0 %v763
    %823 = vmatprep.subr.mxu0 0.0
    %824 = vmatpush2.msra.mxu0 %v762
    %825 = vmatprep.subr.mxu0 0.0
    %826 = vmatpush2.msra.mxu0 %v761
    %827 = vmatprep.subr.mxu0 0.0
    %828 = vmatpush2.msra.mxu0 %v760
    %829 = vmatprep.subr.mxu0 0.0
    %830 = vmatpush2.msra.mxu0 %v759
    %831 = vmatprep.subr.mxu0 0.0
    %832 = vmatpush2.msra.mxu0 %v758
    %833 = vmatprep.subr.mxu0 0.0
    %834 = vmatpush2.msra.mxu0 %v757
    %835 = vmatprep.subr.mxu0 0.0
    %836 = vmatpush2.msra.mxu0 %v756
    %837 = vmatprep.subr.mxu0 0.0
    %838 = vmatpush2.msra.mxu0 %v755
    %839 = vmatprep.subr.mxu0 0.0
    %840 = vmatpush2.msra.mxu0 %v754
    %841 = vmatprep.mubr.f32.mxu0 %v736
    %842 = vmatmul.mubr.f32.gmra.mxu0 %v734
    %v843 = vpop.f32.mrf.mxu0
    %v844 = vadd.f32 %v775, %v843
    %v845 = vpop.f32.mrf.mxu0
    %846 = vdwg.mxu0
    %v847 = vld [vmem:[%s5] sm:$0xff]
    %v848 = vld [vmem:[%s5 + $0x8] sm:$0xff]
    %v849 = vld [vmem:[%s5 + $0x10] sm:$0xff]
    %v850 = vld [vmem:[%s5 + $0x18] sm:$0xff]
    %v851 = vld [vmem:[%s5 + $0x20] sm:$0xff]
    %v852 = vld [vmem:[%s5 + $0x28] sm:$0xff]
    %v853 = vld [vmem:[%s5 + $0x30] sm:$0xff]
    %v854 = vld [vmem:[%s5 + $0x38] sm:$0xff]
    %v855 = vld [vmem:[%s5 + $0x40] sm:$0xff]
    %v856 = vld [vmem:[%s5 + $0x48] sm:$0xff]
    %v857 = vld [vmem:[%s5 + $0x50] sm:$0xff]
    %v858 = vld [vmem:[%s5 + $0x58] sm:$0xff]
    %v859 = vld [vmem:[%s5 + $0x60] sm:$0xff]
    %v860 = vld [vmem:[%s5 + $0x68] sm:$0xff]
    %v861 = vld [vmem:[%s5 + $0x70] sm:$0xff]
    %v862 = vld [vmem:[%s5 + $0x78] sm:$0xff]
    %v863 = vld [vmem:[%s6] sm:$0x1]
    %v865 = vlaneseq
    %v866 = vshrl.u32 %v865, 7
    %v867 = vsub.s32 0, %v866
    %v868 = vrot.slane %v863, %v867
    %870 = vmatprep.subr.mxu0 0.0
    %871 = vmatpush1.msra.mxu0 %v862
    %872 = vmatprep.subr.mxu0 0.0
    %873 = vmatpush1.msra.mxu0 %v861
    %874 = vmatprep.subr.mxu0 0.0
    %875 = vmatpush1.msra.mxu0 %v860
    %876 = vmatprep.subr.mxu0 0.0
    %877 = vmatpush1.msra.mxu0 %v859
    %878 = vmatprep.subr.mxu0 0.0
    %879 = vmatpush1.msra.mxu0 %v858
    %880 = vmatprep.subr.mxu0 0.0
    %881 = vmatpush1.msra.mxu0 %v857
    %882 = vmatprep.subr.mxu0 0.0
    %883 = vmatpush1.msra.mxu0 %v856
    %884 = vmatprep.subr.mxu0 0.0
    %885 = vmatpush1.msra.mxu0 %v855
    %886 = vmatprep.subr.mxu0 0.0
    %887 = vmatpush1.msra.mxu0 %v854
    %888 = vmatprep.subr.mxu0 0.0
    %889 = vmatpush1.msra.mxu0 %v853
    %890 = vmatprep.subr.mxu0 0.0
    %891 = vmatpush1.msra.mxu0 %v852
    %892 = vmatprep.subr.mxu0 0.0
    %893 = vmatpush1.msra.mxu0 %v851
    %894 = vmatprep.subr.mxu0 0.0
    %895 = vmatpush1.msra.mxu0 %v850
    %896 = vmatprep.subr.mxu0 0.0
    %897 = vmatpush1.msra.mxu0 %v849
    %898 = vmatprep.subr.mxu0 0.0
    %899 = vmatpush1.msra.mxu0 %v848
    %900 = vmatprep.subr.mxu0 0.0
    %901 = vmatpush1.msra.mxu0 %v847
    %902 = vmatprep.subr.mxu0 0.0
    %903 = vmatpush2.msra.mxu0 0.0
    %904 = vmatprep.subr.mxu0 0.0
    %905 = vmatpush2.msra.mxu0 0.0
    %906 = vmatprep.subr.mxu0 0.0
    %907 = vmatpush2.msra.mxu0 0.0
    %908 = vmatprep.subr.mxu0 0.0
    %909 = vmatpush2.msra.mxu0 0.0
    %910 = vmatprep.subr.mxu0 0.0
    %911 = vmatpush2.msra.mxu0 0.0
    %912 = vmatprep.subr.mxu0 0.0
    %913 = vmatpush2.msra.mxu0 0.0
    %914 = vmatprep.subr.mxu0 0.0
    %915 = vmatpush2.msra.mxu0 0.0
    %916 = vmatprep.subr.mxu0 0.0
    %917 = vmatpush2.msra.mxu0 0.0
    %918 = vmatprep.subr.mxu0 0.0
    %919 = vmatpush2.msra.mxu0 0.0
    %920 = vmatprep.subr.mxu0 0.0
    %921 = vmatpush2.msra.mxu0 0.0
    %922 = vmatprep.subr.mxu0 0.0
    %923 = vmatpush2.msra.mxu0 0.0
    %924 = vmatprep.subr.mxu0 0.0
    %925 = vmatpush2.msra.mxu0 0.0
    %926 = vmatprep.subr.mxu0 0.0
    %927 = vmatpush2.msra.mxu0 0.0
    %928 = vmatprep.subr.mxu0 0.0
    %929 = vmatpush2.msra.mxu0 0.0
    %930 = vmatprep.subr.mxu0 0.0
    %931 = vmatpush2.msra.mxu0 0.0
    %932 = vmatprep.subr.mxu0 0.0
    %933 = vmatpush2.msra.mxu0 0.0
    %934 = vmatprep.mubr.f32.mxu0 0.0
    %935 = vmatmul.mubr.f32.gmra.mxu0 %v844
    %v936 = vpop.f32.mrf.mxu0
    %v937 = vadd.f32 %v868, %v936
    %v938 = vpop.f32.mrf.mxu0
    %939 = vdwg.mxu0
    %vm940 = vcmask 74752
    %941 = vst.msk [vmem:[#allocation2] sm:$0x3] %vm940, %v937
    // Predicated region
    $region30: #{mnist_cnn_forward.7} parent=1 // pred_check
      _
    $region31: #{mnist_cnn_forward.7} parent=1 // pred_check_branch
      %943 = sbr.rel (0) target = $region33
    $region32: #{mnist_cnn_forward.7} parent=1 // pred_region
      %s945 = ssub.s32 32, 32
      %946 = vsyncadd [#allocation3], %s945
      %s948 = sshll.u32 [#allocation2], 4
      %s949 = int_to_ptr.vmem [resolvable:$true] %s948
      %951 = dma.vmem_to_hbm [thread:$0]  %s949, 32, %s7, [#allocation3]
    $region33: #{mnist_cnn_forward.7} parent=1 // pred_fallthru
      _
    // Predicated region
    $region34: #{mnist_cnn_forward.7} parent=1 // pred_check
      _
    $region35: #{mnist_cnn_forward.7} parent=1 // pred_check_branch
      %953 = sbr.rel (0) target = $region37
    $region36: #{mnist_cnn_forward.7} parent=1 // pred_region
      %954 = dma.done [#allocation3], 32
    $region37: #{mnist_cnn_forward.7} parent=1 // pred_fallthru
      _
    %955 = vsyncpa [#allocation3], 1

</llo_original>
